<compile_context>
chip_gen: v7x
topology: tpu7x:2x2x1
jax: 0.10.0
libtpu: 0.0.40
codegen_flags: <defaults>
</compile_context>

<pallas_src>
import numpy as np

import jax
import jax.numpy as jnp
from jax import lax
from jax.experimental import pallas as pl
from jax.experimental.pallas import tpu as pltpu

LANES = 128  # internal channel padding; output store is lane-dense 128-wide


def _round_up(x, m):
    return (x + m - 1) // m * m


def _bottleneck_kernel(xcol_ref, xs_ref, w1_ref, w2_ref, t2_ref,
                       w3_ref, t3_ref, wsc_ref, tsc_ref, o_ref):
    # conv1 (1x1, BN scale folded into w1, BN bias carried by the im2col mask
    # channel) + ReLU, evaluated once per 3x3 tap on the pre-gathered input rows.
    taps = []
    for t in range(9):                                            # static unroll
        g = jnp.dot(xcol_ref[t], w1_ref[...],
                    preferred_element_type=jnp.float32)           # (TM, 128) f32
        taps.append(jnp.maximum(g, 0.0).astype(jnp.bfloat16))
    gcat = jnp.concatenate(taps, axis=-1)                         # (TM, 9*128) bf16

    # conv2 (3x3, stride baked into the im2col) as ONE K=9*128 matmul:
    # tap accumulation happens on the MXU, not the VPU.
    h2 = jnp.dot(gcat, w2_ref[...], preferred_element_type=jnp.float32)
    h2 = jnp.maximum(h2 + t2_ref[...], 0.0).astype(jnp.bfloat16)  # bn2 bias + relu

    # conv3 (1x1) + bn3 bias (no relu yet)
    h3 = jnp.dot(h2, w3_ref[...], preferred_element_type=jnp.float32) + t3_ref[...]

    # shortcut: (strided) 1x1 conv + bn bias (identity case folded into wsc/tsc)
    sc = jnp.dot(xs_ref[...], wsc_ref[...],
                 preferred_element_type=jnp.float32) + tsc_ref[...]

    o_ref[...] = jnp.maximum(h3 + sc, 0.0).astype(o_ref.dtype)


def _fold_bn(gamma, beta, mean, var, eps=1e-5):
    """Inference-mode BN -> per-channel (scale, bias)."""
    s = gamma / jnp.sqrt(var + eps)
    t = beta - mean * s
    return s, t


def _bias_row(v):
    return jnp.zeros((1, LANES), jnp.float32).at[0, : v.shape[0]].set(v)


def bottleneck_forward(x_nchw, params, *, stride, block_rows=256):
    """Fused Bottleneck forward.  x: (N, Cin, H, W) f32.  Returns (N, 4*planes, Ho, Wo) f32."""
    N, Cin, H, W = x_nchw.shape
    planes = params["conv1_w"].shape[0]
    Cout = params["conv3_w"].shape[0]
    assert max(Cin, planes, Cout) <= LANES, "channel tiling for >128 not implemented"
    Ho = (H + 2 - 3) // stride + 1
    Wo = (W + 2 - 3) // stride + 1
    rows = N * Ho * Wo
    Kc = _round_up(Cin + 1, 8)           # true channels + 1 mask channel, 8-aligned

    # ---- host-side im2col of the input (9 taps), NHWC rows = output positions ----
    x_nhwc = jnp.transpose(x_nchw, (0, 2, 3, 1)).astype(jnp.float32)
    xp = jnp.pad(x_nhwc, ((0, 0), (1, 1), (1, 1), (0, 0)))
    valid = jnp.pad(jnp.ones((1, H, W, 1), jnp.float32), ((0, 0), (1, 1), (1, 1), (0, 0)))

    hs = (Ho - 1) * stride + 1
    ws = (Wo - 1) * stride + 1
    taps = []
    for ky in range(3):
        for kx in range(3):
            xt = xp[:, ky:ky + hs:stride, kx:kx + ws:stride, :]        # (N,Ho,Wo,Cin)
            mt = valid[:, ky:ky + hs:stride, kx:kx + ws:stride, :]     # (1,Ho,Wo,1)
            mt = jnp.broadcast_to(mt, (N, Ho, Wo, 1))
            taps.append(jnp.concatenate([xt, mt], -1).reshape(rows, Cin + 1))
    x_col = jnp.stack(taps)                                            # (9, rows, Cin+1)
    x_col = jnp.pad(x_col, ((0, 0), (0, 0), (0, Kc - (Cin + 1))))

    # shortcut input: every `stride`-th spatial position, true channel count
    xs = x_nhwc[:, ::stride, ::stride, :].reshape(rows, Cin)

    # ---- row tiling (batches images per grid step when they fit) ----
    tm = min(block_rows, _round_up(rows, 8))
    rows_p = _round_up(rows, tm)
    x_col = jnp.pad(x_col, ((0, 0), (0, rows_p - rows), (0, 0))).astype(jnp.bfloat16)
    xs = jnp.pad(xs, ((0, rows_p - rows), (0, 0))).astype(jnp.bfloat16)

    # ---- fold BN (running stats) into weights; biases as (1,128) rows ----
    s1, t1 = _fold_bn(*params["bn1"])
    s2, t2 = _fold_bn(*params["bn2"])
    s3, t3 = _fold_bn(*params["bn3"])

    w1 = jnp.zeros((Kc, LANES), jnp.float32)
    w1 = w1.at[:Cin, :planes].set(params["conv1_w"][:, :, 0, 0].T * s1[None, :])
    w1 = w1.at[Cin, :planes].set(t1)          # bn1 bias rides the mask channel

    w2 = jnp.zeros((9 * LANES, LANES), jnp.float32)
    for ky in range(3):
        for kx in range(3):
            t = ky * 3 + kx
            w2 = w2.at[t * LANES:t * LANES + planes, :planes].set(
                params["conv2_w"][:, :, ky, kx].T * s2[None, :])

    w3 = jnp.zeros((LANES, LANES), jnp.float32)
    w3 = w3.at[:planes, :Cout].set(params["conv3_w"][:, :, 0, 0].T * s3[None, :])

    if "convsc_w" in params:
        ssc, tsc = _fold_bn(*params["bnsc"])
        wsc = jnp.zeros((Cin, LANES), jnp.float32)
        wsc = wsc.at[:, :Cout].set(params["convsc_w"][:, :, 0, 0].T * ssc[None, :])
    else:
        # identity shortcut (stride == 1 and Cin == Cout)
        wsc = jnp.zeros((Cin, LANES), jnp.float32)
        wsc = wsc.at[:, :Cout].set(jnp.eye(Cin, dtype=jnp.float32))
        tsc = jnp.zeros((Cout,), jnp.float32)

    w1b, w2b, w3b, wscb = (w.astype(jnp.bfloat16) for w in (w1, w2, w3, wsc))
    t2r, t3r, tscr = _bias_row(t2), _bias_row(t3), _bias_row(tsc)

    grid = rows_p // tm
    flops = 2 * rows_p * (9 * Kc * LANES + 9 * LANES * LANES + LANES * LANES + Cin * LANES)
    bytes_accessed = (
        2 * int(x_col.size + xs.size + w1b.size + w2b.size + w3b.size + wscb.size)
        + 4 * int(t2r.size + t3r.size + tscr.size + rows_p * LANES))

    def resident(shape):  # weights / biases: constant index_map, stay VMEM-resident
        return pl.BlockSpec(shape, lambda i: tuple(0 for _ in shape))

    out_flat = pl.pallas_call(
        _bottleneck_kernel,
        out_shape=jax.ShapeDtypeStruct((rows_p, LANES), jnp.float32),
        grid=(grid,),
        in_specs=[
            pl.BlockSpec((9, tm, Kc), lambda i: (0, i, 0)),   # im2col'ed input taps
            pl.BlockSpec((tm, Cin), lambda i: (i, 0)),        # strided input (shortcut)
            resident((Kc, LANES)),                            # w1 (+ bn1 bias row)
            resident((9 * LANES, LANES)),                     # w2, 9 taps stacked on K
            resident((1, LANES)),                             # bn2 bias
            resident((LANES, LANES)),                         # w3
            resident((1, LANES)),                             # bn3 bias
            resident((Cin, LANES)),                           # shortcut weight
            resident((1, LANES)),                             # shortcut bias
        ],
        out_specs=pl.BlockSpec((tm, LANES), lambda i: (i, 0)),
        compiler_params=pltpu.CompilerParams(
            dimension_semantics=("parallel",),
            vmem_limit_bytes=32 * 1024 * 1024),
        cost_estimate=pl.CostEstimate(
            flops=flops, transcendentals=0, bytes_accessed=bytes_accessed),
    )(x_col, xs, w1b, w2b, t2r, w3b, t3r, wscb, tscr)

    out = out_flat[:rows, :Cout].reshape(N, Ho, Wo, Cout)
    return jnp.transpose(out, (0, 3, 1, 2))                    # back to NCHW


# ---------------------------------------------------------------------------
# Plain-JAX reference (inference-mode BN, f32) for the correctness check.
# ---------------------------------------------------------------------------
def bottleneck_reference(x, params, *, stride, eps=1e-5):
    def bn(y, p):
        g, b, m, v = (a.reshape(1, -1, 1, 1) for a in p)
        return (y - m) / jnp.sqrt(v + eps) * g + b

    def conv(y, w, st=1, pad=0):
        return lax.conv_general_dilated(
            y, w, (st, st), [(pad, pad), (pad, pad)],
            dimension_numbers=("NCHW", "OIHW", "NCHW"))

    out = jax.nn.relu(bn(conv(x, params["conv1_w"]), params["bn1"]))
    out = jax.nn.relu(bn(conv(out, params["conv2_w"], stride, 1), params["bn2"]))
    out = bn(conv(out, params["conv3_w"]), params["bn3"])
    if "convsc_w" in params:
        sc = bn(conv(x, params["convsc_w"], stride, 0), params["bnsc"])
    else:
        sc = x
    return jax.nn.relu(out + sc)


if __name__ == "__main__":
    # Small config consistent with the module; stride/channel change so the
    # projection shortcut (conv1x1 + BN) is exercised.
    N, in_planes, planes, stride = 2, 16, 8, 2
    H = W = 16
    expansion = 4
    out_planes = expansion * planes

    key = jax.random.PRNGKey(0)
    keys = list(jax.random.split(key, 24))
    ki = iter(keys)

    def conv_init(k, shape):
        fan_in = shape[1] * shape[2] * shape[3]
        return jax.random.normal(k, shape, jnp.float32) / jnp.sqrt(fan_in)

    def bn_init(c):
        gamma = 1.0 + 0.1 * jax.random.normal(next(ki), (c,), jnp.float32)
        beta = 0.1 * jax.random.normal(next(ki), (c,), jnp.float32)
        mean = 0.1 * jax.random.normal(next(ki), (c,), jnp.float32)
        var = jax.random.uniform(next(ki), (c,), jnp.float32, 0.5, 1.5)
        return gamma, beta, mean, var

    x = jax.random.normal(next(ki), (N, in_planes, H, W), jnp.float32)

    params = {
        "conv1_w": conv_init(next(ki), (planes, in_planes, 1, 1)),
        "bn1": bn_init(planes),
        "conv2_w": conv_init(next(ki), (planes, planes, 3, 3)),
        "bn2": bn_init(planes),
        "conv3_w": conv_init(next(ki), (out_planes, planes, 1, 1)),
        "bn3": bn_init(out_planes),
    }
    if stride != 1 or in_planes != out_planes:
        params["convsc_w"] = conv_init(next(ki), (out_planes, in_planes, 1, 1))
        params["bnsc"] = bn_init(out_planes)

    # block_rows=64 -> two grid steps for this toy size (exercises the row tiling).
    out = bottleneck_forward(x, params, stride=stride, block_rows=64)
    out = jax.block_until_ready(out)
    assert out.shape == (N, out_planes, H // stride, W // stride), out.shape

    ref = bottleneck_reference(x, params, stride=stride)
    err = float(jnp.max(jnp.abs(out - ref)))
    # bf16 matmul operands (f32 accumulation) -> loosened tolerance vs. f32 reference.
    assert jnp.allclose(out, ref, atol=1e-1, rtol=1e-1), f"max abs err = {err}"

    print("KERNEL_OK")
</pallas_src>

<mosaic_0001>
module attributes {stable_mosaic.version = 11 : i64} {
  func.func @_bottleneck_kernel(%arg0: i32, %arg1: memref<9x64x24xbf16, #tpu.memory_space<vmem>>, %arg2: memref<64x16xbf16, #tpu.memory_space<vmem>>, %arg3: memref<24x128xbf16, #tpu.memory_space<vmem>>, %arg4: memref<1152x128xbf16, #tpu.memory_space<vmem>>, %arg5: memref<1x128xf32, #tpu.memory_space<vmem>>, %arg6: memref<128x128xbf16, #tpu.memory_space<vmem>>, %arg7: memref<1x128xf32, #tpu.memory_space<vmem>>, %arg8: memref<16x128xbf16, #tpu.memory_space<vmem>>, %arg9: memref<1x128xf32, #tpu.memory_space<vmem>>, %arg10: memref<64x128xf32, #tpu.memory_space<vmem>>) attributes {dimension_semantics = [#tpu.dimension_semantics<parallel>], iteration_bounds = array<i64: 2>, scalar_prefetch = 0 : i64, scratch_operands = 0 : i64, tpu.core_type = #tpu.core_type<tc>, window_params = [{transform_indices = @transform_0, window_bounds = array<i64: 9, 64, 24>}, {transform_indices = @transform_1, window_bounds = array<i64: 64, 16>}, {pipeline_mode = #tpu.pipeline_mode<synchronous>, transform_indices = @transform_2, window_bounds = array<i64: 24, 128>}, {pipeline_mode = #tpu.pipeline_mode<synchronous>, transform_indices = @transform_3, window_bounds = array<i64: 1152, 128>}, {pipeline_mode = #tpu.pipeline_mode<synchronous>, transform_indices = @transform_4, window_bounds = array<i64: 1, 128>}, {pipeline_mode = #tpu.pipeline_mode<synchronous>, transform_indices = @transform_5, window_bounds = array<i64: 128, 128>}, {pipeline_mode = #tpu.pipeline_mode<synchronous>, transform_indices = @transform_6, window_bounds = array<i64: 1, 128>}, {pipeline_mode = #tpu.pipeline_mode<synchronous>, transform_indices = @transform_7, window_bounds = array<i64: 16, 128>}, {pipeline_mode = #tpu.pipeline_mode<synchronous>, transform_indices = @transform_8, window_bounds = array<i64: 1, 128>}, {transform_indices = @transform_9, window_bounds = array<i64: 64, 128>}]} {
    %c0 = arith.constant 0 : index
    %c0_0 = arith.constant 0 : index
    %c0_1 = arith.constant 0 : index
    %0 = vector.load %arg1[%c0, %c0_0, %c0_1] : memref<9x64x24xbf16, #tpu.memory_space<vmem>>, vector<1x64x24xbf16>
    %1 = vector.shape_cast %0 : vector<1x64x24xbf16> to vector<64x24xbf16>
    %c0_2 = arith.constant 0 : index
    %c0_3 = arith.constant 0 : index
    %2 = vector.load %arg3[%c0_2, %c0_3] : memref<24x128xbf16, #tpu.memory_space<vmem>>, vector<24x128xbf16>
    %cst = arith.constant dense<0.000000e+00> : vector<64x128xf32>
    %3 = tpu.matmul %1, %2, %cst {dimension_numbers = #tpu.dot_dimension_numbers<[1], [0], [0], [1], [0, 0, 1, 1], [], []>} : vector<64x24xbf16>, vector<24x128xbf16>, vector<64x128xf32> -> vector<64x128xf32>
    %cst_4 = arith.constant 0.000000e+00 : f32
    %4 = vector.broadcast %cst_4 : f32 to vector<64x128xf32>
    %5 = arith.maximumf %3, %4 : vector<64x128xf32>
    %6 = arith.truncf %5 : vector<64x128xf32> to vector<64x128xbf16>
    %c1 = arith.constant 1 : index
    %c0_5 = arith.constant 0 : index
    %c0_6 = arith.constant 0 : index
    %7 = vector.load %arg1[%c1, %c0_5, %c0_6] : memref<9x64x24xbf16, #tpu.memory_space<vmem>>, vector<1x64x24xbf16>
    %8 = vector.shape_cast %7 : vector<1x64x24xbf16> to vector<64x24xbf16>
    %c0_7 = arith.constant 0 : index
    %c0_8 = arith.constant 0 : index
    %9 = vector.load %arg3[%c0_7, %c0_8] : memref<24x128xbf16, #tpu.memory_space<vmem>>, vector<24x128xbf16>
    %cst_9 = arith.constant dense<0.000000e+00> : vector<64x128xf32>
    %10 = tpu.matmul %8, %9, %cst_9 {dimension_numbers = #tpu.dot_dimension_numbers<[1], [0], [0], [1], [0, 0, 1, 1], [], []>} : vector<64x24xbf16>, vector<24x128xbf16>, vector<64x128xf32> -> vector<64x128xf32>
    %cst_10 = arith.constant 0.000000e+00 : f32
    %11 = vector.broadcast %cst_10 : f32 to vector<64x128xf32>
    %12 = arith.maximumf %10, %11 : vector<64x128xf32>
    %13 = arith.truncf %12 : vector<64x128xf32> to vector<64x128xbf16>
    %c2 = arith.constant 2 : index
    %c0_11 = arith.constant 0 : index
    %c0_12 = arith.constant 0 : index
    %14 = vector.load %arg1[%c2, %c0_11, %c0_12] : memref<9x64x24xbf16, #tpu.memory_space<vmem>>, vector<1x64x24xbf16>
    %15 = vector.shape_cast %14 : vector<1x64x24xbf16> to vector<64x24xbf16>
    %c0_13 = arith.constant 0 : index
    %c0_14 = arith.constant 0 : index
    %16 = vector.load %arg3[%c0_13, %c0_14] : memref<24x128xbf16, #tpu.memory_space<vmem>>, vector<24x128xbf16>
    %cst_15 = arith.constant dense<0.000000e+00> : vector<64x128xf32>
    %17 = tpu.matmul %15, %16, %cst_15 {dimension_numbers = #tpu.dot_dimension_numbers<[1], [0], [0], [1], [0, 0, 1, 1], [], []>} : vector<64x24xbf16>, vector<24x128xbf16>, vector<64x128xf32> -> vector<64x128xf32>
    %cst_16 = arith.constant 0.000000e+00 : f32
    %18 = vector.broadcast %cst_16 : f32 to vector<64x128xf32>
    %19 = arith.maximumf %17, %18 : vector<64x128xf32>
    %20 = arith.truncf %19 : vector<64x128xf32> to vector<64x128xbf16>
    %c3 = arith.constant 3 : index
    %c0_17 = arith.constant 0 : index
    %c0_18 = arith.constant 0 : index
    %21 = vector.load %arg1[%c3, %c0_17, %c0_18] : memref<9x64x24xbf16, #tpu.memory_space<vmem>>, vector<1x64x24xbf16>
    %22 = vector.shape_cast %21 : vector<1x64x24xbf16> to vector<64x24xbf16>
    %c0_19 = arith.constant 0 : index
    %c0_20 = arith.constant 0 : index
    %23 = vector.load %arg3[%c0_19, %c0_20] : memref<24x128xbf16, #tpu.memory_space<vmem>>, vector<24x128xbf16>
    %cst_21 = arith.constant dense<0.000000e+00> : vector<64x128xf32>
    %24 = tpu.matmul %22, %23, %cst_21 {dimension_numbers = #tpu.dot_dimension_numbers<[1], [0], [0], [1], [0, 0, 1, 1], [], []>} : vector<64x24xbf16>, vector<24x128xbf16>, vector<64x128xf32> -> vector<64x128xf32>
    %cst_22 = arith.constant 0.000000e+00 : f32
    %25 = vector.broadcast %cst_22 : f32 to vector<64x128xf32>
    %26 = arith.maximumf %24, %25 : vector<64x128xf32>
    %27 = arith.truncf %26 : vector<64x128xf32> to vector<64x128xbf16>
    %c4 = arith.constant 4 : index
    %c0_23 = arith.constant 0 : index
    %c0_24 = arith.constant 0 : index
    %28 = vector.load %arg1[%c4, %c0_23, %c0_24] : memref<9x64x24xbf16, #tpu.memory_space<vmem>>, vector<1x64x24xbf16>
    %29 = vector.shape_cast %28 : vector<1x64x24xbf16> to vector<64x24xbf16>
    %c0_25 = arith.constant 0 : index
    %c0_26 = arith.constant 0 : index
    %30 = vector.load %arg3[%c0_25, %c0_26] : memref<24x128xbf16, #tpu.memory_space<vmem>>, vector<24x128xbf16>
    %cst_27 = arith.constant dense<0.000000e+00> : vector<64x128xf32>
    %31 = tpu.matmul %29, %30, %cst_27 {dimension_numbers = #tpu.dot_dimension_numbers<[1], [0], [0], [1], [0, 0, 1, 1], [], []>} : vector<64x24xbf16>, vector<24x128xbf16>, vector<64x128xf32> -> vector<64x128xf32>
    %cst_28 = arith.constant 0.000000e+00 : f32
    %32 = vector.broadcast %cst_28 : f32 to vector<64x128xf32>
    %33 = arith.maximumf %31, %32 : vector<64x128xf32>
    %34 = arith.truncf %33 : vector<64x128xf32> to vector<64x128xbf16>
    %c5 = arith.constant 5 : index
    %c0_29 = arith.constant 0 : index
    %c0_30 = arith.constant 0 : index
    %35 = vector.load %arg1[%c5, %c0_29, %c0_30] : memref<9x64x24xbf16, #tpu.memory_space<vmem>>, vector<1x64x24xbf16>
    %36 = vector.shape_cast %35 : vector<1x64x24xbf16> to vector<64x24xbf16>
    %c0_31 = arith.constant 0 : index
    %c0_32 = arith.constant 0 : index
    %37 = vector.load %arg3[%c0_31, %c0_32] : memref<24x128xbf16, #tpu.memory_space<vmem>>, vector<24x128xbf16>
    %cst_33 = arith.constant dense<0.000000e+00> : vector<64x128xf32>
    %38 = tpu.matmul %36, %37, %cst_33 {dimension_numbers = #tpu.dot_dimension_numbers<[1], [0], [0], [1], [0, 0, 1, 1], [], []>} : vector<64x24xbf16>, vector<24x128xbf16>, vector<64x128xf32> -> vector<64x128xf32>
    %cst_34 = arith.constant 0.000000e+00 : f32
    %39 = vector.broadcast %cst_34 : f32 to vector<64x128xf32>
    %40 = arith.maximumf %38, %39 : vector<64x128xf32>
    %41 = arith.truncf %40 : vector<64x128xf32> to vector<64x128xbf16>
    %c6 = arith.constant 6 : index
    %c0_35 = arith.constant 0 : index
    %c0_36 = arith.constant 0 : index
    %42 = vector.load %arg1[%c6, %c0_35, %c0_36] : memref<9x64x24xbf16, #tpu.memory_space<vmem>>, vector<1x64x24xbf16>
    %43 = vector.shape_cast %42 : vector<1x64x24xbf16> to vector<64x24xbf16>
    %c0_37 = arith.constant 0 : index
    %c0_38 = arith.constant 0 : index
    %44 = vector.load %arg3[%c0_37, %c0_38] : memref<24x128xbf16, #tpu.memory_space<vmem>>, vector<24x128xbf16>
    %cst_39 = arith.constant dense<0.000000e+00> : vector<64x128xf32>
    %45 = tpu.matmul %43, %44, %cst_39 {dimension_numbers = #tpu.dot_dimension_numbers<[1], [0], [0], [1], [0, 0, 1, 1], [], []>} : vector<64x24xbf16>, vector<24x128xbf16>, vector<64x128xf32> -> vector<64x128xf32>
    %cst_40 = arith.constant 0.000000e+00 : f32
    %46 = vector.broadcast %cst_40 : f32 to vector<64x128xf32>
    %47 = arith.maximumf %45, %46 : vector<64x128xf32>
    %48 = arith.truncf %47 : vector<64x128xf32> to vector<64x128xbf16>
    %c7 = arith.constant 7 : index
    %c0_41 = arith.constant 0 : index
    %c0_42 = arith.constant 0 : index
    %49 = vector.load %arg1[%c7, %c0_41, %c0_42] : memref<9x64x24xbf16, #tpu.memory_space<vmem>>, vector<1x64x24xbf16>
    %50 = vector.shape_cast %49 : vector<1x64x24xbf16> to vector<64x24xbf16>
    %c0_43 = arith.constant 0 : index
    %c0_44 = arith.constant 0 : index
    %51 = vector.load %arg3[%c0_43, %c0_44] : memref<24x128xbf16, #tpu.memory_space<vmem>>, vector<24x128xbf16>
    %cst_45 = arith.constant dense<0.000000e+00> : vector<64x128xf32>
    %52 = tpu.matmul %50, %51, %cst_45 {dimension_numbers = #tpu.dot_dimension_numbers<[1], [0], [0], [1], [0, 0, 1, 1], [], []>} : vector<64x24xbf16>, vector<24x128xbf16>, vector<64x128xf32> -> vector<64x128xf32>
    %cst_46 = arith.constant 0.000000e+00 : f32
    %53 = vector.broadcast %cst_46 : f32 to vector<64x128xf32>
    %54 = arith.maximumf %52, %53 : vector<64x128xf32>
    %55 = arith.truncf %54 : vector<64x128xf32> to vector<64x128xbf16>
    %c8 = arith.constant 8 : index
    %c0_47 = arith.constant 0 : index
    %c0_48 = arith.constant 0 : index
    %56 = vector.load %arg1[%c8, %c0_47, %c0_48] : memref<9x64x24xbf16, #tpu.memory_space<vmem>>, vector<1x64x24xbf16>
    %57 = vector.shape_cast %56 : vector<1x64x24xbf16> to vector<64x24xbf16>
    %c0_49 = arith.constant 0 : index
    %c0_50 = arith.constant 0 : index
    %58 = vector.load %arg3[%c0_49, %c0_50] : memref<24x128xbf16, #tpu.memory_space<vmem>>, vector<24x128xbf16>
    %cst_51 = arith.constant dense<0.000000e+00> : vector<64x128xf32>
    %59 = tpu.matmul %57, %58, %cst_51 {dimension_numbers = #tpu.dot_dimension_numbers<[1], [0], [0], [1], [0, 0, 1, 1], [], []>} : vector<64x24xbf16>, vector<24x128xbf16>, vector<64x128xf32> -> vector<64x128xf32>
    %cst_52 = arith.constant 0.000000e+00 : f32
    %60 = vector.broadcast %cst_52 : f32 to vector<64x128xf32>
    %61 = arith.maximumf %59, %60 : vector<64x128xf32>
    %62 = arith.truncf %61 : vector<64x128xf32> to vector<64x128xbf16>
    %63 = tpu.concatenate %6, %13, %20, %27, %34, %41, %48, %55, %62 in 1 : vector<64x128xbf16>, vector<64x128xbf16>, vector<64x128xbf16>, vector<64x128xbf16>, vector<64x128xbf16>, vector<64x128xbf16>, vector<64x128xbf16>, vector<64x128xbf16>, vector<64x128xbf16> -> vector<64x1152xbf16>
    %c0_53 = arith.constant 0 : index
    %c0_54 = arith.constant 0 : index
    %64 = vector.load %arg4[%c0_53, %c0_54] : memref<1152x128xbf16, #tpu.memory_space<vmem>>, vector<1152x128xbf16>
    %cst_55 = arith.constant dense<0.000000e+00> : vector<64x128xf32>
    %65 = tpu.matmul %63, %64, %cst_55 {dimension_numbers = #tpu.dot_dimension_numbers<[1], [0], [0], [1], [0, 0, 1, 1], [], []>} : vector<64x1152xbf16>, vector<1152x128xbf16>, vector<64x128xf32> -> vector<64x128xf32>
    %c0_56 = arith.constant 0 : index
    %c0_57 = arith.constant 0 : index
    %66 = vector.load %arg5[%c0_56, %c0_57] : memref<1x128xf32, #tpu.memory_space<vmem>>, vector<1x128xf32>
    %67 = vector.broadcast %66 : vector<1x128xf32> to vector<64x128xf32>
    %68 = arith.addf %65, %67 : vector<64x128xf32>
    %cst_58 = arith.constant 0.000000e+00 : f32
    %69 = vector.broadcast %cst_58 : f32 to vector<64x128xf32>
    %70 = arith.maximumf %68, %69 : vector<64x128xf32>
    %71 = arith.truncf %70 : vector<64x128xf32> to vector<64x128xbf16>
    %c0_59 = arith.constant 0 : index
    %c0_60 = arith.constant 0 : index
    %72 = vector.load %arg6[%c0_59, %c0_60] : memref<128x128xbf16, #tpu.memory_space<vmem>>, vector<128x128xbf16>
    %cst_61 = arith.constant dense<0.000000e+00> : vector<64x128xf32>
    %73 = tpu.matmul %71, %72, %cst_61 {dimension_numbers = #tpu.dot_dimension_numbers<[1], [0], [0], [1], [0, 0, 1, 1], [], []>} : vector<64x128xbf16>, vector<128x128xbf16>, vector<64x128xf32> -> vector<64x128xf32>
    %c0_62 = arith.constant 0 : index
    %c0_63 = arith.constant 0 : index
    %74 = vector.load %arg7[%c0_62, %c0_63] : memref<1x128xf32, #tpu.memory_space<vmem>>, vector<1x128xf32>
    %75 = vector.broadcast %74 : vector<1x128xf32> to vector<64x128xf32>
    %76 = arith.addf %73, %75 : vector<64x128xf32>
    %c0_64 = arith.constant 0 : index
    %c0_65 = arith.constant 0 : index
    %77 = vector.load %arg2[%c0_64, %c0_65] : memref<64x16xbf16, #tpu.memory_space<vmem>>, vector<64x16xbf16>
    %c0_66 = arith.constant 0 : index
    %c0_67 = arith.constant 0 : index
    %78 = vector.load %arg8[%c0_66, %c0_67] : memref<16x128xbf16, #tpu.memory_space<vmem>>, vector<16x128xbf16>
    %cst_68 = arith.constant dense<0.000000e+00> : vector<64x128xf32>
    %79 = tpu.matmul %77, %78, %cst_68 {dimension_numbers = #tpu.dot_dimension_numbers<[1], [0], [0], [1], [0, 0, 1, 1], [], []>} : vector<64x16xbf16>, vector<16x128xbf16>, vector<64x128xf32> -> vector<64x128xf32>
    %c0_69 = arith.constant 0 : index
    %c0_70 = arith.constant 0 : index
    %80 = vector.load %arg9[%c0_69, %c0_70] : memref<1x128xf32, #tpu.memory_space<vmem>>, vector<1x128xf32>
    %81 = vector.broadcast %80 : vector<1x128xf32> to vector<64x128xf32>
    %82 = arith.addf %79, %81 : vector<64x128xf32>
    %83 = arith.addf %76, %82 : vector<64x128xf32>
    %cst_71 = arith.constant 0.000000e+00 : f32
    %84 = vector.broadcast %cst_71 : f32 to vector<64x128xf32>
    %85 = arith.maximumf %83, %84 : vector<64x128xf32>
    %c0_72 = arith.constant 0 : index
    %c0_73 = arith.constant 0 : index
    %86 = vector.load %arg10[%c0_72, %c0_73] : memref<64x128xf32, #tpu.memory_space<vmem>>, vector<64x128xf32>
    tpu.vector_store %arg10[%c0_72, %c0_73], %85 {strides = array<i32>} : memref<64x128xf32, #tpu.memory_space<vmem>>, vector<64x128xf32>,
    return
  }
  func.func @transform_0(%arg0: i32) -> (i32, i32, i32) {
    %c0_i32 = arith.constant 0 : i32
    %c0_i32_0 = arith.constant 0 : i32
    %c0_i32_1 = arith.constant 0 : i32
    return %c0_i32, %arg0, %c0_i32_0 : i32, i32, i32
  }
  func.func @transform_1(%arg0: i32) -> (i32, i32) {
    %c0_i32 = arith.constant 0 : i32
    %c0_i32_0 = arith.constant 0 : i32
    return %arg0, %c0_i32 : i32, i32
  }
  func.func @transform_2(%arg0: i32) -> (i32, i32) {
    %c0_i32 = arith.constant 0 : i32
    %c0_i32_0 = arith.constant 0 : i32
    %c0_i32_1 = arith.constant 0 : i32
    return %c0_i32, %c0_i32_0 : i32, i32
  }
  func.func @transform_3(%arg0: i32) -> (i32, i32) {
    %c0_i32 = arith.constant 0 : i32
    %c0_i32_0 = arith.constant 0 : i32
    %c0_i32_1 = arith.constant 0 : i32
    return %c0_i32, %c0_i32_0 : i32, i32
  }
  func.func @transform_4(%arg0: i32) -> (i32, i32) {
    %c0_i32 = arith.constant 0 : i32
    %c0_i32_0 = arith.constant 0 : i32
    %c0_i32_1 = arith.constant 0 : i32
    return %c0_i32, %c0_i32_0 : i32, i32
  }
  func.func @transform_5(%arg0: i32) -> (i32, i32) {
    %c0_i32 = arith.constant 0 : i32
    %c0_i32_0 = arith.constant 0 : i32
    %c0_i32_1 = arith.constant 0 : i32
    return %c0_i32, %c0_i32_0 : i32, i32
  }
  func.func @transform_6(%arg0: i32) -> (i32, i32) {
    %c0_i32 = arith.constant 0 : i32
    %c0_i32_0 = arith.constant 0 : i32
    %c0_i32_1 = arith.constant 0 : i32
    return %c0_i32, %c0_i32_0 : i32, i32
  }
  func.func @transform_7(%arg0: i32) -> (i32, i32) {
    %c0_i32 = arith.constant 0 : i32
    %c0_i32_0 = arith.constant 0 : i32
    %c0_i32_1 = arith.constant 0 : i32
    return %c0_i32, %c0_i32_0 : i32, i32
  }
  func.func @transform_8(%arg0: i32) -> (i32, i32) {
    %c0_i32 = arith.constant 0 : i32
    %c0_i32_0 = arith.constant 0 : i32
    %c0_i32_1 = arith.constant 0 : i32
    return %c0_i32, %c0_i32_0 : i32, i32
  }
  func.func @transform_9(%arg0: i32) -> (i32, i32) {
    %c0_i32 = arith.constant 0 : i32
    %c0_i32_0 = arith.constant 0 : i32
    return %arg0, %c0_i32 : i32, i32
  }
}

</mosaic_0001>

<llo_original>
// kernel: tpu_custom_call.1
$region0: #{tpu_custom_call.1}
  #allocation0 [shape = 'u32[]', space=smem, size = 0x4, offset = 0x4, fixed_abs, tag = 'smem constant byte address 0x4 - core index']
  #allocation1 [shape = 'u32[144,128]{1,0:T(1,128)}', space=vmem, size = 0x12000, scoped, tag = 'internal scratch']
  %s0 = inlined_call_operand.vmem [shape: bf16[9,128,24], index: 0, kind: input, shape index: {}]
  %s1 = inlined_call_operand.vmem [shape: bf16[128,16], index: 1, kind: input, shape index: {}]
  %s2 = inlined_call_operand.vmem [shape: bf16[24,128], index: 2, kind: input, shape index: {}]
  %s3 = inlined_call_operand.vmem [shape: bf16[1152,128], index: 3, kind: input, shape index: {}]
  %s4 = inlined_call_operand.vmem [shape: f32[1,128], index: 4, kind: input, shape index: {}]
  %s5 = inlined_call_operand.vmem [shape: bf16[128,128], index: 5, kind: input, shape index: {}]
  %s6 = inlined_call_operand.vmem [shape: f32[1,128], index: 6, kind: input, shape index: {}]
  %s7 = inlined_call_operand.vmem [shape: bf16[16,128], index: 7, kind: input, shape index: {}]
  %s8 = inlined_call_operand.vmem [shape: f32[1,128], index: 8, kind: input, shape index: {}]
  %s9 = inlined_call_operand.hbm [shape: f32[128,128], index: 9, kind: output, shape index: {}]
  %s10 = sld [smem:[#allocation0]]
  $region110: #{tpu_custom_call.1} parent=0
    _
  %s12 = ssub.s32 1, %s10
  %s13 = scalar_select 0, %s12, %s10
  $region1: #{tpu_custom_call.1} parent=0
    #allocation2 [shape = 'u8[294912]{0}', space=vmem, size = 0x48000, scoped, tag = 'input window, operand 0']
    #allocation3 [shape = 'u8[65536]{0}', space=vmem, size = 0x10000, scoped, tag = 'output window, operand 0']
    #allocation4 [shape = 's32[2]{0}', space=sflag, size = 0x8, scoped, tag = 'scoped memory for tpu_custom_call.1']
    %14 = vsyncpa [#allocation4], 0
    %s15 = scalar_lea.sflag [#allocation4], 1
    %16 = vsyncpa %s15, 0
    loop: start=0, step=1, limit=4
    $region2: #{tpu_custom_call.1} parent=1 // loop_pre_header
      _
    $region3: #{tpu_custom_call.1} parent=1 // loop_header
      %s18 = sphi 0, %s22
      %p19 = scmp.ge.s32.totalorder %s18, 4
      %s28 = sphi 0, %s30
      %s31 = sphi 0, %s28
      %s32 = sphi 0, %s31
      %s48 = sphi 0, %s32
      %s54 = sphi 0, %s56
      %s57 = sphi 0, %s54
      %s58 = sphi 0, %s57
      %s74 = sphi 0, %s58
      %s78 = sphi 0, %s78
      %s80 = sphi 0, %s78
      %s81 = sphi 0, %s80
      %s95 = sphi 0, %s81
      %s99 = sphi 0, %s99
      %s101 = sphi 0, %s99
      %s102 = sphi 0, %s101
      %s116 = sphi 0, %s102
      %s120 = sphi 0, %s120
      %s122 = sphi 0, %s120
      %s123 = sphi 0, %s122
      %s137 = sphi 0, %s123
      %s141 = sphi 0, %s141
      %s143 = sphi 0, %s141
      %s144 = sphi 0, %s143
      %s158 = sphi 0, %s144
      %s162 = sphi 0, %s162
      %s164 = sphi 0, %s162
      %s165 = sphi 0, %s164
      %s179 = sphi 0, %s165
      %s183 = sphi 0, %s183
      %s185 = sphi 0, %s183
      %s186 = sphi 0, %s185
      %s200 = sphi 0, %s186
      %s204 = sphi 0, %s204
      %s206 = sphi 0, %s204
      %s207 = sphi 0, %s206
      %s221 = sphi 0, %s207
      %s227 = sphi 0, %s229
      %s230 = sphi 0, %s227
      %s231 = sphi 0, %s230
      %s247 = sphi 0, %s231
    $region4: #{tpu_custom_call.1} parent=1 // loop_header_branch
      %21 = sbr.rel (%p19) target = $region8
    $region5: #{tpu_custom_call.1} parent=1 // loop_body
      %s23 = ssub.s32 %s18, 1
      %s24 = ssub.s32 %s18, 2
      %s25 = sadd.s32 %s18, 1
      %s26 = ssub.s32 %s18, %s25
      %p27 = scmp.eq.s32.totalorder %s26, 0
      %s29 = sadd.s32 %s28, 1
      %s30 = scalar_select %p27, %s28, %s29
      %p33 = pneg %p27
      %p34 = scmp.eq.s32.totalorder %s18, 1
      %p35 = por %p33, %p34
      %p36 = scmp.ne.s32.totalorder %s28, %s31
      %p37 = scmp.eq.s32.totalorder %s18, 0
      %p38 = por %p36, %p37
      %p39 = scmp.ne.s32.totalorder %s28, %s31
      %p40 = scmp.eq.s32.totalorder %s23, 1
      %p41 = por %p39, %p40
      %p42 = scmp.ne.s32.totalorder %s31, %s32
      %p43 = scmp.eq.s32.totalorder %s23, 0
      %p44 = por %p42, %p43
      %p45 = scmp.ne.s32.totalorder %s31, %s32
      %p46 = scmp.eq.s32.totalorder %s24, 1
      %p47 = por %p45, %p46
      %p49 = scmp.ne.s32.totalorder %s32, %s48
      %p50 = scmp.eq.s32.totalorder %s24, 0
      %p51 = por %p49, %p50
      %s52 = ssub.s32 %s18, %s25
      %p53 = scmp.eq.s32.totalorder %s52, 0
      %s55 = sadd.s32 %s54, 1
      %s56 = scalar_select %p53, %s54, %s55
      %p59 = pneg %p53
      %p60 = scmp.eq.s32.totalorder %s18, 1
      %p61 = por %p59, %p60
      %p62 = scmp.ne.s32.totalorder %s54, %s57
      %p63 = scmp.eq.s32.totalorder %s18, 0
      %p64 = por %p62, %p63
      %p65 = scmp.ne.s32.totalorder %s54, %s57
      %p66 = scmp.eq.s32.totalorder %s23, 1
      %p67 = por %p65, %p66
      %p68 = scmp.ne.s32.totalorder %s57, %s58
      %p69 = scmp.eq.s32.totalorder %s23, 0
      %p70 = por %p68, %p69
      %p71 = scmp.ne.s32.totalorder %s57, %s58
      %p72 = scmp.eq.s32.totalorder %s24, 1
      %p73 = por %p71, %p72
      %p75 = scmp.ne.s32.totalorder %s58, %s74
      %p76 = scmp.eq.s32.totalorder %s24, 0
      %p77 = por %p75, %p76
      %s79 = sadd.s32 %s78, 1
      %p82 = scmp.eq.s32.totalorder %s18, 1
      %p83 = scmp.ne.s32.totalorder %s78, %s80
      %p84 = scmp.eq.s32.totalorder %s18, 0
      %p85 = por %p83, %p84
      %p86 = scmp.ne.s32.totalorder %s78, %s80
      %p87 = scmp.eq.s32.totalorder %s23, 1
      %p88 = por %p86, %p87
      %p89 = scmp.ne.s32.totalorder %s80, %s81
      %p90 = scmp.eq.s32.totalorder %s23, 0
      %p91 = por %p89, %p90
      %p92 = scmp.ne.s32.totalorder %s80, %s81
      %p93 = scmp.eq.s32.totalorder %s24, 1
      %p94 = por %p92, %p93
      %p96 = scmp.ne.s32.totalorder %s81, %s95
      %p97 = scmp.eq.s32.totalorder %s24, 0
      %p98 = por %p96, %p97
      %s100 = sadd.s32 %s99, 1
      %p103 = scmp.eq.s32.totalorder %s18, 1
      %p104 = scmp.ne.s32.totalorder %s99, %s101
      %p105 = scmp.eq.s32.totalorder %s18, 0
      %p106 = por %p104, %p105
      %p107 = scmp.ne.s32.totalorder %s99, %s101
      %p108 = scmp.eq.s32.totalorder %s23, 1
      %p109 = por %p107, %p108
      %p110 = scmp.ne.s32.totalorder %s101, %s102
      %p111 = scmp.eq.s32.totalorder %s23, 0
      %p112 = por %p110, %p111
      %p113 = scmp.ne.s32.totalorder %s101, %s102
      %p114 = scmp.eq.s32.totalorder %s24, 1
      %p115 = por %p113, %p114
      %p117 = scmp.ne.s32.totalorder %s102, %s116
      %p118 = scmp.eq.s32.totalorder %s24, 0
      %p119 = por %p117, %p118
      %s121 = sadd.s32 %s120, 1
      %p124 = scmp.eq.s32.totalorder %s18, 1
      %p125 = scmp.ne.s32.totalorder %s120, %s122
      %p126 = scmp.eq.s32.totalorder %s18, 0
      %p127 = por %p125, %p126
      %p128 = scmp.ne.s32.totalorder %s120, %s122
      %p129 = scmp.eq.s32.totalorder %s23, 1
      %p130 = por %p128, %p129
      %p131 = scmp.ne.s32.totalorder %s122, %s123
      %p132 = scmp.eq.s32.totalorder %s23, 0
      %p133 = por %p131, %p132
      %p134 = scmp.ne.s32.totalorder %s122, %s123
      %p135 = scmp.eq.s32.totalorder %s24, 1
      %p136 = por %p134, %p135
      %p138 = scmp.ne.s32.totalorder %s123, %s137
      %p139 = scmp.eq.s32.totalorder %s24, 0
      %p140 = por %p138, %p139
      %s142 = sadd.s32 %s141, 1
      %p145 = scmp.eq.s32.totalorder %s18, 1
      %p146 = scmp.ne.s32.totalorder %s141, %s143
      %p147 = scmp.eq.s32.totalorder %s18, 0
      %p148 = por %p146, %p147
      %p149 = scmp.ne.s32.totalorder %s141, %s143
      %p150 = scmp.eq.s32.totalorder %s23, 1
      %p151 = por %p149, %p150
      %p152 = scmp.ne.s32.totalorder %s143, %s144
      %p153 = scmp.eq.s32.totalorder %s23, 0
      %p154 = por %p152, %p153
      %p155 = scmp.ne.s32.totalorder %s143, %s144
      %p156 = scmp.eq.s32.totalorder %s24, 1
      %p157 = por %p155, %p156
      %p159 = scmp.ne.s32.totalorder %s144, %s158
      %p160 = scmp.eq.s32.totalorder %s24, 0
      %p161 = por %p159, %p160
      %s163 = sadd.s32 %s162, 1
      %p166 = scmp.eq.s32.totalorder %s18, 1
      %p167 = scmp.ne.s32.totalorder %s162, %s164
      %p168 = scmp.eq.s32.totalorder %s18, 0
      %p169 = por %p167, %p168
      %p170 = scmp.ne.s32.totalorder %s162, %s164
      %p171 = scmp.eq.s32.totalorder %s23, 1
      %p172 = por %p170, %p171
      %p173 = scmp.ne.s32.totalorder %s164, %s165
      %p174 = scmp.eq.s32.totalorder %s23, 0
      %p175 = por %p173, %p174
      %p176 = scmp.ne.s32.totalorder %s164, %s165
      %p177 = scmp.eq.s32.totalorder %s24, 1
      %p178 = por %p176, %p177
      %p180 = scmp.ne.s32.totalorder %s165, %s179
      %p181 = scmp.eq.s32.totalorder %s24, 0
      %p182 = por %p180, %p181
      %s184 = sadd.s32 %s183, 1
      %p187 = scmp.eq.s32.totalorder %s18, 1
      %p188 = scmp.ne.s32.totalorder %s183, %s185
      %p189 = scmp.eq.s32.totalorder %s18, 0
      %p190 = por %p188, %p189
      %p191 = scmp.ne.s32.totalorder %s183, %s185
      %p192 = scmp.eq.s32.totalorder %s23, 1
      %p193 = por %p191, %p192
      %p194 = scmp.ne.s32.totalorder %s185, %s186
      %p195 = scmp.eq.s32.totalorder %s23, 0
      %p196 = por %p194, %p195
      %p197 = scmp.ne.s32.totalorder %s185, %s186
      %p198 = scmp.eq.s32.totalorder %s24, 1
      %p199 = por %p197, %p198
      %p201 = scmp.ne.s32.totalorder %s186, %s200
      %p202 = scmp.eq.s32.totalorder %s24, 0
      %p203 = por %p201, %p202
      %s205 = sadd.s32 %s204, 1
      %p208 = scmp.eq.s32.totalorder %s18, 1
      %p209 = scmp.ne.s32.totalorder %s204, %s206
      %p210 = scmp.eq.s32.totalorder %s18, 0
      %p211 = por %p209, %p210
      %p212 = scmp.ne.s32.totalorder %s204, %s206
      %p213 = scmp.eq.s32.totalorder %s23, 1
      %p214 = por %p212, %p213
      %p215 = scmp.ne.s32.totalorder %s206, %s207
      %p216 = scmp.eq.s32.totalorder %s23, 0
      %p217 = por %p215, %p216
      %p218 = scmp.ne.s32.totalorder %s206, %s207
      %p219 = scmp.eq.s32.totalorder %s24, 1
      %p220 = por %p218, %p219
      %p222 = scmp.ne.s32.totalorder %s207, %s221
      %p223 = scmp.eq.s32.totalorder %s24, 0
      %p224 = por %p222, %p223
      %s225 = ssub.s32 %s18, %s25
      %p226 = scmp.eq.s32.totalorder %s225, 0
      %s228 = sadd.s32 %s227, 1
      %s229 = scalar_select %p226, %s227, %s228
      %p232 = pneg %p226
      %p233 = scmp.eq.s32.totalorder %s18, 1
      %p234 = por %p232, %p233
      %p235 = scmp.ne.s32.totalorder %s227, %s230
      %p236 = scmp.eq.s32.totalorder %s18, 0
      %p237 = por %p235, %p236
      %p238 = scmp.ne.s32.totalorder %s227, %s230
      %p239 = scmp.eq.s32.totalorder %s23, 1
      %p240 = por %p238, %p239
      %p241 = scmp.ne.s32.totalorder %s230, %s231
      %p242 = scmp.eq.s32.totalorder %s23, 0
      %p243 = por %p241, %p242
      %p244 = scmp.ne.s32.totalorder %s230, %s231
      %p245 = scmp.eq.s32.totalorder %s24, 1
      %p246 = por %p244, %p245
      %p248 = scmp.ne.s32.totalorder %s231, %s247
      %p249 = scmp.eq.s32.totalorder %s24, 0
      %p250 = por %p248, %p249
      %p251 = scmp.le.s32.totalorder 1, %s18
      %p252 = scmp.lt.s32.totalorder %s18, 3
      %p253 = pnand %p251, %p252
      %p254 = pneg %p253
      // Predicated region
      $region9: #{tpu_custom_call.1} parent=5 // pred_check
        _
      $region10: #{tpu_custom_call.1} parent=5 // pred_check_branch
        %256 = sbr.rel (%p253) target = $region12
      $region11: #{tpu_custom_call.1} parent=5 // pred_region
        %s257 = ssub.s32 %s18, 1
        // Predicated region
        $region13: #{tpu_custom_call.1} parent=11 // pred_check
          %p258 = pneg %p91
        $region14: #{tpu_custom_call.1} parent=11 // pred_check_branch
          %260 = sbr.rel (%p258) target = $region16
        $region15: #{tpu_custom_call.1} parent=11 // pred_region
          _
        $region16: #{tpu_custom_call.1} parent=11 // pred_fallthru
          _
        // Predicated region
        $region17: #{tpu_custom_call.1} parent=11 // pred_check
          %p261 = pneg %p112
        $region18: #{tpu_custom_call.1} parent=11 // pred_check_branch
          %263 = sbr.rel (%p261) target = $region20
        $region19: #{tpu_custom_call.1} parent=11 // pred_region
          _
        $region20: #{tpu_custom_call.1} parent=11 // pred_fallthru
          _
        // Predicated region
        $region21: #{tpu_custom_call.1} parent=11 // pred_check
          %p264 = pneg %p133
        $region22: #{tpu_custom_call.1} parent=11 // pred_check_branch
          %266 = sbr.rel (%p264) target = $region24
        $region23: #{tpu_custom_call.1} parent=11 // pred_region
          _
        $region24: #{tpu_custom_call.1} parent=11 // pred_fallthru
          _
        // Predicated region
        $region25: #{tpu_custom_call.1} parent=11 // pred_check
          %p267 = pneg %p154
        $region26: #{tpu_custom_call.1} parent=11 // pred_check_branch
          %269 = sbr.rel (%p267) target = $region28
        $region27: #{tpu_custom_call.1} parent=11 // pred_region
          _
        $region28: #{tpu_custom_call.1} parent=11 // pred_fallthru
          _
        // Predicated region
        $region29: #{tpu_custom_call.1} parent=11 // pred_check
          %p270 = pneg %p175
        $region30: #{tpu_custom_call.1} parent=11 // pred_check_branch
          %272 = sbr.rel (%p270) target = $region32
        $region31: #{tpu_custom_call.1} parent=11 // pred_region
          _
        $region32: #{tpu_custom_call.1} parent=11 // pred_fallthru
          _
        // Predicated region
        $region33: #{tpu_custom_call.1} parent=11 // pred_check
          %p273 = pneg %p196
        $region34: #{tpu_custom_call.1} parent=11 // pred_check_branch
          %275 = sbr.rel (%p273) target = $region36
        $region35: #{tpu_custom_call.1} parent=11 // pred_region
          _
        $region36: #{tpu_custom_call.1} parent=11 // pred_fallthru
          _
        // Predicated region
        $region37: #{tpu_custom_call.1} parent=11 // pred_check
          %p276 = pneg %p217
        $region38: #{tpu_custom_call.1} parent=11 // pred_check_branch
          %278 = sbr.rel (%p276) target = $region40
        $region39: #{tpu_custom_call.1} parent=11 // pred_region
          _
        $region40: #{tpu_custom_call.1} parent=11 // pred_fallthru
          _
      $region12: #{tpu_custom_call.1} parent=5 // pred_fallthru
        _
      %p279 = scmp.lt.s32.totalorder %s18, 2
      // Predicated region
      $region41: #{tpu_custom_call.1} parent=5 // pred_check
        %p280 = pneg %p279
      $region42: #{tpu_custom_call.1} parent=5 // pred_check_branch
        %282 = sbr.rel (%p280) target = $region44
      $region43: #{tpu_custom_call.1} parent=5 // pred_region
        // Predicated region
        $region45: #{tpu_custom_call.1} parent=43 // pred_check
          %p283 = pneg %p38
        $region46: #{tpu_custom_call.1} parent=43 // pred_check_branch
          %285 = sbr.rel (%p283) target = $region48
        $region47: #{tpu_custom_call.1} parent=43 // pred_region
          %s286 = sand.u32 %s28, 1
          %s287 = sand.u32 %s28, 1
          %s288 = smul.addr %s287, 288
          %s289 = scalar_lea.vmem [#allocation2], %s288
          %s290 = smul.u32 8, %s18
          %s291 = smul.addr %s290, 4
          %s292 = scalar_lea.vmem %s0, %s291
          // Predicated region
          $region49: #{tpu_custom_call.1} parent=47 // pred_check
            _
          $region50: #{tpu_custom_call.1} parent=47 // pred_check_branch
            %294 = sbr.rel (0) target = $region52
          $region51: #{tpu_custom_call.1} parent=47 // pred_region
            // Predicated region
            $region53: #{tpu_custom_call.1} parent=51 // pred_check
              _
            $region54: #{tpu_custom_call.1} parent=51 // pred_check_branch
              %296 = sbr.rel target = $region56
            $region55: #{tpu_custom_call.1} parent=51 // pred_region
              // Predicated region
              $region68: #{tpu_custom_call.1} parent=55 // pred_check
                _
              $region69: #{tpu_custom_call.1} parent=55 // pred_check_branch
                %453 = sbr.rel (0) target = $region71
              $region70: #{tpu_custom_call.1} parent=55 // pred_region
                loop: start=0, step=1, limit=1
                $region72: #{tpu_custom_call.1} parent=70 // loop_pre_header
                  _
                $region73: #{tpu_custom_call.1} parent=70 // loop_header
                  %s455 = sphi 0, %s459
                  %p456 = scmp.ge.s32.totalorder %s455, 1
                  %s460 = sphi %s292, %s292
                  %s461 = sphi %s289, %s289
                $region74: #{tpu_custom_call.1} parent=70 // loop_header_branch
                  %458 = sbr.rel (%p456) target = $region78
                $region75: #{tpu_custom_call.1} parent=70 // loop_body
                  _
                $region76: #{tpu_custom_call.1} parent=70 // loop_footer
                  %s459 = sadd.s32 1, %s455
                $region77: #{tpu_custom_call.1} parent=70 // loop_footer_branch
                  %454 = sbr.rel target = $region73
                $region78: #{tpu_custom_call.1} parent=70 // loop_exit
                  _
                loop: start=0, step=1, limit=1
                $region79: #{tpu_custom_call.1} parent=70 // loop_pre_header
                  _
                $region80: #{tpu_custom_call.1} parent=70 // loop_header
                  %s464 = sphi 0, %s468
                  %p465 = scmp.ge.s32.totalorder %s464, 1
                  %s469 = sphi %s292, %s292
                  %s470 = sphi %s289, %s289
                $region81: #{tpu_custom_call.1} parent=70 // loop_header_branch
                  %467 = sbr.rel (%p465) target = $region85
                $region82: #{tpu_custom_call.1} parent=70 // loop_body
                  %v471 = vld [vmem:[%s469] sm:$0xf]
                  %472 = vst [vmem:[%s470] sm:$0xf] %v471
                  %v473 = vld [vmem:[%s469 + $0x4] sm:$0xf]
                  %474 = vst [vmem:[%s470 + $0x4] sm:$0xf] %v473
                  %v475 = vld [vmem:[%s469 + $0x8] sm:$0xf]
                  %476 = vst [vmem:[%s470 + $0x8] sm:$0xf] %v475
                  %v477 = vld [vmem:[%s469 + $0xc] sm:$0xf]
                  %478 = vst [vmem:[%s470 + $0xc] sm:$0xf] %v477
                  %v479 = vld [vmem:[%s469 + $0x10] sm:$0xf]
                  %480 = vst [vmem:[%s470 + $0x10] sm:$0xf] %v479
                  %v481 = vld [vmem:[%s469 + $0x14] sm:$0xf]
                  %482 = vst [vmem:[%s470 + $0x14] sm:$0xf] %v481
                  %v483 = vld [vmem:[%s469 + $0x18] sm:$0xf]
                  %484 = vst [vmem:[%s470 + $0x18] sm:$0xf] %v483
                  %v485 = vld [vmem:[%s469 + $0x1c] sm:$0xf]
                  %486 = vst [vmem:[%s470 + $0x1c] sm:$0xf] %v485
                  %v487 = vld [vmem:[%s469 + $0x40] sm:$0xf]
                  %488 = vst [vmem:[%s470 + $0x20] sm:$0xf] %v487
                  %v489 = vld [vmem:[%s469 + $0x44] sm:$0xf]
                  %490 = vst [vmem:[%s470 + $0x24] sm:$0xf] %v489
                  %v491 = vld [vmem:[%s469 + $0x48] sm:$0xf]
                  %492 = vst [vmem:[%s470 + $0x28] sm:$0xf] %v491
                  %v493 = vld [vmem:[%s469 + $0x4c] sm:$0xf]
                  %494 = vst [vmem:[%s470 + $0x2c] sm:$0xf] %v493
                  %v495 = vld [vmem:[%s469 + $0x50] sm:$0xf]
                  %496 = vst [vmem:[%s470 + $0x30] sm:$0xf] %v495
                  %v497 = vld [vmem:[%s469 + $0x54] sm:$0xf]
                  %498 = vst [vmem:[%s470 + $0x34] sm:$0xf] %v497
                  %v499 = vld [vmem:[%s469 + $0x58] sm:$0xf]
                  %500 = vst [vmem:[%s470 + $0x38] sm:$0xf] %v499
                  %v501 = vld [vmem:[%s469 + $0x5c] sm:$0xf]
                  %502 = vst [vmem:[%s470 + $0x3c] sm:$0xf] %v501
                  %v503 = vld [vmem:[%s469 + $0x80] sm:$0xf]
                  %504 = vst [vmem:[%s470 + $0x40] sm:$0xf] %v503
                  %v505 = vld [vmem:[%s469 + $0x84] sm:$0xf]
                  %506 = vst [vmem:[%s470 + $0x44] sm:$0xf] %v505
                  %v507 = vld [vmem:[%s469 + $0x88] sm:$0xf]
                  %508 = vst [vmem:[%s470 + $0x48] sm:$0xf] %v507
                  %v509 = vld [vmem:[%s469 + $0x8c] sm:$0xf]
                  %510 = vst [vmem:[%s470 + $0x4c] sm:$0xf] %v509
                  %v511 = vld [vmem:[%s469 + $0x90] sm:$0xf]
                  %512 = vst [vmem:[%s470 + $0x50] sm:$0xf] %v511
                  %v513 = vld [vmem:[%s469 + $0x94] sm:$0xf]
                  %514 = vst [vmem:[%s470 + $0x54] sm:$0xf] %v513
                  %v515 = vld [vmem:[%s469 + $0x98] sm:$0xf]
                  %516 = vst [vmem:[%s470 + $0x58] sm:$0xf] %v515
                  %v517 = vld [vmem:[%s469 + $0x9c] sm:$0xf]
                  %518 = vst [vmem:[%s470 + $0x5c] sm:$0xf] %v517
                  %v519 = vld [vmem:[%s469 + $0xc0] sm:$0xf]
                  %520 = vst [vmem:[%s470 + $0x60] sm:$0xf] %v519
                  %v521 = vld [vmem:[%s469 + $0xc4] sm:$0xf]
                  %522 = vst [vmem:[%s470 + $0x64] sm:$0xf] %v521
                  %v523 = vld [vmem:[%s469 + $0xc8] sm:$0xf]
                  %524 = vst [vmem:[%s470 + $0x68] sm:$0xf] %v523
                  %v525 = vld [vmem:[%s469 + $0xcc] sm:$0xf]
                  %526 = vst [vmem:[%s470 + $0x6c] sm:$0xf] %v525
                  %v527 = vld [vmem:[%s469 + $0xd0] sm:$0xf]
                  %528 = vst [vmem:[%s470 + $0x70] sm:$0xf] %v527
                  %v529 = vld [vmem:[%s469 + $0xd4] sm:$0xf]
                  %530 = vst [vmem:[%s470 + $0x74] sm:$0xf] %v529
                  %v531 = vld [vmem:[%s469 + $0xd8] sm:$0xf]
                  %532 = vst [vmem:[%s470 + $0x78] sm:$0xf] %v531
                  %v533 = vld [vmem:[%s469 + $0xdc] sm:$0xf]
                  %534 = vst [vmem:[%s470 + $0x7c] sm:$0xf] %v533
                  %v535 = vld [vmem:[%s469 + $0x100] sm:$0xf]
                  %536 = vst [vmem:[%s470 + $0x80] sm:$0xf] %v535
                  %v537 = vld [vmem:[%s469 + $0x104] sm:$0xf]
                  %538 = vst [vmem:[%s470 + $0x84] sm:$0xf] %v537
                  %v539 = vld [vmem:[%s469 + $0x108] sm:$0xf]
                  %540 = vst [vmem:[%s470 + $0x88] sm:$0xf] %v539
                  %v541 = vld [vmem:[%s469 + $0x10c] sm:$0xf]
                  %542 = vst [vmem:[%s470 + $0x8c] sm:$0xf] %v541
                  %v543 = vld [vmem:[%s469 + $0x110] sm:$0xf]
                  %544 = vst [vmem:[%s470 + $0x90] sm:$0xf] %v543
                  %v545 = vld [vmem:[%s469 + $0x114] sm:$0xf]
                  %546 = vst [vmem:[%s470 + $0x94] sm:$0xf] %v545
                  %v547 = vld [vmem:[%s469 + $0x118] sm:$0xf]
                  %548 = vst [vmem:[%s470 + $0x98] sm:$0xf] %v547
                  %v549 = vld [vmem:[%s469 + $0x11c] sm:$0xf]
                  %550 = vst [vmem:[%s470 + $0x9c] sm:$0xf] %v549
                  %v551 = vld [vmem:[%s469 + $0x140] sm:$0xf]
                  %552 = vst [vmem:[%s470 + $0xa0] sm:$0xf] %v551
                  %v553 = vld [vmem:[%s469 + $0x144] sm:$0xf]
                  %554 = vst [vmem:[%s470 + $0xa4] sm:$0xf] %v553
                  %v555 = vld [vmem:[%s469 + $0x148] sm:$0xf]
                  %556 = vst [vmem:[%s470 + $0xa8] sm:$0xf] %v555
                  %v557 = vld [vmem:[%s469 + $0x14c] sm:$0xf]
                  %558 = vst [vmem:[%s470 + $0xac] sm:$0xf] %v557
                  %v559 = vld [vmem:[%s469 + $0x150] sm:$0xf]
                  %560 = vst [vmem:[%s470 + $0xb0] sm:$0xf] %v559
                  %v561 = vld [vmem:[%s469 + $0x154] sm:$0xf]
                  %562 = vst [vmem:[%s470 + $0xb4] sm:$0xf] %v561
                  %v563 = vld [vmem:[%s469 + $0x158] sm:$0xf]
                  %564 = vst [vmem:[%s470 + $0xb8] sm:$0xf] %v563
                  %v565 = vld [vmem:[%s469 + $0x15c] sm:$0xf]
                  %566 = vst [vmem:[%s470 + $0xbc] sm:$0xf] %v565
                  %v567 = vld [vmem:[%s469 + $0x180] sm:$0xf]
                  %568 = vst [vmem:[%s470 + $0xc0] sm:$0xf] %v567
                  %v569 = vld [vmem:[%s469 + $0x184] sm:$0xf]
                  %570 = vst [vmem:[%s470 + $0xc4] sm:$0xf] %v569
                  %v571 = vld [vmem:[%s469 + $0x188] sm:$0xf]
                  %572 = vst [vmem:[%s470 + $0xc8] sm:$0xf] %v571
                  %v573 = vld [vmem:[%s469 + $0x18c] sm:$0xf]
                  %574 = vst [vmem:[%s470 + $0xcc] sm:$0xf] %v573
                  %v575 = vld [vmem:[%s469 + $0x190] sm:$0xf]
                  %576 = vst [vmem:[%s470 + $0xd0] sm:$0xf] %v575
                  %v577 = vld [vmem:[%s469 + $0x194] sm:$0xf]
                  %578 = vst [vmem:[%s470 + $0xd4] sm:$0xf] %v577
                  %v579 = vld [vmem:[%s469 + $0x198] sm:$0xf]
                  %580 = vst [vmem:[%s470 + $0xd8] sm:$0xf] %v579
                  %v581 = vld [vmem:[%s469 + $0x19c] sm:$0xf]
                  %582 = vst [vmem:[%s470 + $0xdc] sm:$0xf] %v581
                  %v583 = vld [vmem:[%s469 + $0x1c0] sm:$0xf]
                  %584 = vst [vmem:[%s470 + $0xe0] sm:$0xf] %v583
                  %v585 = vld [vmem:[%s469 + $0x1c4] sm:$0xf]
                  %586 = vst [vmem:[%s470 + $0xe4] sm:$0xf] %v585
                  %v587 = vld [vmem:[%s469 + $0x1c8] sm:$0xf]
                  %588 = vst [vmem:[%s470 + $0xe8] sm:$0xf] %v587
                  %v589 = vld [vmem:[%s469 + $0x1cc] sm:$0xf]
                  %590 = vst [vmem:[%s470 + $0xec] sm:$0xf] %v589
                  %v591 = vld [vmem:[%s469 + $0x1d0] sm:$0xf]
                  %592 = vst [vmem:[%s470 + $0xf0] sm:$0xf] %v591
                  %v593 = vld [vmem:[%s469 + $0x1d4] sm:$0xf]
                  %594 = vst [vmem:[%s470 + $0xf4] sm:$0xf] %v593
                  %v595 = vld [vmem:[%s469 + $0x1d8] sm:$0xf]
                  %596 = vst [vmem:[%s470 + $0xf8] sm:$0xf] %v595
                  %v597 = vld [vmem:[%s469 + $0x1dc] sm:$0xf]
                  %598 = vst [vmem:[%s470 + $0xfc] sm:$0xf] %v597
                  %v599 = vld [vmem:[%s469 + $0x200] sm:$0xf]
                  %600 = vst [vmem:[%s470 + $0x100] sm:$0xf] %v599
                  %v601 = vld [vmem:[%s469 + $0x204] sm:$0xf]
                  %602 = vst [vmem:[%s470 + $0x104] sm:$0xf] %v601
                  %v603 = vld [vmem:[%s469 + $0x208] sm:$0xf]
                  %604 = vst [vmem:[%s470 + $0x108] sm:$0xf] %v603
                  %v605 = vld [vmem:[%s469 + $0x20c] sm:$0xf]
                  %606 = vst [vmem:[%s470 + $0x10c] sm:$0xf] %v605
                  %v607 = vld [vmem:[%s469 + $0x210] sm:$0xf]
                  %608 = vst [vmem:[%s470 + $0x110] sm:$0xf] %v607
                  %v609 = vld [vmem:[%s469 + $0x214] sm:$0xf]
                  %610 = vst [vmem:[%s470 + $0x114] sm:$0xf] %v609
                  %v611 = vld [vmem:[%s469 + $0x218] sm:$0xf]
                  %612 = vst [vmem:[%s470 + $0x118] sm:$0xf] %v611
                  %v613 = vld [vmem:[%s469 + $0x21c] sm:$0xf]
                  %614 = vst [vmem:[%s470 + $0x11c] sm:$0xf] %v613
                $region83: #{tpu_custom_call.1} parent=70 // loop_footer
                  %s468 = sadd.s32 1, %s464
                $region84: #{tpu_custom_call.1} parent=70 // loop_footer_branch
                  %463 = sbr.rel target = $region80
                $region85: #{tpu_custom_call.1} parent=70 // loop_exit
                  _
              $region71: #{tpu_custom_call.1} parent=55 // pred_fallthru
                _
            $region56: #{tpu_custom_call.1} parent=51 // pred_fallthru
              _
            // Predicated region
            $region57: #{tpu_custom_call.1} parent=51 // pred_check
              _
            $region58: #{tpu_custom_call.1} parent=51 // pred_check_branch
              %298 = sbr.rel (0) target = $region60
            $region59: #{tpu_custom_call.1} parent=51 // pred_region
              loop: start=0, step=1, limit=1
              $region61: #{tpu_custom_call.1} parent=59 // loop_pre_header
                _
              $region62: #{tpu_custom_call.1} parent=59 // loop_header
                %s301 = sphi 0, %s305
                %p302 = scmp.ge.s32.totalorder %s301, 1
                %s306 = sphi %s292, %s292
                %s307 = sphi %s289, %s289
              $region63: #{tpu_custom_call.1} parent=59 // loop_header_branch
                %304 = sbr.rel (%p302) target = $region67
              $region64: #{tpu_custom_call.1} parent=59 // loop_body
                %v308 = vld [vmem:[%s306] sm:$0xf]
                %309 = vst [vmem:[%s307] sm:$0xf] %v308
                %v310 = vld [vmem:[%s306 + $0x4] sm:$0xf]
                %311 = vst [vmem:[%s307 + $0x4] sm:$0xf] %v310
                %v312 = vld [vmem:[%s306 + $0x8] sm:$0xf]
                %313 = vst [vmem:[%s307 + $0x8] sm:$0xf] %v312
                %v314 = vld [vmem:[%s306 + $0xc] sm:$0xf]
                %315 = vst [vmem:[%s307 + $0xc] sm:$0xf] %v314
                %v316 = vld [vmem:[%s306 + $0x10] sm:$0xf]
                %317 = vst [vmem:[%s307 + $0x10] sm:$0xf] %v316
                %v318 = vld [vmem:[%s306 + $0x14] sm:$0xf]
                %319 = vst [vmem:[%s307 + $0x14] sm:$0xf] %v318
                %v320 = vld [vmem:[%s306 + $0x18] sm:$0xf]
                %321 = vst [vmem:[%s307 + $0x18] sm:$0xf] %v320
                %v322 = vld [vmem:[%s306 + $0x1c] sm:$0xf]
                %323 = vst [vmem:[%s307 + $0x1c] sm:$0xf] %v322
                %v324 = vld [vmem:[%s306 + $0x40] sm:$0xf]
                %325 = vst [vmem:[%s307 + $0x20] sm:$0xf] %v324
                %v326 = vld [vmem:[%s306 + $0x44] sm:$0xf]
                %327 = vst [vmem:[%s307 + $0x24] sm:$0xf] %v326
                %v328 = vld [vmem:[%s306 + $0x48] sm:$0xf]
                %329 = vst [vmem:[%s307 + $0x28] sm:$0xf] %v328
                %v330 = vld [vmem:[%s306 + $0x4c] sm:$0xf]
                %331 = vst [vmem:[%s307 + $0x2c] sm:$0xf] %v330
                %v332 = vld [vmem:[%s306 + $0x50] sm:$0xf]
                %333 = vst [vmem:[%s307 + $0x30] sm:$0xf] %v332
                %v334 = vld [vmem:[%s306 + $0x54] sm:$0xf]
                %335 = vst [vmem:[%s307 + $0x34] sm:$0xf] %v334
                %v336 = vld [vmem:[%s306 + $0x58] sm:$0xf]
                %337 = vst [vmem:[%s307 + $0x38] sm:$0xf] %v336
                %v338 = vld [vmem:[%s306 + $0x5c] sm:$0xf]
                %339 = vst [vmem:[%s307 + $0x3c] sm:$0xf] %v338
                %v340 = vld [vmem:[%s306 + $0x80] sm:$0xf]
                %341 = vst [vmem:[%s307 + $0x40] sm:$0xf] %v340
                %v342 = vld [vmem:[%s306 + $0x84] sm:$0xf]
                %343 = vst [vmem:[%s307 + $0x44] sm:$0xf] %v342
                %v344 = vld [vmem:[%s306 + $0x88] sm:$0xf]
                %345 = vst [vmem:[%s307 + $0x48] sm:$0xf] %v344
                %v346 = vld [vmem:[%s306 + $0x8c] sm:$0xf]
                %347 = vst [vmem:[%s307 + $0x4c] sm:$0xf] %v346
                %v348 = vld [vmem:[%s306 + $0x90] sm:$0xf]
                %349 = vst [vmem:[%s307 + $0x50] sm:$0xf] %v348
                %v350 = vld [vmem:[%s306 + $0x94] sm:$0xf]
                %351 = vst [vmem:[%s307 + $0x54] sm:$0xf] %v350
                %v352 = vld [vmem:[%s306 + $0x98] sm:$0xf]
                %353 = vst [vmem:[%s307 + $0x58] sm:$0xf] %v352
                %v354 = vld [vmem:[%s306 + $0x9c] sm:$0xf]
                %355 = vst [vmem:[%s307 + $0x5c] sm:$0xf] %v354
                %v356 = vld [vmem:[%s306 + $0xc0] sm:$0xf]
                %357 = vst [vmem:[%s307 + $0x60] sm:$0xf] %v356
                %v358 = vld [vmem:[%s306 + $0xc4] sm:$0xf]
                %359 = vst [vmem:[%s307 + $0x64] sm:$0xf] %v358
                %v360 = vld [vmem:[%s306 + $0xc8] sm:$0xf]
                %361 = vst [vmem:[%s307 + $0x68] sm:$0xf] %v360
                %v362 = vld [vmem:[%s306 + $0xcc] sm:$0xf]
                %363 = vst [vmem:[%s307 + $0x6c] sm:$0xf] %v362
                %v364 = vld [vmem:[%s306 + $0xd0] sm:$0xf]
                %365 = vst [vmem:[%s307 + $0x70] sm:$0xf] %v364
                %v366 = vld [vmem:[%s306 + $0xd4] sm:$0xf]
                %367 = vst [vmem:[%s307 + $0x74] sm:$0xf] %v366
                %v368 = vld [vmem:[%s306 + $0xd8] sm:$0xf]
                %369 = vst [vmem:[%s307 + $0x78] sm:$0xf] %v368
                %v370 = vld [vmem:[%s306 + $0xdc] sm:$0xf]
                %371 = vst [vmem:[%s307 + $0x7c] sm:$0xf] %v370
                %v372 = vld [vmem:[%s306 + $0x100] sm:$0xf]
                %373 = vst [vmem:[%s307 + $0x80] sm:$0xf] %v372
                %v374 = vld [vmem:[%s306 + $0x104] sm:$0xf]
                %375 = vst [vmem:[%s307 + $0x84] sm:$0xf] %v374
                %v376 = vld [vmem:[%s306 + $0x108] sm:$0xf]
                %377 = vst [vmem:[%s307 + $0x88] sm:$0xf] %v376
                %v378 = vld [vmem:[%s306 + $0x10c] sm:$0xf]
                %379 = vst [vmem:[%s307 + $0x8c] sm:$0xf] %v378
                %v380 = vld [vmem:[%s306 + $0x110] sm:$0xf]
                %381 = vst [vmem:[%s307 + $0x90] sm:$0xf] %v380
                %v382 = vld [vmem:[%s306 + $0x114] sm:$0xf]
                %383 = vst [vmem:[%s307 + $0x94] sm:$0xf] %v382
                %v384 = vld [vmem:[%s306 + $0x118] sm:$0xf]
                %385 = vst [vmem:[%s307 + $0x98] sm:$0xf] %v384
                %v386 = vld [vmem:[%s306 + $0x11c] sm:$0xf]
                %387 = vst [vmem:[%s307 + $0x9c] sm:$0xf] %v386
                %v388 = vld [vmem:[%s306 + $0x140] sm:$0xf]
                %389 = vst [vmem:[%s307 + $0xa0] sm:$0xf] %v388
                %v390 = vld [vmem:[%s306 + $0x144] sm:$0xf]
                %391 = vst [vmem:[%s307 + $0xa4] sm:$0xf] %v390
                %v392 = vld [vmem:[%s306 + $0x148] sm:$0xf]
                %393 = vst [vmem:[%s307 + $0xa8] sm:$0xf] %v392
                %v394 = vld [vmem:[%s306 + $0x14c] sm:$0xf]
                %395 = vst [vmem:[%s307 + $0xac] sm:$0xf] %v394
                %v396 = vld [vmem:[%s306 + $0x150] sm:$0xf]
                %397 = vst [vmem:[%s307 + $0xb0] sm:$0xf] %v396
                %v398 = vld [vmem:[%s306 + $0x154] sm:$0xf]
                %399 = vst [vmem:[%s307 + $0xb4] sm:$0xf] %v398
                %v400 = vld [vmem:[%s306 + $0x158] sm:$0xf]
                %401 = vst [vmem:[%s307 + $0xb8] sm:$0xf] %v400
                %v402 = vld [vmem:[%s306 + $0x15c] sm:$0xf]
                %403 = vst [vmem:[%s307 + $0xbc] sm:$0xf] %v402
                %v404 = vld [vmem:[%s306 + $0x180] sm:$0xf]
                %405 = vst [vmem:[%s307 + $0xc0] sm:$0xf] %v404
                %v406 = vld [vmem:[%s306 + $0x184] sm:$0xf]
                %407 = vst [vmem:[%s307 + $0xc4] sm:$0xf] %v406
                %v408 = vld [vmem:[%s306 + $0x188] sm:$0xf]
                %409 = vst [vmem:[%s307 + $0xc8] sm:$0xf] %v408
                %v410 = vld [vmem:[%s306 + $0x18c] sm:$0xf]
                %411 = vst [vmem:[%s307 + $0xcc] sm:$0xf] %v410
                %v412 = vld [vmem:[%s306 + $0x190] sm:$0xf]
                %413 = vst [vmem:[%s307 + $0xd0] sm:$0xf] %v412
                %v414 = vld [vmem:[%s306 + $0x194] sm:$0xf]
                %415 = vst [vmem:[%s307 + $0xd4] sm:$0xf] %v414
                %v416 = vld [vmem:[%s306 + $0x198] sm:$0xf]
                %417 = vst [vmem:[%s307 + $0xd8] sm:$0xf] %v416
                %v418 = vld [vmem:[%s306 + $0x19c] sm:$0xf]
                %419 = vst [vmem:[%s307 + $0xdc] sm:$0xf] %v418
                %v420 = vld [vmem:[%s306 + $0x1c0] sm:$0xf]
                %421 = vst [vmem:[%s307 + $0xe0] sm:$0xf] %v420
                %v422 = vld [vmem:[%s306 + $0x1c4] sm:$0xf]
                %423 = vst [vmem:[%s307 + $0xe4] sm:$0xf] %v422
                %v424 = vld [vmem:[%s306 + $0x1c8] sm:$0xf]
                %425 = vst [vmem:[%s307 + $0xe8] sm:$0xf] %v424
                %v426 = vld [vmem:[%s306 + $0x1cc] sm:$0xf]
                %427 = vst [vmem:[%s307 + $0xec] sm:$0xf] %v426
                %v428 = vld [vmem:[%s306 + $0x1d0] sm:$0xf]
                %429 = vst [vmem:[%s307 + $0xf0] sm:$0xf] %v428
                %v430 = vld [vmem:[%s306 + $0x1d4] sm:$0xf]
                %431 = vst [vmem:[%s307 + $0xf4] sm:$0xf] %v430
                %v432 = vld [vmem:[%s306 + $0x1d8] sm:$0xf]
                %433 = vst [vmem:[%s307 + $0xf8] sm:$0xf] %v432
                %v434 = vld [vmem:[%s306 + $0x1dc] sm:$0xf]
                %435 = vst [vmem:[%s307 + $0xfc] sm:$0xf] %v434
                %v436 = vld [vmem:[%s306 + $0x200] sm:$0xf]
                %437 = vst [vmem:[%s307 + $0x100] sm:$0xf] %v436
                %v438 = vld [vmem:[%s306 + $0x204] sm:$0xf]
                %439 = vst [vmem:[%s307 + $0x104] sm:$0xf] %v438
                %v440 = vld [vmem:[%s306 + $0x208] sm:$0xf]
                %441 = vst [vmem:[%s307 + $0x108] sm:$0xf] %v440
                %v442 = vld [vmem:[%s306 + $0x20c] sm:$0xf]
                %443 = vst [vmem:[%s307 + $0x10c] sm:$0xf] %v442
                %v444 = vld [vmem:[%s306 + $0x210] sm:$0xf]
                %445 = vst [vmem:[%s307 + $0x110] sm:$0xf] %v444
                %v446 = vld [vmem:[%s306 + $0x214] sm:$0xf]
                %447 = vst [vmem:[%s307 + $0x114] sm:$0xf] %v446
                %v448 = vld [vmem:[%s306 + $0x218] sm:$0xf]
                %449 = vst [vmem:[%s307 + $0x118] sm:$0xf] %v448
                %v450 = vld [vmem:[%s306 + $0x21c] sm:$0xf]
                %451 = vst [vmem:[%s307 + $0x11c] sm:$0xf] %v450
              $region65: #{tpu_custom_call.1} parent=59 // loop_footer
                %s305 = sadd.s32 1, %s301
              $region66: #{tpu_custom_call.1} parent=59 // loop_footer_branch
                %300 = sbr.rel target = $region62
              $region67: #{tpu_custom_call.1} parent=59 // loop_exit
                _
            $region60: #{tpu_custom_call.1} parent=51 // pred_fallthru
              _
          $region52: #{tpu_custom_call.1} parent=47 // pred_fallthru
            _
          %615 = vnop
        $region48: #{tpu_custom_call.1} parent=43 // pred_fallthru
          _
        // Predicated region
        $region86: #{tpu_custom_call.1} parent=43 // pred_check
          %p616 = pneg %p64
        $region87: #{tpu_custom_call.1} parent=43 // pred_check_branch
          %618 = sbr.rel (%p616) target = $region89
        $region88: #{tpu_custom_call.1} parent=43 // pred_region
          %s619 = smul.u32 8, %s18
          %p620 = scmp.lt.s32.totalorder %s619, 15
          %s621 = scalar_select %p620, %s619, 15
          %s622 = smul.addr %s621, 4
          %s623 = scalar_lea.vmem %s1, %s622
          %s624 = smul.u32 8, %s18
        $region89: #{tpu_custom_call.1} parent=43 // pred_fallthru
          _
      $region44: #{tpu_custom_call.1} parent=5 // pred_fallthru
        _
      %p625 = scmp.le.s32.totalorder 1, %s18
      %p626 = scmp.lt.s32.totalorder %s18, 3
      %p627 = pnand %p625, %p626
      %p628 = pneg %p627
      // Predicated region
      $region90: #{tpu_custom_call.1} parent=5 // pred_check
        _
      $region91: #{tpu_custom_call.1} parent=5 // pred_check_branch
        %630 = sbr.rel (%p627) target = $region93
      $region92: #{tpu_custom_call.1} parent=5 // pred_region
        %s631 = ssub.s32 %s18, 1
        %s632 = sand.u32 %s31, 1
        %s633 = sand.u32 %s31, 1
        %s634 = smul.addr %s633, 288
        %s635 = scalar_lea.vmem [#allocation2], %s634
        // Predicated region
        $region94: #{tpu_custom_call.1} parent=92 // pred_check
          %p636 = pneg %p44
        $region95: #{tpu_custom_call.1} parent=92 // pred_check_branch
          %638 = sbr.rel (%p636) target = $region97
        $region96: #{tpu_custom_call.1} parent=92 // pred_region
          _
        $region97: #{tpu_custom_call.1} parent=92 // pred_fallthru
          _
        %s639 = sand.u32 %s31, 1
        %s640 = sand.u32 %s31, 1
        %s641 = smul.addr %s640, 288
        %s642 = scalar_lea.vmem [#allocation2], %s641
        %p643 = pneg %p44
        %p644 = pneg %p41
        %s645 = smul.u32 8, %s23
        %p646 = scmp.lt.s32.totalorder %s645, 15
        %s647 = scalar_select %p646, %s645, 15
        %s648 = smul.addr %s647, 4
        %s649 = scalar_lea.vmem %s1, %s648
        %p650 = pneg %p70
        %p651 = pneg %p67
        %p652 = pneg %p91
        %p653 = pneg %p88
        %p654 = pneg %p112
        %p655 = pneg %p109
        %p656 = pneg %p133
        %p657 = pneg %p130
        %p658 = pneg %p154
        %p659 = pneg %p151
        %p660 = pneg %p175
        %p661 = pneg %p172
        %p662 = pneg %p196
        %p663 = pneg %p193
        %p664 = pneg %p217
        %p665 = pneg %p214
        %p666 = pneg %p243
        %p667 = pneg %p240
        %s668 = sand.u32 %s230, 1
        %s669 = scalar_lea.sflag [#allocation4], %s668
        %s670 = sand.u32 %s230, 1
        %s671 = smul.addr %s670, 64
        %s672 = scalar_lea.vmem [#allocation3], %s671
        %s673 = smul.u32 8, %s23
        %s674 = smul.u32 8, %s23
        %p675 = scmp.lt.s32.totalorder %s674, 15
        %s676 = scalar_select %p675, %s674, 15
        %s677 = smul.addr %s676, 4
        %s678 = scalar_lea.vmem %s1, %s677
        %s679 = smul.u32 8, %s23
        %s680 = smul.u32 8, %s23
        %v682 = vld [vmem:[%s635] sm:$0xf]
        %v683 = vld [vmem:[%s635 + $0x4] sm:$0xf]
        %v684 = vld [vmem:[%s635 + $0x8] sm:$0xf]
        %v685 = vld [vmem:[%s635 + $0xc] sm:$0xf]
        %v686 = vld [vmem:[%s635 + $0x10] sm:$0xf]
        %v687 = vld [vmem:[%s635 + $0x14] sm:$0xf]
        %v688 = vld [vmem:[%s635 + $0x18] sm:$0xf]
        %v689 = vld [vmem:[%s635 + $0x1c] sm:$0xf]
        %v690 = vld [vmem:[%s2] sm:$0xf]
        %v691 = vld [vmem:[%s2 + $0x4] sm:$0xf]
        %v692 = vld [vmem:[%s2 + $0x8] sm:$0xf]
        %v701 = vunpack.c.l.b16 %v682
        %v702 = vunpack.c.l.b16 %v683
        %v703 = vunpack.c.l.b16 %v684
        %v704 = vunpack.c.l.b16 %v685
        %v705 = vunpack.c.l.b16 %v686
        %v706 = vunpack.c.l.b16 %v687
        %v707 = vunpack.c.l.b16 %v688
        %v708 = vunpack.c.l.b16 %v689
        %v709 = vpack.c.b16 %v702, %v701
        %v710 = vpack.c.b16 %v704, %v703
        %v711 = vpack.c.b16 %v706, %v705
        %v712 = vpack.c.b16 %v708, %v707
        %v716 = vunpack.c.l.b16 %v690
        %v717 = vunpack.c.l.b16 %v691
        %v718 = vunpack.c.l.b16 %v692
        %v719 = vpack.c.b16 %v717, %v716
        %v720 = vpack.c.b16 %v718, %v718
        %vm722 = vcmask 195584
        %v724 = vsel %vm722, %v709, 0
        %v727 = vsel %vm722, %v710, 0
        %v730 = vsel %vm722, %v711, 0
        %v733 = vsel %vm722, %v712, 0
        %vm735 = vcmask 1043456
        %v737 = vsel %vm735, %v720, 0
        %739 = vmatprep.subr.bf16.mxu0 0
        %740 = vmatpush1.bf16.msra.mxu0 %v719
        %741 = vmatprep.subr.bf16.mxu0 0
        %742 = vmatpush1.bf16.msra.mxu0 %v737
        %743 = vmatprep.subr.bf16.mxu0 0
        %744 = vmatpush1.bf16.msra.mxu0 0
        %745 = vmatprep.subr.bf16.mxu0 0
        %746 = vmatpush1.bf16.msra.mxu0 0
        %747 = vmatprep.subr.bf16.mxu0 0
        %748 = vmatpush1.bf16.msra.mxu0 0
        %749 = vmatprep.subr.bf16.mxu0 0
        %750 = vmatpush1.bf16.msra.mxu0 0
        %751 = vmatprep.subr.bf16.mxu0 0
        %752 = vmatpush1.bf16.msra.mxu0 0
        %753 = vmatprep.subr.bf16.mxu0 0
        %754 = vmatpush1.bf16.msra.mxu0 0
        %755 = vmatprep.subr.bf16.mxu0 0
        %756 = vmatpush1.bf16.msra.mxu0 0
        %757 = vmatprep.subr.bf16.mxu0 0
        %758 = vmatpush1.bf16.msra.mxu0 0
        %759 = vmatprep.subr.bf16.mxu0 0
        %760 = vmatpush1.bf16.msra.mxu0 0
        %761 = vmatprep.subr.bf16.mxu0 0
        %762 = vmatpush1.bf16.msra.mxu0 0
        %763 = vmatprep.subr.bf16.mxu0 0
        %764 = vmatpush1.bf16.msra.mxu0 0
        %765 = vmatprep.subr.bf16.mxu0 0
        %766 = vmatpush1.bf16.msra.mxu0 0
        %767 = vmatprep.subr.bf16.mxu0 0
        %768 = vmatpush1.bf16.msra.mxu0 0
        %769 = vmatprep.subr.bf16.mxu0 0
        %770 = vmatpush1.bf16.msra.mxu0 0
        %771 = vmatprep.mubr.bf16.mxu0 0
        %772 = vmatmul.mubr.bf16.gmra.mrb[0].mxu0 %v724
        %v773 = vpop.f32.mrb[0].mxu0
        %v774 = vadd.f32 0.0, %v773
        %v775 = vpop.f32.mrb[0].mxu0
        %v776 = vpop.f32.mrb[0].mxu0
        %v777 = vadd.f32 0.0, %v776
        %v778 = vpop.f32.mrb[0].mxu0
        %779 = vmatprep.mubr.bf16.mxu0 0
        %780 = vmatmul.mubr.bf16.gmra.mrb[0].mxu0 %v727
        %v781 = vpop.f32.mrb[0].mxu0
        %v782 = vadd.f32 0.0, %v781
        %v783 = vpop.f32.mrb[0].mxu0
        %v784 = vpop.f32.mrb[0].mxu0
        %v785 = vadd.f32 0.0, %v784
        %v786 = vpop.f32.mrb[0].mxu0
        %787 = vmatprep.mubr.bf16.mxu0 0
        %788 = vmatmul.mubr.bf16.gmra.mrb[0].mxu0 %v730
        %v789 = vpop.f32.mrb[0].mxu0
        %v790 = vadd.f32 0.0, %v789
        %v791 = vpop.f32.mrb[0].mxu0
        %v792 = vpop.f32.mrb[0].mxu0
        %v793 = vadd.f32 0.0, %v792
        %v794 = vpop.f32.mrb[0].mxu0
        %795 = vmatprep.mubr.bf16.mxu0 0
        %796 = vmatmul.mubr.bf16.gmra.mrb[0].mxu0 %v733
        %v797 = vpop.f32.mrb[0].mxu0
        %v798 = vadd.f32 0.0, %v797
        %v799 = vpop.f32.mrb[0].mxu0
        %v800 = vpop.f32.mrb[0].mxu0
        %v801 = vadd.f32 0.0, %v800
        %v802 = vpop.f32.mrb[0].mxu0
        %803 = vdwg.mxu0
        %v804 = vmax.f32 %v774, 0.0
        %v805 = vmax.f32 %v777, 0.0
        %v806 = vmax.f32 %v782, 0.0
        %v807 = vmax.f32 %v785, 0.0
        %v808 = vmax.f32 %v790, 0.0
        %v809 = vmax.f32 %v793, 0.0
        %v810 = vmax.f32 %v798, 0.0
        %v811 = vmax.f32 %v801, 0.0
        %v812 = vpack.c.bf16 %v805, %v804
        %v813 = vpack.c.bf16 %v807, %v806
        %v814 = vpack.c.bf16 %v809, %v808
        %v815 = vpack.c.bf16 %v811, %v810
        %s816 = scalar_lea.vmem %s635, 32 [#allocation2]
        %v817 = vld [vmem:[%s816] sm:$0xf]
        %v818 = vld [vmem:[%s816 + $0x4] sm:$0xf]
        %v819 = vld [vmem:[%s816 + $0x8] sm:$0xf]
        %v820 = vld [vmem:[%s816 + $0xc] sm:$0xf]
        %v821 = vld [vmem:[%s816 + $0x10] sm:$0xf]
        %v822 = vld [vmem:[%s816 + $0x14] sm:$0xf]
        %v823 = vld [vmem:[%s816 + $0x18] sm:$0xf]
        %v824 = vld [vmem:[%s816 + $0x1c] sm:$0xf]
        %v833 = vunpack.c.l.b16 %v817
        %v834 = vunpack.c.l.b16 %v818
        %v835 = vunpack.c.l.b16 %v819
        %v836 = vunpack.c.l.b16 %v820
        %v837 = vunpack.c.l.b16 %v821
        %v838 = vunpack.c.l.b16 %v822
        %v839 = vunpack.c.l.b16 %v823
        %v840 = vunpack.c.l.b16 %v824
        %v841 = vpack.c.b16 %v834, %v833
        %v842 = vpack.c.b16 %v836, %v835
        %v843 = vpack.c.b16 %v838, %v837
        %v844 = vpack.c.b16 %v840, %v839
        %v846 = vsel %vm722, %v841, 0
        %v849 = vsel %vm722, %v842, 0
        %v852 = vsel %vm722, %v843, 0
        %v855 = vsel %vm722, %v844, 0
        %857 = vmatprep.subr.bf16.mxu0 0
        %858 = vmatpush1.bf16.msra.mxu0 %v719
        %859 = vmatprep.subr.bf16.mxu0 0
        %860 = vmatpush1.bf16.msra.mxu0 %v737
        %861 = vmatprep.subr.bf16.mxu0 0
        %862 = vmatpush1.bf16.msra.mxu0 0
        %863 = vmatprep.subr.bf16.mxu0 0
        %864 = vmatpush1.bf16.msra.mxu0 0
        %865 = vmatprep.subr.bf16.mxu0 0
        %866 = vmatpush1.bf16.msra.mxu0 0
        %867 = vmatprep.subr.bf16.mxu0 0
        %868 = vmatpush1.bf16.msra.mxu0 0
        %869 = vmatprep.subr.bf16.mxu0 0
        %870 = vmatpush1.bf16.msra.mxu0 0
        %871 = vmatprep.subr.bf16.mxu0 0
        %872 = vmatpush1.bf16.msra.mxu0 0
        %873 = vmatprep.subr.bf16.mxu0 0
        %874 = vmatpush1.bf16.msra.mxu0 0
        %875 = vmatprep.subr.bf16.mxu0 0
        %876 = vmatpush1.bf16.msra.mxu0 0
        %877 = vmatprep.subr.bf16.mxu0 0
        %878 = vmatpush1.bf16.msra.mxu0 0
        %879 = vmatprep.subr.bf16.mxu0 0
        %880 = vmatpush1.bf16.msra.mxu0 0
        %881 = vmatprep.subr.bf16.mxu0 0
        %882 = vmatpush1.bf16.msra.mxu0 0
        %883 = vmatprep.subr.bf16.mxu0 0
        %884 = vmatpush1.bf16.msra.mxu0 0
        %885 = vmatprep.subr.bf16.mxu0 0
        %886 = vmatpush1.bf16.msra.mxu0 0
        %887 = vmatprep.subr.bf16.mxu0 0
        %888 = vmatpush1.bf16.msra.mxu0 0
        %889 = vmatprep.mubr.bf16.mxu0 0
        %890 = vmatmul.mubr.bf16.gmra.mrb[0].mxu0 %v846
        %v891 = vpop.f32.mrb[0].mxu0
        %v892 = vadd.f32 0.0, %v891
        %v893 = vpop.f32.mrb[0].mxu0
        %v894 = vpop.f32.mrb[0].mxu0
        %v895 = vadd.f32 0.0, %v894
        %v896 = vpop.f32.mrb[0].mxu0
        %897 = vmatprep.mubr.bf16.mxu0 0
        %898 = vmatmul.mubr.bf16.gmra.mrb[0].mxu0 %v849
        %v899 = vpop.f32.mrb[0].mxu0
        %v900 = vadd.f32 0.0, %v899
        %v901 = vpop.f32.mrb[0].mxu0
        %v902 = vpop.f32.mrb[0].mxu0
        %v903 = vadd.f32 0.0, %v902
        %v904 = vpop.f32.mrb[0].mxu0
        %905 = vmatprep.mubr.bf16.mxu0 0
        %906 = vmatmul.mubr.bf16.gmra.mrb[0].mxu0 %v852
        %v907 = vpop.f32.mrb[0].mxu0
        %v908 = vadd.f32 0.0, %v907
        %v909 = vpop.f32.mrb[0].mxu0
        %v910 = vpop.f32.mrb[0].mxu0
        %v911 = vadd.f32 0.0, %v910
        %v912 = vpop.f32.mrb[0].mxu0
        %913 = vmatprep.mubr.bf16.mxu0 0
        %914 = vmatmul.mubr.bf16.gmra.mrb[0].mxu0 %v855
        %v915 = vpop.f32.mrb[0].mxu0
        %v916 = vadd.f32 0.0, %v915
        %v917 = vpop.f32.mrb[0].mxu0
        %v918 = vpop.f32.mrb[0].mxu0
        %v919 = vadd.f32 0.0, %v918
        %v920 = vpop.f32.mrb[0].mxu0
        %921 = vdwg.mxu0
        %v922 = vmax.f32 %v892, 0.0
        %v923 = vmax.f32 %v895, 0.0
        %v924 = vmax.f32 %v900, 0.0
        %v925 = vmax.f32 %v903, 0.0
        %v926 = vmax.f32 %v908, 0.0
        %v927 = vmax.f32 %v911, 0.0
        %v928 = vmax.f32 %v916, 0.0
        %v929 = vmax.f32 %v919, 0.0
        %v930 = vpack.c.bf16 %v923, %v922
        %v931 = vpack.c.bf16 %v925, %v924
        %v932 = vpack.c.bf16 %v927, %v926
        %v933 = vpack.c.bf16 %v929, %v928
        %s934 = scalar_lea.vmem %s635, 64 [#allocation2]
        %v935 = vld [vmem:[%s934] sm:$0xf]
        %v936 = vld [vmem:[%s934 + $0x4] sm:$0xf]
        %v937 = vld [vmem:[%s934 + $0x8] sm:$0xf]
        %v938 = vld [vmem:[%s934 + $0xc] sm:$0xf]
        %v939 = vld [vmem:[%s934 + $0x10] sm:$0xf]
        %v940 = vld [vmem:[%s934 + $0x14] sm:$0xf]
        %v941 = vld [vmem:[%s934 + $0x18] sm:$0xf]
        %v942 = vld [vmem:[%s934 + $0x1c] sm:$0xf]
        %v951 = vunpack.c.l.b16 %v935
        %v952 = vunpack.c.l.b16 %v936
        %v953 = vunpack.c.l.b16 %v937
        %v954 = vunpack.c.l.b16 %v938
        %v955 = vunpack.c.l.b16 %v939
        %v956 = vunpack.c.l.b16 %v940
        %v957 = vunpack.c.l.b16 %v941
        %v958 = vunpack.c.l.b16 %v942
        %v959 = vpack.c.b16 %v952, %v951
        %v960 = vpack.c.b16 %v954, %v953
        %v961 = vpack.c.b16 %v956, %v955
        %v962 = vpack.c.b16 %v958, %v957
        %v964 = vsel %vm722, %v959, 0
        %v967 = vsel %vm722, %v960, 0
        %v970 = vsel %vm722, %v961, 0
        %v973 = vsel %vm722, %v962, 0
        %975 = vmatprep.subr.bf16.mxu0 0
        %976 = vmatpush1.bf16.msra.mxu0 %v719
        %977 = vmatprep.subr.bf16.mxu0 0
        %978 = vmatpush1.bf16.msra.mxu0 %v737
        %979 = vmatprep.subr.bf16.mxu0 0
        %980 = vmatpush1.bf16.msra.mxu0 0
        %981 = vmatprep.subr.bf16.mxu0 0
        %982 = vmatpush1.bf16.msra.mxu0 0
        %983 = vmatprep.subr.bf16.mxu0 0
        %984 = vmatpush1.bf16.msra.mxu0 0
        %985 = vmatprep.subr.bf16.mxu0 0
        %986 = vmatpush1.bf16.msra.mxu0 0
        %987 = vmatprep.subr.bf16.mxu0 0
        %988 = vmatpush1.bf16.msra.mxu0 0
        %989 = vmatprep.subr.bf16.mxu0 0
        %990 = vmatpush1.bf16.msra.mxu0 0
        %991 = vmatprep.subr.bf16.mxu0 0
        %992 = vmatpush1.bf16.msra.mxu0 0
        %993 = vmatprep.subr.bf16.mxu0 0
        %994 = vmatpush1.bf16.msra.mxu0 0
        %995 = vmatprep.subr.bf16.mxu0 0
        %996 = vmatpush1.bf16.msra.mxu0 0
        %997 = vmatprep.subr.bf16.mxu0 0
        %998 = vmatpush1.bf16.msra.mxu0 0
        %999 = vmatprep.subr.bf16.mxu0 0
        %1000 = vmatpush1.bf16.msra.mxu0 0
        %1001 = vmatprep.subr.bf16.mxu0 0
        %1002 = vmatpush1.bf16.msra.mxu0 0
        %1003 = vmatprep.subr.bf16.mxu0 0
        %1004 = vmatpush1.bf16.msra.mxu0 0
        %1005 = vmatprep.subr.bf16.mxu0 0
        %1006 = vmatpush1.bf16.msra.mxu0 0
        %1007 = vmatprep.mubr.bf16.mxu0 0
        %1008 = vmatmul.mubr.bf16.gmra.mrb[0].mxu0 %v964
        %v1009 = vpop.f32.mrb[0].mxu0
        %v1010 = vadd.f32 0.0, %v1009
        %v1011 = vpop.f32.mrb[0].mxu0
        %v1012 = vpop.f32.mrb[0].mxu0
        %v1013 = vadd.f32 0.0, %v1012
        %v1014 = vpop.f32.mrb[0].mxu0
        %1015 = vmatprep.mubr.bf16.mxu0 0
        %1016 = vmatmul.mubr.bf16.gmra.mrb[0].mxu0 %v967
        %v1017 = vpop.f32.mrb[0].mxu0
        %v1018 = vadd.f32 0.0, %v1017
        %v1019 = vpop.f32.mrb[0].mxu0
        %v1020 = vpop.f32.mrb[0].mxu0
        %v1021 = vadd.f32 0.0, %v1020
        %v1022 = vpop.f32.mrb[0].mxu0
        %1023 = vmatprep.mubr.bf16.mxu0 0
        %1024 = vmatmul.mubr.bf16.gmra.mrb[0].mxu0 %v970
        %v1025 = vpop.f32.mrb[0].mxu0
        %v1026 = vadd.f32 0.0, %v1025
        %v1027 = vpop.f32.mrb[0].mxu0
        %v1028 = vpop.f32.mrb[0].mxu0
        %v1029 = vadd.f32 0.0, %v1028
        %v1030 = vpop.f32.mrb[0].mxu0
        %1031 = vmatprep.mubr.bf16.mxu0 0
        %1032 = vmatmul.mubr.bf16.gmra.mrb[0].mxu0 %v973
        %v1033 = vpop.f32.mrb[0].mxu0
        %v1034 = vadd.f32 0.0, %v1033
        %v1035 = vpop.f32.mrb[0].mxu0
        %v1036 = vpop.f32.mrb[0].mxu0
        %v1037 = vadd.f32 0.0, %v1036
        %v1038 = vpop.f32.mrb[0].mxu0
        %1039 = vdwg.mxu0
        %v1040 = vmax.f32 %v1010, 0.0
        %v1041 = vmax.f32 %v1013, 0.0
        %v1042 = vmax.f32 %v1018, 0.0
        %v1043 = vmax.f32 %v1021, 0.0
        %v1044 = vmax.f32 %v1026, 0.0
        %v1045 = vmax.f32 %v1029, 0.0
        %v1046 = vmax.f32 %v1034, 0.0
        %v1047 = vmax.f32 %v1037, 0.0
        %v1048 = vpack.c.bf16 %v1041, %v1040
        %v1049 = vpack.c.bf16 %v1043, %v1042
        %v1050 = vpack.c.bf16 %v1045, %v1044
        %v1051 = vpack.c.bf16 %v1047, %v1046
        %s1052 = scalar_lea.vmem %s635, 96 [#allocation2]
        %v1053 = vld [vmem:[%s1052] sm:$0xf]
        %v1054 = vld [vmem:[%s1052 + $0x4] sm:$0xf]
        %v1055 = vld [vmem:[%s1052 + $0x8] sm:$0xf]
        %v1056 = vld [vmem:[%s1052 + $0xc] sm:$0xf]
        %v1057 = vld [vmem:[%s1052 + $0x10] sm:$0xf]
        %v1058 = vld [vmem:[%s1052 + $0x14] sm:$0xf]
        %v1059 = vld [vmem:[%s1052 + $0x18] sm:$0xf]
        %v1060 = vld [vmem:[%s1052 + $0x1c] sm:$0xf]
        %v1069 = vunpack.c.l.b16 %v1053
        %v1070 = vunpack.c.l.b16 %v1054
        %v1071 = vunpack.c.l.b16 %v1055
        %v1072 = vunpack.c.l.b16 %v1056
        %v1073 = vunpack.c.l.b16 %v1057
        %v1074 = vunpack.c.l.b16 %v1058
        %v1075 = vunpack.c.l.b16 %v1059
        %v1076 = vunpack.c.l.b16 %v1060
        %v1077 = vpack.c.b16 %v1070, %v1069
        %v1078 = vpack.c.b16 %v1072, %v1071
        %v1079 = vpack.c.b16 %v1074, %v1073
        %v1080 = vpack.c.b16 %v1076, %v1075
        %v1082 = vsel %vm722, %v1077, 0
        %v1085 = vsel %vm722, %v1078, 0
        %v1088 = vsel %vm722, %v1079, 0
        %v1091 = vsel %vm722, %v1080, 0
        %1093 = vmatprep.subr.bf16.mxu0 0
        %1094 = vmatpush1.bf16.msra.mxu0 %v719
        %1095 = vmatprep.subr.bf16.mxu0 0
        %1096 = vmatpush1.bf16.msra.mxu0 %v737
        %1097 = vmatprep.subr.bf16.mxu0 0
        %1098 = vmatpush1.bf16.msra.mxu0 0
        %1099 = vmatprep.subr.bf16.mxu0 0
        %1100 = vmatpush1.bf16.msra.mxu0 0
        %1101 = vmatprep.subr.bf16.mxu0 0
        %1102 = vmatpush1.bf16.msra.mxu0 0
        %1103 = vmatprep.subr.bf16.mxu0 0
        %1104 = vmatpush1.bf16.msra.mxu0 0
        %1105 = vmatprep.subr.bf16.mxu0 0
        %1106 = vmatpush1.bf16.msra.mxu0 0
        %1107 = vmatprep.subr.bf16.mxu0 0
        %1108 = vmatpush1.bf16.msra.mxu0 0
        %1109 = vmatprep.subr.bf16.mxu0 0
        %1110 = vmatpush1.bf16.msra.mxu0 0
        %1111 = vmatprep.subr.bf16.mxu0 0
        %1112 = vmatpush1.bf16.msra.mxu0 0
        %1113 = vmatprep.subr.bf16.mxu0 0
        %1114 = vmatpush1.bf16.msra.mxu0 0
        %1115 = vmatprep.subr.bf16.mxu0 0
        %1116 = vmatpush1.bf16.msra.mxu0 0
        %1117 = vmatprep.subr.bf16.mxu0 0
        %1118 = vmatpush1.bf16.msra.mxu0 0
        %1119 = vmatprep.subr.bf16.mxu0 0
        %1120 = vmatpush1.bf16.msra.mxu0 0
        %1121 = vmatprep.subr.bf16.mxu0 0
        %1122 = vmatpush1.bf16.msra.mxu0 0
        %1123 = vmatprep.subr.bf16.mxu0 0
        %1124 = vmatpush1.bf16.msra.mxu0 0
        %1125 = vmatprep.mubr.bf16.mxu0 0
        %1126 = vmatmul.mubr.bf16.gmra.mrb[0].mxu0 %v1082
        %v1127 = vpop.f32.mrb[0].mxu0
        %v1128 = vadd.f32 0.0, %v1127
        %v1129 = vpop.f32.mrb[0].mxu0
        %v1130 = vpop.f32.mrb[0].mxu0
        %v1131 = vadd.f32 0.0, %v1130
        %v1132 = vpop.f32.mrb[0].mxu0
        %1133 = vmatprep.mubr.bf16.mxu0 0
        %1134 = vmatmul.mubr.bf16.gmra.mrb[0].mxu0 %v1085
        %v1135 = vpop.f32.mrb[0].mxu0
        %v1136 = vadd.f32 0.0, %v1135
        %v1137 = vpop.f32.mrb[0].mxu0
        %v1138 = vpop.f32.mrb[0].mxu0
        %v1139 = vadd.f32 0.0, %v1138
        %v1140 = vpop.f32.mrb[0].mxu0
        %1141 = vmatprep.mubr.bf16.mxu0 0
        %1142 = vmatmul.mubr.bf16.gmra.mrb[0].mxu0 %v1088
        %v1143 = vpop.f32.mrb[0].mxu0
        %v1144 = vadd.f32 0.0, %v1143
        %v1145 = vpop.f32.mrb[0].mxu0
        %v1146 = vpop.f32.mrb[0].mxu0
        %v1147 = vadd.f32 0.0, %v1146
        %v1148 = vpop.f32.mrb[0].mxu0
        %1149 = vmatprep.mubr.bf16.mxu0 0
        %1150 = vmatmul.mubr.bf16.gmra.mrb[0].mxu0 %v1091
        %v1151 = vpop.f32.mrb[0].mxu0
        %v1152 = vadd.f32 0.0, %v1151
        %v1153 = vpop.f32.mrb[0].mxu0
        %v1154 = vpop.f32.mrb[0].mxu0
        %v1155 = vadd.f32 0.0, %v1154
        %v1156 = vpop.f32.mrb[0].mxu0
        %1157 = vdwg.mxu0
        %v1158 = vmax.f32 %v1128, 0.0
        %v1159 = vmax.f32 %v1131, 0.0
        %v1160 = vmax.f32 %v1136, 0.0
        %v1161 = vmax.f32 %v1139, 0.0
        %v1162 = vmax.f32 %v1144, 0.0
        %v1163 = vmax.f32 %v1147, 0.0
        %v1164 = vmax.f32 %v1152, 0.0
        %v1165 = vmax.f32 %v1155, 0.0
        %v1166 = vpack.c.bf16 %v1159, %v1158
        %v1167 = vpack.c.bf16 %v1161, %v1160
        %v1168 = vpack.c.bf16 %v1163, %v1162
        %v1169 = vpack.c.bf16 %v1165, %v1164
        %s1170 = scalar_lea.vmem %s635, 128 [#allocation2]
        %v1171 = vld [vmem:[%s1170] sm:$0xf]
        %v1172 = vld [vmem:[%s1170 + $0x4] sm:$0xf]
        %v1173 = vld [vmem:[%s1170 + $0x8] sm:$0xf]
        %v1174 = vld [vmem:[%s1170 + $0xc] sm:$0xf]
        %v1175 = vld [vmem:[%s1170 + $0x10] sm:$0xf]
        %v1176 = vld [vmem:[%s1170 + $0x14] sm:$0xf]
        %v1177 = vld [vmem:[%s1170 + $0x18] sm:$0xf]
        %v1178 = vld [vmem:[%s1170 + $0x1c] sm:$0xf]
        %v1187 = vunpack.c.l.b16 %v1171
        %v1188 = vunpack.c.l.b16 %v1172
        %v1189 = vunpack.c.l.b16 %v1173
        %v1190 = vunpack.c.l.b16 %v1174
        %v1191 = vunpack.c.l.b16 %v1175
        %v1192 = vunpack.c.l.b16 %v1176
        %v1193 = vunpack.c.l.b16 %v1177
        %v1194 = vunpack.c.l.b16 %v1178
        %v1195 = vpack.c.b16 %v1188, %v1187
        %v1196 = vpack.c.b16 %v1190, %v1189
        %v1197 = vpack.c.b16 %v1192, %v1191
        %v1198 = vpack.c.b16 %v1194, %v1193
        %v1200 = vsel %vm722, %v1195, 0
        %v1203 = vsel %vm722, %v1196, 0
        %v1206 = vsel %vm722, %v1197, 0
        %v1209 = vsel %vm722, %v1198, 0
        %1211 = vmatprep.subr.bf16.mxu0 0
        %1212 = vmatpush1.bf16.msra.mxu0 %v719
        %1213 = vmatprep.subr.bf16.mxu0 0
        %1214 = vmatpush1.bf16.msra.mxu0 %v737
        %1215 = vmatprep.subr.bf16.mxu0 0
        %1216 = vmatpush1.bf16.msra.mxu0 0
        %1217 = vmatprep.subr.bf16.mxu0 0
        %1218 = vmatpush1.bf16.msra.mxu0 0
        %1219 = vmatprep.subr.bf16.mxu0 0
        %1220 = vmatpush1.bf16.msra.mxu0 0
        %1221 = vmatprep.subr.bf16.mxu0 0
        %1222 = vmatpush1.bf16.msra.mxu0 0
        %1223 = vmatprep.subr.bf16.mxu0 0
        %1224 = vmatpush1.bf16.msra.mxu0 0
        %1225 = vmatprep.subr.bf16.mxu0 0
        %1226 = vmatpush1.bf16.msra.mxu0 0
        %1227 = vmatprep.subr.bf16.mxu0 0
        %1228 = vmatpush1.bf16.msra.mxu0 0
        %1229 = vmatprep.subr.bf16.mxu0 0
        %1230 = vmatpush1.bf16.msra.mxu0 0
        %1231 = vmatprep.subr.bf16.mxu0 0
        %1232 = vmatpush1.bf16.msra.mxu0 0
        %1233 = vmatprep.subr.bf16.mxu0 0
        %1234 = vmatpush1.bf16.msra.mxu0 0
        %1235 = vmatprep.subr.bf16.mxu0 0
        %1236 = vmatpush1.bf16.msra.mxu0 0
        %1237 = vmatprep.subr.bf16.mxu0 0
        %1238 = vmatpush1.bf16.msra.mxu0 0
        %1239 = vmatprep.subr.bf16.mxu0 0
        %1240 = vmatpush1.bf16.msra.mxu0 0
        %1241 = vmatprep.subr.bf16.mxu0 0
        %1242 = vmatpush1.bf16.msra.mxu0 0
        %1243 = vmatprep.mubr.bf16.mxu0 0
        %1244 = vmatmul.mubr.bf16.gmra.mrb[0].mxu0 %v1200
        %v1245 = vpop.f32.mrb[0].mxu0
        %v1246 = vadd.f32 0.0, %v1245
        %v1247 = vpop.f32.mrb[0].mxu0
        %v1248 = vpop.f32.mrb[0].mxu0
        %v1249 = vadd.f32 0.0, %v1248
        %v1250 = vpop.f32.mrb[0].mxu0
        %1251 = vmatprep.mubr.bf16.mxu0 0
        %1252 = vmatmul.mubr.bf16.gmra.mrb[0].mxu0 %v1203
        %v1253 = vpop.f32.mrb[0].mxu0
        %v1254 = vadd.f32 0.0, %v1253
        %v1255 = vpop.f32.mrb[0].mxu0
        %v1256 = vpop.f32.mrb[0].mxu0
        %v1257 = vadd.f32 0.0, %v1256
        %v1258 = vpop.f32.mrb[0].mxu0
        %1259 = vmatprep.mubr.bf16.mxu0 0
        %1260 = vmatmul.mubr.bf16.gmra.mrb[0].mxu0 %v1206
        %v1261 = vpop.f32.mrb[0].mxu0
        %v1262 = vadd.f32 0.0, %v1261
        %v1263 = vpop.f32.mrb[0].mxu0
        %v1264 = vpop.f32.mrb[0].mxu0
        %v1265 = vadd.f32 0.0, %v1264
        %v1266 = vpop.f32.mrb[0].mxu0
        %1267 = vmatprep.mubr.bf16.mxu0 0
        %1268 = vmatmul.mubr.bf16.gmra.mrb[0].mxu0 %v1209
        %v1269 = vpop.f32.mrb[0].mxu0
        %v1270 = vadd.f32 0.0, %v1269
        %v1271 = vpop.f32.mrb[0].mxu0
        %v1272 = vpop.f32.mrb[0].mxu0
        %v1273 = vadd.f32 0.0, %v1272
        %v1274 = vpop.f32.mrb[0].mxu0
        %1275 = vdwg.mxu0
        %v1276 = vmax.f32 %v1246, 0.0
        %v1277 = vmax.f32 %v1249, 0.0
        %v1278 = vmax.f32 %v1254, 0.0
        %v1279 = vmax.f32 %v1257, 0.0
        %v1280 = vmax.f32 %v1262, 0.0
        %v1281 = vmax.f32 %v1265, 0.0
        %v1282 = vmax.f32 %v1270, 0.0
        %v1283 = vmax.f32 %v1273, 0.0
        %v1284 = vpack.c.bf16 %v1277, %v1276
        %v1285 = vpack.c.bf16 %v1279, %v1278
        %v1286 = vpack.c.bf16 %v1281, %v1280
        %v1287 = vpack.c.bf16 %v1283, %v1282
        %s1288 = scalar_lea.vmem %s635, 160 [#allocation2]
        %v1289 = vld [vmem:[%s1288] sm:$0xf]
        %v1290 = vld [vmem:[%s1288 + $0x4] sm:$0xf]
        %v1291 = vld [vmem:[%s1288 + $0x8] sm:$0xf]
        %v1292 = vld [vmem:[%s1288 + $0xc] sm:$0xf]
        %v1293 = vld [vmem:[%s1288 + $0x10] sm:$0xf]
        %v1294 = vld [vmem:[%s1288 + $0x14] sm:$0xf]
        %v1295 = vld [vmem:[%s1288 + $0x18] sm:$0xf]
        %v1296 = vld [vmem:[%s1288 + $0x1c] sm:$0xf]
        %v1305 = vunpack.c.l.b16 %v1289
        %v1306 = vunpack.c.l.b16 %v1290
        %v1307 = vunpack.c.l.b16 %v1291
        %v1308 = vunpack.c.l.b16 %v1292
        %v1309 = vunpack.c.l.b16 %v1293
        %v1310 = vunpack.c.l.b16 %v1294
        %v1311 = vunpack.c.l.b16 %v1295
        %v1312 = vunpack.c.l.b16 %v1296
        %v1313 = vpack.c.b16 %v1306, %v1305
        %v1314 = vpack.c.b16 %v1308, %v1307
        %v1315 = vpack.c.b16 %v1310, %v1309
        %v1316 = vpack.c.b16 %v1312, %v1311
        %v1318 = vsel %vm722, %v1313, 0
        %v1321 = vsel %vm722, %v1314, 0
        %v1324 = vsel %vm722, %v1315, 0
        %v1327 = vsel %vm722, %v1316, 0
        %1329 = vmatprep.subr.bf16.mxu0 0
        %1330 = vmatpush1.bf16.msra.mxu0 %v719
        %1331 = vmatprep.subr.bf16.mxu0 0
        %1332 = vmatpush1.bf16.msra.mxu0 %v737
        %1333 = vmatprep.subr.bf16.mxu0 0
        %1334 = vmatpush1.bf16.msra.mxu0 0
        %1335 = vmatprep.subr.bf16.mxu0 0
        %1336 = vmatpush1.bf16.msra.mxu0 0
        %1337 = vmatprep.subr.bf16.mxu0 0
        %1338 = vmatpush1.bf16.msra.mxu0 0
        %1339 = vmatprep.subr.bf16.mxu0 0
        %1340 = vmatpush1.bf16.msra.mxu0 0
        %1341 = vmatprep.subr.bf16.mxu0 0
        %1342 = vmatpush1.bf16.msra.mxu0 0
        %1343 = vmatprep.subr.bf16.mxu0 0
        %1344 = vmatpush1.bf16.msra.mxu0 0
        %1345 = vmatprep.subr.bf16.mxu0 0
        %1346 = vmatpush1.bf16.msra.mxu0 0
        %1347 = vmatprep.subr.bf16.mxu0 0
        %1348 = vmatpush1.bf16.msra.mxu0 0
        %1349 = vmatprep.subr.bf16.mxu0 0
        %1350 = vmatpush1.bf16.msra.mxu0 0
        %1351 = vmatprep.subr.bf16.mxu0 0
        %1352 = vmatpush1.bf16.msra.mxu0 0
        %1353 = vmatprep.subr.bf16.mxu0 0
        %1354 = vmatpush1.bf16.msra.mxu0 0
        %1355 = vmatprep.subr.bf16.mxu0 0
        %1356 = vmatpush1.bf16.msra.mxu0 0
        %1357 = vmatprep.subr.bf16.mxu0 0
        %1358 = vmatpush1.bf16.msra.mxu0 0
        %1359 = vmatprep.subr.bf16.mxu0 0
        %1360 = vmatpush1.bf16.msra.mxu0 0
        %1361 = vmatprep.mubr.bf16.mxu0 0
        %1362 = vmatmul.mubr.bf16.gmra.mrb[0].mxu0 %v1318
        %v1363 = vpop.f32.mrb[0].mxu0
        %v1364 = vadd.f32 0.0, %v1363
        %v1365 = vpop.f32.mrb[0].mxu0
        %v1366 = vpop.f32.mrb[0].mxu0
        %v1367 = vadd.f32 0.0, %v1366
        %v1368 = vpop.f32.mrb[0].mxu0
        %1369 = vmatprep.mubr.bf16.mxu0 0
        %1370 = vmatmul.mubr.bf16.gmra.mrb[0].mxu0 %v1321
        %v1371 = vpop.f32.mrb[0].mxu0
        %v1372 = vadd.f32 0.0, %v1371
        %v1373 = vpop.f32.mrb[0].mxu0
        %v1374 = vpop.f32.mrb[0].mxu0
        %v1375 = vadd.f32 0.0, %v1374
        %v1376 = vpop.f32.mrb[0].mxu0
        %1377 = vmatprep.mubr.bf16.mxu0 0
        %1378 = vmatmul.mubr.bf16.gmra.mrb[0].mxu0 %v1324
        %v1379 = vpop.f32.mrb[0].mxu0
        %v1380 = vadd.f32 0.0, %v1379
        %v1381 = vpop.f32.mrb[0].mxu0
        %v1382 = vpop.f32.mrb[0].mxu0
        %v1383 = vadd.f32 0.0, %v1382
        %v1384 = vpop.f32.mrb[0].mxu0
        %1385 = vmatprep.mubr.bf16.mxu0 0
        %1386 = vmatmul.mubr.bf16.gmra.mrb[0].mxu0 %v1327
        %v1387 = vpop.f32.mrb[0].mxu0
        %v1388 = vadd.f32 0.0, %v1387
        %v1389 = vpop.f32.mrb[0].mxu0
        %v1390 = vpop.f32.mrb[0].mxu0
        %v1391 = vadd.f32 0.0, %v1390
        %v1392 = vpop.f32.mrb[0].mxu0
        %1393 = vdwg.mxu0
        %v1394 = vmax.f32 %v1364, 0.0
        %v1395 = vmax.f32 %v1367, 0.0
        %v1396 = vmax.f32 %v1372, 0.0
        %v1397 = vmax.f32 %v1375, 0.0
        %v1398 = vmax.f32 %v1380, 0.0
        %v1399 = vmax.f32 %v1383, 0.0
        %v1400 = vmax.f32 %v1388, 0.0
        %v1401 = vmax.f32 %v1391, 0.0
        %v1402 = vpack.c.bf16 %v1395, %v1394
        %v1403 = vpack.c.bf16 %v1397, %v1396
        %v1404 = vpack.c.bf16 %v1399, %v1398
        %v1405 = vpack.c.bf16 %v1401, %v1400
        %s1406 = scalar_lea.vmem %s635, 192 [#allocation2]
        %v1407 = vld [vmem:[%s1406] sm:$0xf]
        %v1408 = vld [vmem:[%s1406 + $0x4] sm:$0xf]
        %v1409 = vld [vmem:[%s1406 + $0x8] sm:$0xf]
        %v1410 = vld [vmem:[%s1406 + $0xc] sm:$0xf]
        %v1411 = vld [vmem:[%s1406 + $0x10] sm:$0xf]
        %v1412 = vld [vmem:[%s1406 + $0x14] sm:$0xf]
        %v1413 = vld [vmem:[%s1406 + $0x18] sm:$0xf]
        %v1414 = vld [vmem:[%s1406 + $0x1c] sm:$0xf]
        %v1423 = vunpack.c.l.b16 %v1407
        %v1424 = vunpack.c.l.b16 %v1408
        %v1425 = vunpack.c.l.b16 %v1409
        %v1426 = vunpack.c.l.b16 %v1410
        %v1427 = vunpack.c.l.b16 %v1411
        %v1428 = vunpack.c.l.b16 %v1412
        %v1429 = vunpack.c.l.b16 %v1413
        %v1430 = vunpack.c.l.b16 %v1414
        %v1431 = vpack.c.b16 %v1424, %v1423
        %v1432 = vpack.c.b16 %v1426, %v1425
        %v1433 = vpack.c.b16 %v1428, %v1427
        %v1434 = vpack.c.b16 %v1430, %v1429
        %v1436 = vsel %vm722, %v1431, 0
        %v1439 = vsel %vm722, %v1432, 0
        %v1442 = vsel %vm722, %v1433, 0
        %v1445 = vsel %vm722, %v1434, 0
        %1447 = vmatprep.subr.bf16.mxu0 0
        %1448 = vmatpush1.bf16.msra.mxu0 %v719
        %1449 = vmatprep.subr.bf16.mxu0 0
        %1450 = vmatpush1.bf16.msra.mxu0 %v737
        %1451 = vmatprep.subr.bf16.mxu0 0
        %1452 = vmatpush1.bf16.msra.mxu0 0
        %1453 = vmatprep.subr.bf16.mxu0 0
        %1454 = vmatpush1.bf16.msra.mxu0 0
        %1455 = vmatprep.subr.bf16.mxu0 0
        %1456 = vmatpush1.bf16.msra.mxu0 0
        %1457 = vmatprep.subr.bf16.mxu0 0
        %1458 = vmatpush1.bf16.msra.mxu0 0
        %1459 = vmatprep.subr.bf16.mxu0 0
        %1460 = vmatpush1.bf16.msra.mxu0 0
        %1461 = vmatprep.subr.bf16.mxu0 0
        %1462 = vmatpush1.bf16.msra.mxu0 0
        %1463 = vmatprep.subr.bf16.mxu0 0
        %1464 = vmatpush1.bf16.msra.mxu0 0
        %1465 = vmatprep.subr.bf16.mxu0 0
        %1466 = vmatpush1.bf16.msra.mxu0 0
        %1467 = vmatprep.subr.bf16.mxu0 0
        %1468 = vmatpush1.bf16.msra.mxu0 0
        %1469 = vmatprep.subr.bf16.mxu0 0
        %1470 = vmatpush1.bf16.msra.mxu0 0
        %1471 = vmatprep.subr.bf16.mxu0 0
        %1472 = vmatpush1.bf16.msra.mxu0 0
        %1473 = vmatprep.subr.bf16.mxu0 0
        %1474 = vmatpush1.bf16.msra.mxu0 0
        %1475 = vmatprep.subr.bf16.mxu0 0
        %1476 = vmatpush1.bf16.msra.mxu0 0
        %1477 = vmatprep.subr.bf16.mxu0 0
        %1478 = vmatpush1.bf16.msra.mxu0 0
        %1479 = vmatprep.mubr.bf16.mxu0 0
        %1480 = vmatmul.mubr.bf16.gmra.mrb[0].mxu0 %v1436
        %v1481 = vpop.f32.mrb[0].mxu0
        %v1482 = vadd.f32 0.0, %v1481
        %v1483 = vpop.f32.mrb[0].mxu0
        %v1484 = vpop.f32.mrb[0].mxu0
        %v1485 = vadd.f32 0.0, %v1484
        %v1486 = vpop.f32.mrb[0].mxu0
        %1487 = vmatprep.mubr.bf16.mxu0 0
        %1488 = vmatmul.mubr.bf16.gmra.mrb[0].mxu0 %v1439
        %v1489 = vpop.f32.mrb[0].mxu0
        %v1490 = vadd.f32 0.0, %v1489
        %v1491 = vpop.f32.mrb[0].mxu0
        %v1492 = vpop.f32.mrb[0].mxu0
        %v1493 = vadd.f32 0.0, %v1492
        %v1494 = vpop.f32.mrb[0].mxu0
        %1495 = vmatprep.mubr.bf16.mxu0 0
        %1496 = vmatmul.mubr.bf16.gmra.mrb[0].mxu0 %v1442
        %v1497 = vpop.f32.mrb[0].mxu0
        %v1498 = vadd.f32 0.0, %v1497
        %v1499 = vpop.f32.mrb[0].mxu0
        %v1500 = vpop.f32.mrb[0].mxu0
        %v1501 = vadd.f32 0.0, %v1500
        %v1502 = vpop.f32.mrb[0].mxu0
        %1503 = vmatprep.mubr.bf16.mxu0 0
        %1504 = vmatmul.mubr.bf16.gmra.mrb[0].mxu0 %v1445
        %v1505 = vpop.f32.mrb[0].mxu0
        %v1506 = vadd.f32 0.0, %v1505
        %v1507 = vpop.f32.mrb[0].mxu0
        %v1508 = vpop.f32.mrb[0].mxu0
        %v1509 = vadd.f32 0.0, %v1508
        %v1510 = vpop.f32.mrb[0].mxu0
        %1511 = vdwg.mxu0
        %v1512 = vmax.f32 %v1482, 0.0
        %v1513 = vmax.f32 %v1485, 0.0
        %v1514 = vmax.f32 %v1490, 0.0
        %v1515 = vmax.f32 %v1493, 0.0
        %v1516 = vmax.f32 %v1498, 0.0
        %v1517 = vmax.f32 %v1501, 0.0
        %v1518 = vmax.f32 %v1506, 0.0
        %v1519 = vmax.f32 %v1509, 0.0
        %v1520 = vpack.c.bf16 %v1513, %v1512
        %v1521 = vpack.c.bf16 %v1515, %v1514
        %v1522 = vpack.c.bf16 %v1517, %v1516
        %v1523 = vpack.c.bf16 %v1519, %v1518
        %s1524 = scalar_lea.vmem %s635, 224 [#allocation2]
        %v1525 = vld [vmem:[%s1524] sm:$0xf]
        %v1526 = vld [vmem:[%s1524 + $0x4] sm:$0xf]
        %v1527 = vld [vmem:[%s1524 + $0x8] sm:$0xf]
        %v1528 = vld [vmem:[%s1524 + $0xc] sm:$0xf]
        %v1529 = vld [vmem:[%s1524 + $0x10] sm:$0xf]
        %v1530 = vld [vmem:[%s1524 + $0x14] sm:$0xf]
        %v1531 = vld [vmem:[%s1524 + $0x18] sm:$0xf]
        %v1532 = vld [vmem:[%s1524 + $0x1c] sm:$0xf]
        %v1541 = vunpack.c.l.b16 %v1525
        %v1542 = vunpack.c.l.b16 %v1526
        %v1543 = vunpack.c.l.b16 %v1527
        %v1544 = vunpack.c.l.b16 %v1528
        %v1545 = vunpack.c.l.b16 %v1529
        %v1546 = vunpack.c.l.b16 %v1530
        %v1547 = vunpack.c.l.b16 %v1531
        %v1548 = vunpack.c.l.b16 %v1532
        %v1549 = vpack.c.b16 %v1542, %v1541
        %v1550 = vpack.c.b16 %v1544, %v1543
        %v1551 = vpack.c.b16 %v1546, %v1545
        %v1552 = vpack.c.b16 %v1548, %v1547
        %v1554 = vsel %vm722, %v1549, 0
        %v1557 = vsel %vm722, %v1550, 0
        %v1560 = vsel %vm722, %v1551, 0
        %v1563 = vsel %vm722, %v1552, 0
        %1565 = vmatprep.subr.bf16.mxu0 0
        %1566 = vmatpush1.bf16.msra.mxu0 %v719
        %1567 = vmatprep.subr.bf16.mxu0 0
        %1568 = vmatpush1.bf16.msra.mxu0 %v737
        %1569 = vmatprep.subr.bf16.mxu0 0
        %1570 = vmatpush1.bf16.msra.mxu0 0
        %1571 = vmatprep.subr.bf16.mxu0 0
        %1572 = vmatpush1.bf16.msra.mxu0 0
        %1573 = vmatprep.subr.bf16.mxu0 0
        %1574 = vmatpush1.bf16.msra.mxu0 0
        %1575 = vmatprep.subr.bf16.mxu0 0
        %1576 = vmatpush1.bf16.msra.mxu0 0
        %1577 = vmatprep.subr.bf16.mxu0 0
        %1578 = vmatpush1.bf16.msra.mxu0 0
        %1579 = vmatprep.subr.bf16.mxu0 0
        %1580 = vmatpush1.bf16.msra.mxu0 0
        %1581 = vmatprep.subr.bf16.mxu0 0
        %1582 = vmatpush1.bf16.msra.mxu0 0
        %1583 = vmatprep.subr.bf16.mxu0 0
        %1584 = vmatpush1.bf16.msra.mxu0 0
        %1585 = vmatprep.subr.bf16.mxu0 0
        %1586 = vmatpush1.bf16.msra.mxu0 0
        %1587 = vmatprep.subr.bf16.mxu0 0
        %1588 = vmatpush1.bf16.msra.mxu0 0
        %1589 = vmatprep.subr.bf16.mxu0 0
        %1590 = vmatpush1.bf16.msra.mxu0 0
        %1591 = vmatprep.subr.bf16.mxu0 0
        %1592 = vmatpush1.bf16.msra.mxu0 0
        %1593 = vmatprep.subr.bf16.mxu0 0
        %1594 = vmatpush1.bf16.msra.mxu0 0
        %1595 = vmatprep.subr.bf16.mxu0 0
        %1596 = vmatpush1.bf16.msra.mxu0 0
        %1597 = vmatprep.mubr.bf16.mxu0 0
        %1598 = vmatmul.mubr.bf16.gmra.mrb[0].mxu0 %v1554
        %v1599 = vpop.f32.mrb[0].mxu0
        %v1600 = vadd.f32 0.0, %v1599
        %v1601 = vpop.f32.mrb[0].mxu0
        %v1602 = vpop.f32.mrb[0].mxu0
        %v1603 = vadd.f32 0.0, %v1602
        %v1604 = vpop.f32.mrb[0].mxu0
        %1605 = vmatprep.mubr.bf16.mxu0 0
        %1606 = vmatmul.mubr.bf16.gmra.mrb[0].mxu0 %v1557
        %v1607 = vpop.f32.mrb[0].mxu0
        %v1608 = vadd.f32 0.0, %v1607
        %v1609 = vpop.f32.mrb[0].mxu0
        %v1610 = vpop.f32.mrb[0].mxu0
        %v1611 = vadd.f32 0.0, %v1610
        %v1612 = vpop.f32.mrb[0].mxu0
        %1613 = vmatprep.mubr.bf16.mxu0 0
        %1614 = vmatmul.mubr.bf16.gmra.mrb[0].mxu0 %v1560
        %v1615 = vpop.f32.mrb[0].mxu0
        %v1616 = vadd.f32 0.0, %v1615
        %v1617 = vpop.f32.mrb[0].mxu0
        %v1618 = vpop.f32.mrb[0].mxu0
        %v1619 = vadd.f32 0.0, %v1618
        %v1620 = vpop.f32.mrb[0].mxu0
        %1621 = vmatprep.mubr.bf16.mxu0 0
        %1622 = vmatmul.mubr.bf16.gmra.mrb[0].mxu0 %v1563
        %v1623 = vpop.f32.mrb[0].mxu0
        %v1624 = vadd.f32 0.0, %v1623
        %v1625 = vpop.f32.mrb[0].mxu0
        %v1626 = vpop.f32.mrb[0].mxu0
        %v1627 = vadd.f32 0.0, %v1626
        %v1628 = vpop.f32.mrb[0].mxu0
        %1629 = vdwg.mxu0
        %v1630 = vmax.f32 %v1600, 0.0
        %v1631 = vmax.f32 %v1603, 0.0
        %v1632 = vmax.f32 %v1608, 0.0
        %v1633 = vmax.f32 %v1611, 0.0
        %v1634 = vmax.f32 %v1616, 0.0
        %v1635 = vmax.f32 %v1619, 0.0
        %v1636 = vmax.f32 %v1624, 0.0
        %v1637 = vmax.f32 %v1627, 0.0
        %v1638 = vpack.c.bf16 %v1631, %v1630
        %v1639 = vpack.c.bf16 %v1633, %v1632
        %v1640 = vpack.c.bf16 %v1635, %v1634
        %v1641 = vpack.c.bf16 %v1637, %v1636
        %s1642 = scalar_lea.vmem %s635, 256 [#allocation2]
        %v1643 = vld [vmem:[%s1642] sm:$0xf]
        %v1644 = vld [vmem:[%s1642 + $0x4] sm:$0xf]
        %v1645 = vld [vmem:[%s1642 + $0x8] sm:$0xf]
        %v1646 = vld [vmem:[%s1642 + $0xc] sm:$0xf]
        %v1647 = vld [vmem:[%s1642 + $0x10] sm:$0xf]
        %v1648 = vld [vmem:[%s1642 + $0x14] sm:$0xf]
        %v1649 = vld [vmem:[%s1642 + $0x18] sm:$0xf]
        %v1650 = vld [vmem:[%s1642 + $0x1c] sm:$0xf]
        %v1659 = vunpack.c.l.b16 %v1643
        %v1660 = vunpack.c.l.b16 %v1644
        %v1661 = vunpack.c.l.b16 %v1645
        %v1662 = vunpack.c.l.b16 %v1646
        %v1663 = vunpack.c.l.b16 %v1647
        %v1664 = vunpack.c.l.b16 %v1648
        %v1665 = vunpack.c.l.b16 %v1649
        %v1666 = vunpack.c.l.b16 %v1650
        %v1667 = vpack.c.b16 %v1660, %v1659
        %v1668 = vpack.c.b16 %v1662, %v1661
        %v1669 = vpack.c.b16 %v1664, %v1663
        %v1670 = vpack.c.b16 %v1666, %v1665
        %v1672 = vsel %vm722, %v1667, 0
        %v1675 = vsel %vm722, %v1668, 0
        %v1678 = vsel %vm722, %v1669, 0
        %v1681 = vsel %vm722, %v1670, 0
        %1683 = vmatprep.subr.bf16.mxu0 0
        %1684 = vmatpush1.bf16.msra.mxu0 %v719
        %1685 = vmatprep.subr.bf16.mxu0 0
        %1686 = vmatpush1.bf16.msra.mxu0 %v737
        %1687 = vmatprep.subr.bf16.mxu0 0
        %1688 = vmatpush1.bf16.msra.mxu0 0
        %1689 = vmatprep.subr.bf16.mxu0 0
        %1690 = vmatpush1.bf16.msra.mxu0 0
        %1691 = vmatprep.subr.bf16.mxu0 0
        %1692 = vmatpush1.bf16.msra.mxu0 0
        %1693 = vmatprep.subr.bf16.mxu0 0
        %1694 = vmatpush1.bf16.msra.mxu0 0
        %1695 = vmatprep.subr.bf16.mxu0 0
        %1696 = vmatpush1.bf16.msra.mxu0 0
        %1697 = vmatprep.subr.bf16.mxu0 0
        %1698 = vmatpush1.bf16.msra.mxu0 0
        %1699 = vmatprep.subr.bf16.mxu0 0
        %1700 = vmatpush1.bf16.msra.mxu0 0
        %1701 = vmatprep.subr.bf16.mxu0 0
        %1702 = vmatpush1.bf16.msra.mxu0 0
        %1703 = vmatprep.subr.bf16.mxu0 0
        %1704 = vmatpush1.bf16.msra.mxu0 0
        %1705 = vmatprep.subr.bf16.mxu0 0
        %1706 = vmatpush1.bf16.msra.mxu0 0
        %1707 = vmatprep.subr.bf16.mxu0 0
        %1708 = vmatpush1.bf16.msra.mxu0 0
        %1709 = vmatprep.subr.bf16.mxu0 0
        %1710 = vmatpush1.bf16.msra.mxu0 0
        %1711 = vmatprep.subr.bf16.mxu0 0
        %1712 = vmatpush1.bf16.msra.mxu0 0
        %1713 = vmatprep.subr.bf16.mxu0 0
        %1714 = vmatpush1.bf16.msra.mxu0 0
        %1715 = vmatprep.mubr.bf16.mxu0 0
        %1716 = vmatmul.mubr.bf16.gmra.mrb[0].mxu0 %v1672
        %v1717 = vpop.f32.mrb[0].mxu0
        %v1718 = vadd.f32 0.0, %v1717
        %v1719 = vpop.f32.mrb[0].mxu0
        %v1720 = vpop.f32.mrb[0].mxu0
        %v1721 = vadd.f32 0.0, %v1720
        %v1722 = vpop.f32.mrb[0].mxu0
        %1723 = vmatprep.mubr.bf16.mxu0 0
        %1724 = vmatmul.mubr.bf16.gmra.mrb[0].mxu0 %v1675
        %v1725 = vpop.f32.mrb[0].mxu0
        %v1726 = vadd.f32 0.0, %v1725
        %v1727 = vpop.f32.mrb[0].mxu0
        %v1728 = vpop.f32.mrb[0].mxu0
        %v1729 = vadd.f32 0.0, %v1728
        %v1730 = vpop.f32.mrb[0].mxu0
        %1731 = vmatprep.mubr.bf16.mxu0 0
        %1732 = vmatmul.mubr.bf16.gmra.mrb[0].mxu0 %v1678
        %v1733 = vpop.f32.mrb[0].mxu0
        %v1734 = vadd.f32 0.0, %v1733
        %v1735 = vpop.f32.mrb[0].mxu0
        %v1736 = vpop.f32.mrb[0].mxu0
        %v1737 = vadd.f32 0.0, %v1736
        %v1738 = vpop.f32.mrb[0].mxu0
        %1739 = vmatprep.mubr.bf16.mxu0 0
        %1740 = vmatmul.mubr.bf16.gmra.mrb[0].mxu0 %v1681
        %v1741 = vpop.f32.mrb[0].mxu0
        %v1742 = vadd.f32 0.0, %v1741
        %v1743 = vpop.f32.mrb[0].mxu0
        %v1744 = vpop.f32.mrb[0].mxu0
        %v1745 = vadd.f32 0.0, %v1744
        %v1746 = vpop.f32.mrb[0].mxu0
        %1747 = vdwg.mxu0
        %v1748 = vmax.f32 %v1718, 0.0
        %v1749 = vmax.f32 %v1721, 0.0
        %v1750 = vmax.f32 %v1726, 0.0
        %v1751 = vmax.f32 %v1729, 0.0
        %v1752 = vmax.f32 %v1734, 0.0
        %v1753 = vmax.f32 %v1737, 0.0
        %v1754 = vmax.f32 %v1742, 0.0
        %v1755 = vmax.f32 %v1745, 0.0
        %v1756 = vpack.c.bf16 %v1749, %v1748
        %v1757 = vpack.c.bf16 %v1751, %v1750
        %v1758 = vpack.c.bf16 %v1753, %v1752
        %v1759 = vpack.c.bf16 %v1755, %v1754
        %v1760 = vld [vmem:[%s3] sm:$0xf]
        %v1761 = vld [vmem:[%s3 + $0x4] sm:$0xf]
        %v1762 = vld [vmem:[%s3 + $0x8] sm:$0xf]
        %v1763 = vld [vmem:[%s3 + $0xc] sm:$0xf]
        %v1764 = vld [vmem:[%s3 + $0x10] sm:$0xf]
        %v1765 = vld [vmem:[%s3 + $0x14] sm:$0xf]
        %v1766 = vld [vmem:[%s3 + $0x18] sm:$0xf]
        %v1767 = vld [vmem:[%s3 + $0x1c] sm:$0xf]
        %v1768 = vld [vmem:[%s3 + $0x20] sm:$0xf]
        %v1769 = vld [vmem:[%s3 + $0x24] sm:$0xf]
        %v1770 = vld [vmem:[%s3 + $0x28] sm:$0xf]
        %v1771 = vld [vmem:[%s3 + $0x2c] sm:$0xf]
        %v1772 = vld [vmem:[%s3 + $0x30] sm:$0xf]
        %v1773 = vld [vmem:[%s3 + $0x34] sm:$0xf]
        %v1774 = vld [vmem:[%s3 + $0x38] sm:$0xf]
        %v1775 = vld [vmem:[%s3 + $0x3c] sm:$0xf]
        %v1776 = vld [vmem:[%s3 + $0x40] sm:$0xf]
        %v1777 = vld [vmem:[%s3 + $0x44] sm:$0xf]
        %v1778 = vld [vmem:[%s3 + $0x48] sm:$0xf]
        %v1779 = vld [vmem:[%s3 + $0x4c] sm:$0xf]
        %v1780 = vld [vmem:[%s3 + $0x50] sm:$0xf]
        %v1781 = vld [vmem:[%s3 + $0x54] sm:$0xf]
        %v1782 = vld [vmem:[%s3 + $0x58] sm:$0xf]
        %v1783 = vld [vmem:[%s3 + $0x5c] sm:$0xf]
        %v1784 = vld [vmem:[%s3 + $0x60] sm:$0xf]
        %v1785 = vld [vmem:[%s3 + $0x64] sm:$0xf]
        %v1786 = vld [vmem:[%s3 + $0x68] sm:$0xf]
        %v1787 = vld [vmem:[%s3 + $0x6c] sm:$0xf]
        %v1788 = vld [vmem:[%s3 + $0x70] sm:$0xf]
        %v1789 = vld [vmem:[%s3 + $0x74] sm:$0xf]
        %v1790 = vld [vmem:[%s3 + $0x78] sm:$0xf]
        %v1791 = vld [vmem:[%s3 + $0x7c] sm:$0xf]
        %v1792 = vld [vmem:[%s3 + $0x80] sm:$0xf]
        %v1793 = vld [vmem:[%s3 + $0x84] sm:$0xf]
        %v1794 = vld [vmem:[%s3 + $0x88] sm:$0xf]
        %v1795 = vld [vmem:[%s3 + $0x8c] sm:$0xf]
        %v1796 = vld [vmem:[%s3 + $0x90] sm:$0xf]
        %v1797 = vld [vmem:[%s3 + $0x94] sm:$0xf]
        %v1798 = vld [vmem:[%s3 + $0x98] sm:$0xf]
        %v1799 = vld [vmem:[%s3 + $0x9c] sm:$0xf]
        %v1800 = vld [vmem:[%s3 + $0xa0] sm:$0xf]
        %v1801 = vld [vmem:[%s3 + $0xa4] sm:$0xf]
        %v1802 = vld [vmem:[%s3 + $0xa8] sm:$0xf]
        %v1803 = vld [vmem:[%s3 + $0xac] sm:$0xf]
        %v1804 = vld [vmem:[%s3 + $0xb0] sm:$0xf]
        %v1805 = vld [vmem:[%s3 + $0xb4] sm:$0xf]
        %v1806 = vld [vmem:[%s3 + $0xb8] sm:$0xf]
        %v1807 = vld [vmem:[%s3 + $0xbc] sm:$0xf]
        %v1808 = vld [vmem:[%s3 + $0xc0] sm:$0xf]
        %v1809 = vld [vmem:[%s3 + $0xc4] sm:$0xf]
        %v1810 = vld [vmem:[%s3 + $0xc8] sm:$0xf]
        %v1811 = vld [vmem:[%s3 + $0xcc] sm:$0xf]
        %v1812 = vld [vmem:[%s3 + $0xd0] sm:$0xf]
        %v1813 = vld [vmem:[%s3 + $0xd4] sm:$0xf]
        %v1814 = vld [vmem:[%s3 + $0xd8] sm:$0xf]
        %v1815 = vld [vmem:[%s3 + $0xdc] sm:$0xf]
        %v1816 = vld [vmem:[%s3 + $0xe0] sm:$0xf]
        %v1817 = vld [vmem:[%s3 + $0xe4] sm:$0xf]
        %v1818 = vld [vmem:[%s3 + $0xe8] sm:$0xf]
        %v1819 = vld [vmem:[%s3 + $0xec] sm:$0xf]
        %v1820 = vld [vmem:[%s3 + $0xf0] sm:$0xf]
        %v1821 = vld [vmem:[%s3 + $0xf4] sm:$0xf]
        %v1822 = vld [vmem:[%s3 + $0xf8] sm:$0xf]
        %v1823 = vld [vmem:[%s3 + $0xfc] sm:$0xf]
        %v1824 = vld [vmem:[%s3 + $0x100] sm:$0xf]
        %v1825 = vld [vmem:[%s3 + $0x104] sm:$0xf]
        %v1826 = vld [vmem:[%s3 + $0x108] sm:$0xf]
        %v1827 = vld [vmem:[%s3 + $0x10c] sm:$0xf]
        %v1828 = vld [vmem:[%s3 + $0x110] sm:$0xf]
        %v1829 = vld [vmem:[%s3 + $0x114] sm:$0xf]
        %v1830 = vld [vmem:[%s3 + $0x118] sm:$0xf]
        %v1831 = vld [vmem:[%s3 + $0x11c] sm:$0xf]
        %v1832 = vld [vmem:[%s3 + $0x120] sm:$0xf]
        %v1833 = vld [vmem:[%s3 + $0x124] sm:$0xf]
        %v1834 = vld [vmem:[%s3 + $0x128] sm:$0xf]
        %v1835 = vld [vmem:[%s3 + $0x12c] sm:$0xf]
        %v1836 = vld [vmem:[%s3 + $0x130] sm:$0xf]
        %v1837 = vld [vmem:[%s3 + $0x134] sm:$0xf]
        %v1838 = vld [vmem:[%s3 + $0x138] sm:$0xf]
        %v1839 = vld [vmem:[%s3 + $0x13c] sm:$0xf]
        %v1840 = vld [vmem:[%s3 + $0x140] sm:$0xf]
        %v1841 = vld [vmem:[%s3 + $0x144] sm:$0xf]
        %v1842 = vld [vmem:[%s3 + $0x148] sm:$0xf]
        %v1843 = vld [vmem:[%s3 + $0x14c] sm:$0xf]
        %v1844 = vld [vmem:[%s3 + $0x150] sm:$0xf]
        %v1845 = vld [vmem:[%s3 + $0x154] sm:$0xf]
        %v1846 = vld [vmem:[%s3 + $0x158] sm:$0xf]
        %v1847 = vld [vmem:[%s3 + $0x15c] sm:$0xf]
        %v1848 = vld [vmem:[%s3 + $0x160] sm:$0xf]
        %v1849 = vld [vmem:[%s3 + $0x164] sm:$0xf]
        %v1850 = vld [vmem:[%s3 + $0x168] sm:$0xf]
        %v1851 = vld [vmem:[%s3 + $0x16c] sm:$0xf]
        %v1852 = vld [vmem:[%s3 + $0x170] sm:$0xf]
        %v1853 = vld [vmem:[%s3 + $0x174] sm:$0xf]
        %v1854 = vld [vmem:[%s3 + $0x178] sm:$0xf]
        %v1855 = vld [vmem:[%s3 + $0x17c] sm:$0xf]
        %v1856 = vld [vmem:[%s3 + $0x180] sm:$0xf]
        %v1857 = vld [vmem:[%s3 + $0x184] sm:$0xf]
        %v1858 = vld [vmem:[%s3 + $0x188] sm:$0xf]
        %v1859 = vld [vmem:[%s3 + $0x18c] sm:$0xf]
        %v1860 = vld [vmem:[%s3 + $0x190] sm:$0xf]
        %v1861 = vld [vmem:[%s3 + $0x194] sm:$0xf]
        %v1862 = vld [vmem:[%s3 + $0x198] sm:$0xf]
        %v1863 = vld [vmem:[%s3 + $0x19c] sm:$0xf]
        %v1864 = vld [vmem:[%s3 + $0x1a0] sm:$0xf]
        %v1865 = vld [vmem:[%s3 + $0x1a4] sm:$0xf]
        %v1866 = vld [vmem:[%s3 + $0x1a8] sm:$0xf]
        %v1867 = vld [vmem:[%s3 + $0x1ac] sm:$0xf]
        %v1868 = vld [vmem:[%s3 + $0x1b0] sm:$0xf]
        %v1869 = vld [vmem:[%s3 + $0x1b4] sm:$0xf]
        %v1870 = vld [vmem:[%s3 + $0x1b8] sm:$0xf]
        %v1871 = vld [vmem:[%s3 + $0x1bc] sm:$0xf]
        %v1872 = vld [vmem:[%s3 + $0x1c0] sm:$0xf]
        %v1873 = vld [vmem:[%s3 + $0x1c4] sm:$0xf]
        %v1874 = vld [vmem:[%s3 + $0x1c8] sm:$0xf]
        %v1875 = vld [vmem:[%s3 + $0x1cc] sm:$0xf]
        %v1876 = vld [vmem:[%s3 + $0x1d0] sm:$0xf]
        %v1877 = vld [vmem:[%s3 + $0x1d4] sm:$0xf]
        %v1878 = vld [vmem:[%s3 + $0x1d8] sm:$0xf]
        %v1879 = vld [vmem:[%s3 + $0x1dc] sm:$0xf]
        %v1880 = vld [vmem:[%s3 + $0x1e0] sm:$0xf]
        %v1881 = vld [vmem:[%s3 + $0x1e4] sm:$0xf]
        %v1882 = vld [vmem:[%s3 + $0x1e8] sm:$0xf]
        %v1883 = vld [vmem:[%s3 + $0x1ec] sm:$0xf]
        %v1884 = vld [vmem:[%s3 + $0x1f0] sm:$0xf]
        %v1885 = vld [vmem:[%s3 + $0x1f4] sm:$0xf]
        %v1886 = vld [vmem:[%s3 + $0x1f8] sm:$0xf]
        %v1887 = vld [vmem:[%s3 + $0x1fc] sm:$0xf]
        %v1888 = vld [vmem:[%s3 + $0x200] sm:$0xf]
        %v1889 = vld [vmem:[%s3 + $0x204] sm:$0xf]
        %v1890 = vld [vmem:[%s3 + $0x208] sm:$0xf]
        %v1891 = vld [vmem:[%s3 + $0x20c] sm:$0xf]
        %v1892 = vld [vmem:[%s3 + $0x210] sm:$0xf]
        %v1893 = vld [vmem:[%s3 + $0x214] sm:$0xf]
        %v1894 = vld [vmem:[%s3 + $0x218] sm:$0xf]
        %v1895 = vld [vmem:[%s3 + $0x21c] sm:$0xf]
        %v1896 = vld [vmem:[%s3 + $0x220] sm:$0xf]
        %v1897 = vld [vmem:[%s3 + $0x224] sm:$0xf]
        %v1898 = vld [vmem:[%s3 + $0x228] sm:$0xf]
        %v1899 = vld [vmem:[%s3 + $0x22c] sm:$0xf]
        %v1900 = vld [vmem:[%s3 + $0x230] sm:$0xf]
        %v1901 = vld [vmem:[%s3 + $0x234] sm:$0xf]
        %v1902 = vld [vmem:[%s3 + $0x238] sm:$0xf]
        %v1903 = vld [vmem:[%s3 + $0x23c] sm:$0xf]
        %v1904 = vld [vmem:[%s4] sm:$0x1]
        %v1906 = vlaneseq
        %v1907 = vshrl.u32 %v1906, 7
        %v1908 = vsub.s32 0, %v1907
        %v1909 = vrot.slane %v1904, %v1908
        %v2055 = vunpack.c.l.b16 %v1760
        %v2056 = vunpack.c.l.b16 %v1761
        %v2057 = vunpack.c.l.b16 %v1762
        %v2058 = vunpack.c.l.b16 %v1763
        %v2059 = vunpack.c.l.b16 %v1764
        %v2060 = vunpack.c.l.b16 %v1765
        %v2061 = vunpack.c.l.b16 %v1766
        %v2062 = vunpack.c.l.b16 %v1767
        %v2063 = vunpack.c.l.b16 %v1768
        %v2064 = vunpack.c.l.b16 %v1769
        %v2065 = vunpack.c.l.b16 %v1770
        %v2066 = vunpack.c.l.b16 %v1771
        %v2067 = vunpack.c.l.b16 %v1772
        %v2068 = vunpack.c.l.b16 %v1773
        %v2069 = vunpack.c.l.b16 %v1774
        %v2070 = vunpack.c.l.b16 %v1775
        %v2071 = vunpack.c.l.b16 %v1776
        %v2072 = vunpack.c.l.b16 %v1777
        %v2073 = vunpack.c.l.b16 %v1778
        %v2074 = vunpack.c.l.b16 %v1779
        %v2075 = vunpack.c.l.b16 %v1780
        %v2076 = vunpack.c.l.b16 %v1781
        %v2077 = vunpack.c.l.b16 %v1782
        %v2078 = vunpack.c.l.b16 %v1783
        %v2079 = vunpack.c.l.b16 %v1784
        %v2080 = vunpack.c.l.b16 %v1785
        %v2081 = vunpack.c.l.b16 %v1786
        %v2082 = vunpack.c.l.b16 %v1787
        %v2083 = vunpack.c.l.b16 %v1788
        %v2084 = vunpack.c.l.b16 %v1789
        %v2085 = vunpack.c.l.b16 %v1790
        %v2086 = vunpack.c.l.b16 %v1791
        %v2087 = vunpack.c.l.b16 %v1792
        %v2088 = vunpack.c.l.b16 %v1793
        %v2089 = vunpack.c.l.b16 %v1794
        %v2090 = vunpack.c.l.b16 %v1795
        %v2091 = vunpack.c.l.b16 %v1796
        %v2092 = vunpack.c.l.b16 %v1797
        %v2093 = vunpack.c.l.b16 %v1798
        %v2094 = vunpack.c.l.b16 %v1799
        %v2095 = vunpack.c.l.b16 %v1800
        %v2096 = vunpack.c.l.b16 %v1801
        %v2097 = vunpack.c.l.b16 %v1802
        %v2098 = vunpack.c.l.b16 %v1803
        %v2099 = vunpack.c.l.b16 %v1804
        %v2100 = vunpack.c.l.b16 %v1805
        %v2101 = vunpack.c.l.b16 %v1806
        %v2102 = vunpack.c.l.b16 %v1807
        %v2103 = vunpack.c.l.b16 %v1808
        %v2104 = vunpack.c.l.b16 %v1809
        %v2105 = vunpack.c.l.b16 %v1810
        %v2106 = vunpack.c.l.b16 %v1811
        %v2107 = vunpack.c.l.b16 %v1812
        %v2108 = vunpack.c.l.b16 %v1813
        %v2109 = vunpack.c.l.b16 %v1814
        %v2110 = vunpack.c.l.b16 %v1815
        %v2111 = vunpack.c.l.b16 %v1816
        %v2112 = vunpack.c.l.b16 %v1817
        %v2113 = vunpack.c.l.b16 %v1818
        %v2114 = vunpack.c.l.b16 %v1819
        %v2115 = vunpack.c.l.b16 %v1820
        %v2116 = vunpack.c.l.b16 %v1821
        %v2117 = vunpack.c.l.b16 %v1822
        %v2118 = vunpack.c.l.b16 %v1823
        %v2119 = vunpack.c.l.b16 %v1824
        %v2120 = vunpack.c.l.b16 %v1825
        %v2121 = vunpack.c.l.b16 %v1826
        %v2122 = vunpack.c.l.b16 %v1827
        %v2123 = vunpack.c.l.b16 %v1828
        %v2124 = vunpack.c.l.b16 %v1829
        %v2125 = vunpack.c.l.b16 %v1830
        %v2126 = vunpack.c.l.b16 %v1831
        %v2127 = vunpack.c.l.b16 %v1832
        %v2128 = vunpack.c.l.b16 %v1833
        %v2129 = vunpack.c.l.b16 %v1834
        %v2130 = vunpack.c.l.b16 %v1835
        %v2131 = vunpack.c.l.b16 %v1836
        %v2132 = vunpack.c.l.b16 %v1837
        %v2133 = vunpack.c.l.b16 %v1838
        %v2134 = vunpack.c.l.b16 %v1839
        %v2135 = vunpack.c.l.b16 %v1840
        %v2136 = vunpack.c.l.b16 %v1841
        %v2137 = vunpack.c.l.b16 %v1842
        %v2138 = vunpack.c.l.b16 %v1843
        %v2139 = vunpack.c.l.b16 %v1844
        %v2140 = vunpack.c.l.b16 %v1845
        %v2141 = vunpack.c.l.b16 %v1846
        %v2142 = vunpack.c.l.b16 %v1847
        %v2143 = vunpack.c.l.b16 %v1848
        %v2144 = vunpack.c.l.b16 %v1849
        %v2145 = vunpack.c.l.b16 %v1850
        %v2146 = vunpack.c.l.b16 %v1851
        %v2147 = vunpack.c.l.b16 %v1852
        %v2148 = vunpack.c.l.b16 %v1853
        %v2149 = vunpack.c.l.b16 %v1854
        %v2150 = vunpack.c.l.b16 %v1855
        %v2151 = vunpack.c.l.b16 %v1856
        %v2152 = vunpack.c.l.b16 %v1857
        %v2153 = vunpack.c.l.b16 %v1858
        %v2154 = vunpack.c.l.b16 %v1859
        %v2155 = vunpack.c.l.b16 %v1860
        %v2156 = vunpack.c.l.b16 %v1861
        %v2157 = vunpack.c.l.b16 %v1862
        %v2158 = vunpack.c.l.b16 %v1863
        %v2159 = vunpack.c.l.b16 %v1864
        %v2160 = vunpack.c.l.b16 %v1865
        %v2161 = vunpack.c.l.b16 %v1866
        %v2162 = vunpack.c.l.b16 %v1867
        %v2163 = vunpack.c.l.b16 %v1868
        %v2164 = vunpack.c.l.b16 %v1869
        %v2165 = vunpack.c.l.b16 %v1870
        %v2166 = vunpack.c.l.b16 %v1871
        %v2167 = vunpack.c.l.b16 %v1872
        %v2168 = vunpack.c.l.b16 %v1873
        %v2169 = vunpack.c.l.b16 %v1874
        %v2170 = vunpack.c.l.b16 %v1875
        %v2171 = vunpack.c.l.b16 %v1876
        %v2172 = vunpack.c.l.b16 %v1877
        %v2173 = vunpack.c.l.b16 %v1878
        %v2174 = vunpack.c.l.b16 %v1879
        %v2175 = vunpack.c.l.b16 %v1880
        %v2176 = vunpack.c.l.b16 %v1881
        %v2177 = vunpack.c.l.b16 %v1882
        %v2178 = vunpack.c.l.b16 %v1883
        %v2179 = vunpack.c.l.b16 %v1884
        %v2180 = vunpack.c.l.b16 %v1885
        %v2181 = vunpack.c.l.b16 %v1886
        %v2182 = vunpack.c.l.b16 %v1887
        %v2183 = vunpack.c.l.b16 %v1888
        %v2184 = vunpack.c.l.b16 %v1889
        %v2185 = vunpack.c.l.b16 %v1890
        %v2186 = vunpack.c.l.b16 %v1891
        %v2187 = vunpack.c.l.b16 %v1892
        %v2188 = vunpack.c.l.b16 %v1893
        %v2189 = vunpack.c.l.b16 %v1894
        %v2190 = vunpack.c.l.b16 %v1895
        %v2191 = vunpack.c.l.b16 %v1896
        %v2192 = vunpack.c.l.b16 %v1897
        %v2193 = vunpack.c.l.b16 %v1898
        %v2194 = vunpack.c.l.b16 %v1899
        %v2195 = vunpack.c.l.b16 %v1900
        %v2196 = vunpack.c.l.b16 %v1901
        %v2197 = vunpack.c.l.b16 %v1902
        %v2198 = vunpack.c.l.b16 %v1903
        %v2199 = vpack.c.b16 %v2056, %v2055
        %v2200 = vpack.c.b16 %v2058, %v2057
        %v2201 = vpack.c.b16 %v2060, %v2059
        %v2202 = vpack.c.b16 %v2062, %v2061
        %v2203 = vpack.c.b16 %v2064, %v2063
        %v2204 = vpack.c.b16 %v2066, %v2065
        %v2205 = vpack.c.b16 %v2068, %v2067
        %v2206 = vpack.c.b16 %v2070, %v2069
        %v2207 = vpack.c.b16 %v2072, %v2071
        %v2208 = vpack.c.b16 %v2074, %v2073
        %v2209 = vpack.c.b16 %v2076, %v2075
        %v2210 = vpack.c.b16 %v2078, %v2077
        %v2211 = vpack.c.b16 %v2080, %v2079
        %v2212 = vpack.c.b16 %v2082, %v2081
        %v2213 = vpack.c.b16 %v2084, %v2083
        %v2214 = vpack.c.b16 %v2086, %v2085
        %v2215 = vpack.c.b16 %v2088, %v2087
        %v2216 = vpack.c.b16 %v2090, %v2089
        %v2217 = vpack.c.b16 %v2092, %v2091
        %v2218 = vpack.c.b16 %v2094, %v2093
        %v2219 = vpack.c.b16 %v2096, %v2095
        %v2220 = vpack.c.b16 %v2098, %v2097
        %v2221 = vpack.c.b16 %v2100, %v2099
        %v2222 = vpack.c.b16 %v2102, %v2101
        %v2223 = vpack.c.b16 %v2104, %v2103
        %v2224 = vpack.c.b16 %v2106, %v2105
        %v2225 = vpack.c.b16 %v2108, %v2107
        %v2226 = vpack.c.b16 %v2110, %v2109
        %v2227 = vpack.c.b16 %v2112, %v2111
        %v2228 = vpack.c.b16 %v2114, %v2113
        %v2229 = vpack.c.b16 %v2116, %v2115
        %v2230 = vpack.c.b16 %v2118, %v2117
        %v2231 = vpack.c.b16 %v2120, %v2119
        %v2232 = vpack.c.b16 %v2122, %v2121
        %v2233 = vpack.c.b16 %v2124, %v2123
        %v2234 = vpack.c.b16 %v2126, %v2125
        %v2235 = vpack.c.b16 %v2128, %v2127
        %v2236 = vpack.c.b16 %v2130, %v2129
        %v2237 = vpack.c.b16 %v2132, %v2131
        %v2238 = vpack.c.b16 %v2134, %v2133
        %v2239 = vpack.c.b16 %v2136, %v2135
        %v2240 = vpack.c.b16 %v2138, %v2137
        %v2241 = vpack.c.b16 %v2140, %v2139
        %v2242 = vpack.c.b16 %v2142, %v2141
        %v2243 = vpack.c.b16 %v2144, %v2143
        %v2244 = vpack.c.b16 %v2146, %v2145
        %v2245 = vpack.c.b16 %v2148, %v2147
        %v2246 = vpack.c.b16 %v2150, %v2149
        %v2247 = vpack.c.b16 %v2152, %v2151
        %v2248 = vpack.c.b16 %v2154, %v2153
        %v2249 = vpack.c.b16 %v2156, %v2155
        %v2250 = vpack.c.b16 %v2158, %v2157
        %v2251 = vpack.c.b16 %v2160, %v2159
        %v2252 = vpack.c.b16 %v2162, %v2161
        %v2253 = vpack.c.b16 %v2164, %v2163
        %v2254 = vpack.c.b16 %v2166, %v2165
        %v2255 = vpack.c.b16 %v2168, %v2167
        %v2256 = vpack.c.b16 %v2170, %v2169
        %v2257 = vpack.c.b16 %v2172, %v2171
        %v2258 = vpack.c.b16 %v2174, %v2173
        %v2259 = vpack.c.b16 %v2176, %v2175
        %v2260 = vpack.c.b16 %v2178, %v2177
        %v2261 = vpack.c.b16 %v2180, %v2179
        %v2262 = vpack.c.b16 %v2182, %v2181
        %v2263 = vpack.c.b16 %v2184, %v2183
        %v2264 = vpack.c.b16 %v2186, %v2185
        %v2265 = vpack.c.b16 %v2188, %v2187
        %v2266 = vpack.c.b16 %v2190, %v2189
        %v2267 = vpack.c.b16 %v2192, %v2191
        %v2268 = vpack.c.b16 %v2194, %v2193
        %v2269 = vpack.c.b16 %v2196, %v2195
        %v2270 = vpack.c.b16 %v2198, %v2197
        %2343 = vmatprep.subr.bf16.mxu0 0
        %2344 = vmatpush1.bf16.msra.mxu0 %v2199
        %2345 = vmatprep.subr.bf16.mxu0 0
        %2346 = vmatpush1.bf16.msra.mxu0 %v2200
        %2347 = vmatprep.subr.bf16.mxu0 0
        %2348 = vmatpush1.bf16.msra.mxu0 %v2201
        %2349 = vmatprep.subr.bf16.mxu0 0
        %2350 = vmatpush1.bf16.msra.mxu0 %v2202
        %2351 = vmatprep.subr.bf16.mxu0 0
        %2352 = vmatpush1.bf16.msra.mxu0 %v2203
        %2353 = vmatprep.subr.bf16.mxu0 0
        %2354 = vmatpush1.bf16.msra.mxu0 %v2204
        %2355 = vmatprep.subr.bf16.mxu0 0
        %2356 = vmatpush1.bf16.msra.mxu0 %v2205
        %2357 = vmatprep.subr.bf16.mxu0 0
        %2358 = vmatpush1.bf16.msra.mxu0 %v2206
        %2359 = vmatprep.subr.bf16.mxu0 0
        %2360 = vmatpush1.bf16.msra.mxu0 %v2207
        %2361 = vmatprep.subr.bf16.mxu0 0
        %2362 = vmatpush1.bf16.msra.mxu0 %v2208
        %2363 = vmatprep.subr.bf16.mxu0 0
        %2364 = vmatpush1.bf16.msra.mxu0 %v2209
        %2365 = vmatprep.subr.bf16.mxu0 0
        %2366 = vmatpush1.bf16.msra.mxu0 %v2210
        %2367 = vmatprep.subr.bf16.mxu0 0
        %2368 = vmatpush1.bf16.msra.mxu0 %v2211
        %2369 = vmatprep.subr.bf16.mxu0 0
        %2370 = vmatpush1.bf16.msra.mxu0 %v2212
        %2371 = vmatprep.subr.bf16.mxu0 0
        %2372 = vmatpush1.bf16.msra.mxu0 %v2213
        %2373 = vmatprep.subr.bf16.mxu0 0
        %2374 = vmatpush1.bf16.msra.mxu0 %v2214
        %2375 = vmatprep.mubr.bf16.mxu0 %v930
        %2376 = vmatmul.mubr.bf16.gmra.mrb[0].mxu0 %v812
        %v2377 = vpop.f32.mrb[0].mxu0
        %v2378 = vadd.f32 %v1909, %v2377
        %v2379 = vpop.f32.mrb[0].mxu0
        %v2380 = vpop.f32.mrb[0].mxu0
        %v2381 = vadd.f32 %v1909, %v2380
        %v2382 = vpop.f32.mrb[0].mxu0
        %2383 = vmatprep.mubr.bf16.mxu0 %v931
        %2384 = vmatmul.mubr.bf16.gmra.mrb[0].mxu0 %v813
        %v2385 = vpop.f32.mrb[0].mxu0
        %v2386 = vadd.f32 %v1909, %v2385
        %v2387 = vpop.f32.mrb[0].mxu0
        %v2388 = vpop.f32.mrb[0].mxu0
        %v2389 = vadd.f32 %v1909, %v2388
        %v2390 = vpop.f32.mrb[0].mxu0
        %2391 = vmatprep.mubr.bf16.mxu0 %v932
        %2392 = vmatmul.mubr.bf16.gmra.mrb[0].mxu0 %v814
        %v2393 = vpop.f32.mrb[0].mxu0
        %v2394 = vadd.f32 %v1909, %v2393
        %v2395 = vpop.f32.mrb[0].mxu0
        %v2396 = vpop.f32.mrb[0].mxu0
        %v2397 = vadd.f32 %v1909, %v2396
        %v2398 = vpop.f32.mrb[0].mxu0
        %2399 = vmatprep.mubr.bf16.mxu0 %v933
        %2400 = vmatmul.mubr.bf16.gmra.mrb[0].mxu0 %v815
        %v2401 = vpop.f32.mrb[0].mxu0
        %v2402 = vadd.f32 %v1909, %v2401
        %v2403 = vpop.f32.mrb[0].mxu0
        %v2404 = vpop.f32.mrb[0].mxu0
        %v2405 = vadd.f32 %v1909, %v2404
        %v2406 = vpop.f32.mrb[0].mxu0
        %2407 = vdwg.mxu0
        %2408 = vmatprep.subr.bf16.mxu0 0
        %2409 = vmatpush1.bf16.msra.mxu0 %v2215
        %2410 = vmatprep.subr.bf16.mxu0 0
        %2411 = vmatpush1.bf16.msra.mxu0 %v2216
        %2412 = vmatprep.subr.bf16.mxu0 0
        %2413 = vmatpush1.bf16.msra.mxu0 %v2217
        %2414 = vmatprep.subr.bf16.mxu0 0
        %2415 = vmatpush1.bf16.msra.mxu0 %v2218
        %2416 = vmatprep.subr.bf16.mxu0 0
        %2417 = vmatpush1.bf16.msra.mxu0 %v2219
        %2418 = vmatprep.subr.bf16.mxu0 0
        %2419 = vmatpush1.bf16.msra.mxu0 %v2220
        %2420 = vmatprep.subr.bf16.mxu0 0
        %2421 = vmatpush1.bf16.msra.mxu0 %v2221
        %2422 = vmatprep.subr.bf16.mxu0 0
        %2423 = vmatpush1.bf16.msra.mxu0 %v2222
        %2424 = vmatprep.subr.bf16.mxu0 0
        %2425 = vmatpush1.bf16.msra.mxu0 %v2223
        %2426 = vmatprep.subr.bf16.mxu0 0
        %2427 = vmatpush1.bf16.msra.mxu0 %v2224
        %2428 = vmatprep.subr.bf16.mxu0 0
        %2429 = vmatpush1.bf16.msra.mxu0 %v2225
        %2430 = vmatprep.subr.bf16.mxu0 0
        %2431 = vmatpush1.bf16.msra.mxu0 %v2226
        %2432 = vmatprep.subr.bf16.mxu0 0
        %2433 = vmatpush1.bf16.msra.mxu0 %v2227
        %2434 = vmatprep.subr.bf16.mxu0 0
        %2435 = vmatpush1.bf16.msra.mxu0 %v2228
        %2436 = vmatprep.subr.bf16.mxu0 0
        %2437 = vmatpush1.bf16.msra.mxu0 %v2229
        %2438 = vmatprep.subr.bf16.mxu0 0
        %2439 = vmatpush1.bf16.msra.mxu0 %v2230
        %2440 = vmatprep.mubr.bf16.mxu0 %v1166
        %2441 = vmatmul.mubr.bf16.gmra.mrb[0].mxu0 %v1048
        %v2442 = vpop.f32.mrb[0].mxu0
        %v2443 = vadd.f32 %v2378, %v2442
        %v2444 = vpop.f32.mrb[0].mxu0
        %v2445 = vpop.f32.mrb[0].mxu0
        %v2446 = vadd.f32 %v2381, %v2445
        %v2447 = vpop.f32.mrb[0].mxu0
        %2448 = vmatprep.mubr.bf16.mxu0 %v1167
        %2449 = vmatmul.mubr.bf16.gmra.mrb[0].mxu0 %v1049
        %v2450 = vpop.f32.mrb[0].mxu0
        %v2451 = vadd.f32 %v2386, %v2450
        %v2452 = vpop.f32.mrb[0].mxu0
        %v2453 = vpop.f32.mrb[0].mxu0
        %v2454 = vadd.f32 %v2389, %v2453
        %v2455 = vpop.f32.mrb[0].mxu0
        %2456 = vmatprep.mubr.bf16.mxu0 %v1168
        %2457 = vmatmul.mubr.bf16.gmra.mrb[0].mxu0 %v1050
        %v2458 = vpop.f32.mrb[0].mxu0
        %v2459 = vadd.f32 %v2394, %v2458
        %v2460 = vpop.f32.mrb[0].mxu0
        %v2461 = vpop.f32.mrb[0].mxu0
        %v2462 = vadd.f32 %v2397, %v2461
        %v2463 = vpop.f32.mrb[0].mxu0
        %2464 = vmatprep.mubr.bf16.mxu0 %v1169
        %2465 = vmatmul.mubr.bf16.gmra.mrb[0].mxu0 %v1051
        %v2466 = vpop.f32.mrb[0].mxu0
        %v2467 = vadd.f32 %v2402, %v2466
        %v2468 = vpop.f32.mrb[0].mxu0
        %v2469 = vpop.f32.mrb[0].mxu0
        %v2470 = vadd.f32 %v2405, %v2469
        %v2471 = vpop.f32.mrb[0].mxu0
        %2472 = vdwg.mxu0
        %2473 = vmatprep.subr.bf16.mxu0 0
        %2474 = vmatpush1.bf16.msra.mxu0 %v2231
        %2475 = vmatprep.subr.bf16.mxu0 0
        %2476 = vmatpush1.bf16.msra.mxu0 %v2232
        %2477 = vmatprep.subr.bf16.mxu0 0
        %2478 = vmatpush1.bf16.msra.mxu0 %v2233
        %2479 = vmatprep.subr.bf16.mxu0 0
        %2480 = vmatpush1.bf16.msra.mxu0 %v2234
        %2481 = vmatprep.subr.bf16.mxu0 0
        %2482 = vmatpush1.bf16.msra.mxu0 %v2235
        %2483 = vmatprep.subr.bf16.mxu0 0
        %2484 = vmatpush1.bf16.msra.mxu0 %v2236
        %2485 = vmatprep.subr.bf16.mxu0 0
        %2486 = vmatpush1.bf16.msra.mxu0 %v2237
        %2487 = vmatprep.subr.bf16.mxu0 0
        %2488 = vmatpush1.bf16.msra.mxu0 %v2238
        %2489 = vmatprep.subr.bf16.mxu0 0
        %2490 = vmatpush1.bf16.msra.mxu0 %v2239
        %2491 = vmatprep.subr.bf16.mxu0 0
        %2492 = vmatpush1.bf16.msra.mxu0 %v2240
        %2493 = vmatprep.subr.bf16.mxu0 0
        %2494 = vmatpush1.bf16.msra.mxu0 %v2241
        %2495 = vmatprep.subr.bf16.mxu0 0
        %2496 = vmatpush1.bf16.msra.mxu0 %v2242
        %2497 = vmatprep.subr.bf16.mxu0 0
        %2498 = vmatpush1.bf16.msra.mxu0 %v2243
        %2499 = vmatprep.subr.bf16.mxu0 0
        %2500 = vmatpush1.bf16.msra.mxu0 %v2244
        %2501 = vmatprep.subr.bf16.mxu0 0
        %2502 = vmatpush1.bf16.msra.mxu0 %v2245
        %2503 = vmatprep.subr.bf16.mxu0 0
        %2504 = vmatpush1.bf16.msra.mxu0 %v2246
        %2505 = vmatprep.mubr.bf16.mxu0 %v1402
        %2506 = vmatmul.mubr.bf16.gmra.mrb[0].mxu0 %v1284
        %v2507 = vpop.f32.mrb[0].mxu0
        %v2508 = vadd.f32 %v2443, %v2507
        %v2509 = vpop.f32.mrb[0].mxu0
        %v2510 = vpop.f32.mrb[0].mxu0
        %v2511 = vadd.f32 %v2446, %v2510
        %v2512 = vpop.f32.mrb[0].mxu0
        %2513 = vmatprep.mubr.bf16.mxu0 %v1403
        %2514 = vmatmul.mubr.bf16.gmra.mrb[0].mxu0 %v1285
        %v2515 = vpop.f32.mrb[0].mxu0
        %v2516 = vadd.f32 %v2451, %v2515
        %v2517 = vpop.f32.mrb[0].mxu0
        %v2518 = vpop.f32.mrb[0].mxu0
        %v2519 = vadd.f32 %v2454, %v2518
        %v2520 = vpop.f32.mrb[0].mxu0
        %2521 = vmatprep.mubr.bf16.mxu0 %v1404
        %2522 = vmatmul.mubr.bf16.gmra.mrb[0].mxu0 %v1286
        %v2523 = vpop.f32.mrb[0].mxu0
        %v2524 = vadd.f32 %v2459, %v2523
        %v2525 = vpop.f32.mrb[0].mxu0
        %v2526 = vpop.f32.mrb[0].mxu0
        %v2527 = vadd.f32 %v2462, %v2526
        %v2528 = vpop.f32.mrb[0].mxu0
        %2529 = vmatprep.mubr.bf16.mxu0 %v1405
        %2530 = vmatmul.mubr.bf16.gmra.mrb[0].mxu0 %v1287
        %v2531 = vpop.f32.mrb[0].mxu0
        %v2532 = vadd.f32 %v2467, %v2531
        %v2533 = vpop.f32.mrb[0].mxu0
        %v2534 = vpop.f32.mrb[0].mxu0
        %v2535 = vadd.f32 %v2470, %v2534
        %v2536 = vpop.f32.mrb[0].mxu0
        %2537 = vdwg.mxu0
        %2538 = vmatprep.subr.bf16.mxu0 0
        %2539 = vmatpush1.bf16.msra.mxu0 %v2247
        %2540 = vmatprep.subr.bf16.mxu0 0
        %2541 = vmatpush1.bf16.msra.mxu0 %v2248
        %2542 = vmatprep.subr.bf16.mxu0 0
        %2543 = vmatpush1.bf16.msra.mxu0 %v2249
        %2544 = vmatprep.subr.bf16.mxu0 0
        %2545 = vmatpush1.bf16.msra.mxu0 %v2250
        %2546 = vmatprep.subr.bf16.mxu0 0
        %2547 = vmatpush1.bf16.msra.mxu0 %v2251
        %2548 = vmatprep.subr.bf16.mxu0 0
        %2549 = vmatpush1.bf16.msra.mxu0 %v2252
        %2550 = vmatprep.subr.bf16.mxu0 0
        %2551 = vmatpush1.bf16.msra.mxu0 %v2253
        %2552 = vmatprep.subr.bf16.mxu0 0
        %2553 = vmatpush1.bf16.msra.mxu0 %v2254
        %2554 = vmatprep.subr.bf16.mxu0 0
        %2555 = vmatpush1.bf16.msra.mxu0 %v2255
        %2556 = vmatprep.subr.bf16.mxu0 0
        %2557 = vmatpush1.bf16.msra.mxu0 %v2256
        %2558 = vmatprep.subr.bf16.mxu0 0
        %2559 = vmatpush1.bf16.msra.mxu0 %v2257
        %2560 = vmatprep.subr.bf16.mxu0 0
        %2561 = vmatpush1.bf16.msra.mxu0 %v2258
        %2562 = vmatprep.subr.bf16.mxu0 0
        %2563 = vmatpush1.bf16.msra.mxu0 %v2259
        %2564 = vmatprep.subr.bf16.mxu0 0
        %2565 = vmatpush1.bf16.msra.mxu0 %v2260
        %2566 = vmatprep.subr.bf16.mxu0 0
        %2567 = vmatpush1.bf16.msra.mxu0 %v2261
        %2568 = vmatprep.subr.bf16.mxu0 0
        %2569 = vmatpush1.bf16.msra.mxu0 %v2262
        %2570 = vmatprep.mubr.bf16.mxu0 %v1638
        %2571 = vmatmul.mubr.bf16.gmra.mrb[0].mxu0 %v1520
        %v2572 = vpop.f32.mrb[0].mxu0
        %v2573 = vadd.f32 %v2508, %v2572
        %v2574 = vpop.f32.mrb[0].mxu0
        %v2575 = vpop.f32.mrb[0].mxu0
        %v2576 = vadd.f32 %v2511, %v2575
        %v2577 = vpop.f32.mrb[0].mxu0
        %2578 = vmatprep.mubr.bf16.mxu0 %v1639
        %2579 = vmatmul.mubr.bf16.gmra.mrb[0].mxu0 %v1521
        %v2580 = vpop.f32.mrb[0].mxu0
        %v2581 = vadd.f32 %v2516, %v2580
        %v2582 = vpop.f32.mrb[0].mxu0
        %v2583 = vpop.f32.mrb[0].mxu0
        %v2584 = vadd.f32 %v2519, %v2583
        %v2585 = vpop.f32.mrb[0].mxu0
        %2586 = vmatprep.mubr.bf16.mxu0 %v1640
        %2587 = vmatmul.mubr.bf16.gmra.mrb[0].mxu0 %v1522
        %v2588 = vpop.f32.mrb[0].mxu0
        %v2589 = vadd.f32 %v2524, %v2588
        %v2590 = vpop.f32.mrb[0].mxu0
        %v2591 = vpop.f32.mrb[0].mxu0
        %v2592 = vadd.f32 %v2527, %v2591
        %v2593 = vpop.f32.mrb[0].mxu0
        %2594 = vmatprep.mubr.bf16.mxu0 %v1641
        %2595 = vmatmul.mubr.bf16.gmra.mrb[0].mxu0 %v1523
        %v2596 = vpop.f32.mrb[0].mxu0
        %v2597 = vadd.f32 %v2532, %v2596
        %v2598 = vpop.f32.mrb[0].mxu0
        %v2599 = vpop.f32.mrb[0].mxu0
        %v2600 = vadd.f32 %v2535, %v2599
        %v2601 = vpop.f32.mrb[0].mxu0
        %2602 = vdwg.mxu0
        %2603 = vmatprep.subr.bf16.mxu0 0
        %2604 = vmatpush1.bf16.msra.mxu0 %v2263
        %2605 = vmatprep.subr.bf16.mxu0 0
        %2606 = vmatpush1.bf16.msra.mxu0 %v2264
        %2607 = vmatprep.subr.bf16.mxu0 0
        %2608 = vmatpush1.bf16.msra.mxu0 %v2265
        %2609 = vmatprep.subr.bf16.mxu0 0
        %2610 = vmatpush1.bf16.msra.mxu0 %v2266
        %2611 = vmatprep.subr.bf16.mxu0 0
        %2612 = vmatpush1.bf16.msra.mxu0 %v2267
        %2613 = vmatprep.subr.bf16.mxu0 0
        %2614 = vmatpush1.bf16.msra.mxu0 %v2268
        %2615 = vmatprep.subr.bf16.mxu0 0
        %2616 = vmatpush1.bf16.msra.mxu0 %v2269
        %2617 = vmatprep.subr.bf16.mxu0 0
        %2618 = vmatpush1.bf16.msra.mxu0 %v2270
        %2619 = vmatprep.subr.bf16.mxu0 0
        %2620 = vmatpush1.bf16.msra.mxu0 0
        %2621 = vmatprep.subr.bf16.mxu0 0
        %2622 = vmatpush1.bf16.msra.mxu0 0
        %2623 = vmatprep.subr.bf16.mxu0 0
        %2624 = vmatpush1.bf16.msra.mxu0 0
        %2625 = vmatprep.subr.bf16.mxu0 0
        %2626 = vmatpush1.bf16.msra.mxu0 0
        %2627 = vmatprep.subr.bf16.mxu0 0
        %2628 = vmatpush1.bf16.msra.mxu0 0
        %2629 = vmatprep.subr.bf16.mxu0 0
        %2630 = vmatpush1.bf16.msra.mxu0 0
        %2631 = vmatprep.subr.bf16.mxu0 0
        %2632 = vmatpush1.bf16.msra.mxu0 0
        %2633 = vmatprep.subr.bf16.mxu0 0
        %2634 = vmatpush1.bf16.msra.mxu0 0
        %2635 = vmatprep.mubr.bf16.mxu0 0
        %2636 = vmatmul.mubr.bf16.gmra.mrb[0].mxu0 %v1756
        %v2637 = vpop.f32.mrb[0].mxu0
        %v2638 = vadd.f32 %v2573, %v2637
        %v2639 = vpop.f32.mrb[0].mxu0
        %v2640 = vpop.f32.mrb[0].mxu0
        %v2641 = vadd.f32 %v2576, %v2640
        %v2642 = vpop.f32.mrb[0].mxu0
        %2643 = vmatprep.mubr.bf16.mxu0 0
        %2644 = vmatmul.mubr.bf16.gmra.mrb[0].mxu0 %v1757
        %v2645 = vpop.f32.mrb[0].mxu0
        %v2646 = vadd.f32 %v2581, %v2645
        %v2647 = vpop.f32.mrb[0].mxu0
        %v2648 = vpop.f32.mrb[0].mxu0
        %v2649 = vadd.f32 %v2584, %v2648
        %v2650 = vpop.f32.mrb[0].mxu0
        %2651 = vmatprep.mubr.bf16.mxu0 0
        %2652 = vmatmul.mubr.bf16.gmra.mrb[0].mxu0 %v1758
        %v2653 = vpop.f32.mrb[0].mxu0
        %v2654 = vadd.f32 %v2589, %v2653
        %v2655 = vpop.f32.mrb[0].mxu0
        %v2656 = vpop.f32.mrb[0].mxu0
        %v2657 = vadd.f32 %v2592, %v2656
        %v2658 = vpop.f32.mrb[0].mxu0
        %2659 = vmatprep.mubr.bf16.mxu0 0
        %2660 = vmatmul.mubr.bf16.gmra.mrb[0].mxu0 %v1759
        %v2661 = vpop.f32.mrb[0].mxu0
        %v2662 = vadd.f32 %v2597, %v2661
        %v2663 = vpop.f32.mrb[0].mxu0
        %v2664 = vpop.f32.mrb[0].mxu0
        %v2665 = vadd.f32 %v2600, %v2664
        %v2666 = vpop.f32.mrb[0].mxu0
        %2667 = vdwg.mxu0
        %v2668 = vmax.f32 %v2638, 0.0
        %v2669 = vmax.f32 %v2641, 0.0
        %v2670 = vmax.f32 %v2646, 0.0
        %v2671 = vmax.f32 %v2649, 0.0
        %v2672 = vmax.f32 %v2654, 0.0
        %v2673 = vmax.f32 %v2657, 0.0
        %v2674 = vmax.f32 %v2662, 0.0
        %v2675 = vmax.f32 %v2665, 0.0
        %v2676 = vpack.c.bf16 %v2669, %v2668
        %v2677 = vpack.c.bf16 %v2671, %v2670
        %v2678 = vpack.c.bf16 %v2673, %v2672
        %v2679 = vpack.c.bf16 %v2675, %v2674
        %v2680 = vld [vmem:[%s5] sm:$0xf]
        %v2681 = vld [vmem:[%s5 + $0x4] sm:$0xf]
        %v2682 = vld [vmem:[%s5 + $0x8] sm:$0xf]
        %v2683 = vld [vmem:[%s5 + $0xc] sm:$0xf]
        %v2684 = vld [vmem:[%s5 + $0x10] sm:$0xf]
        %v2685 = vld [vmem:[%s5 + $0x14] sm:$0xf]
        %v2686 = vld [vmem:[%s5 + $0x18] sm:$0xf]
        %v2687 = vld [vmem:[%s5 + $0x1c] sm:$0xf]
        %v2688 = vld [vmem:[%s5 + $0x20] sm:$0xf]
        %v2689 = vld [vmem:[%s5 + $0x24] sm:$0xf]
        %v2690 = vld [vmem:[%s5 + $0x28] sm:$0xf]
        %v2691 = vld [vmem:[%s5 + $0x2c] sm:$0xf]
        %v2692 = vld [vmem:[%s5 + $0x30] sm:$0xf]
        %v2693 = vld [vmem:[%s5 + $0x34] sm:$0xf]
        %v2694 = vld [vmem:[%s5 + $0x38] sm:$0xf]
        %v2695 = vld [vmem:[%s5 + $0x3c] sm:$0xf]
        %v2696 = vld [vmem:[%s6] sm:$0x1]
        %v2698 = vlaneseq
        %v2699 = vshrl.u32 %v2698, 7
        %v2700 = vsub.s32 0, %v2699
        %v2701 = vrot.slane %v2696, %v2700
        %v2719 = vunpack.c.l.b16 %v2680
        %v2720 = vunpack.c.l.b16 %v2681
        %v2721 = vunpack.c.l.b16 %v2682
        %v2722 = vunpack.c.l.b16 %v2683
        %v2723 = vunpack.c.l.b16 %v2684
        %v2724 = vunpack.c.l.b16 %v2685
        %v2725 = vunpack.c.l.b16 %v2686
        %v2726 = vunpack.c.l.b16 %v2687
        %v2727 = vunpack.c.l.b16 %v2688
        %v2728 = vunpack.c.l.b16 %v2689
        %v2729 = vunpack.c.l.b16 %v2690
        %v2730 = vunpack.c.l.b16 %v2691
        %v2731 = vunpack.c.l.b16 %v2692
        %v2732 = vunpack.c.l.b16 %v2693
        %v2733 = vunpack.c.l.b16 %v2694
        %v2734 = vunpack.c.l.b16 %v2695
        %v2735 = vpack.c.b16 %v2720, %v2719
        %v2736 = vpack.c.b16 %v2722, %v2721
        %v2737 = vpack.c.b16 %v2724, %v2723
        %v2738 = vpack.c.b16 %v2726, %v2725
        %v2739 = vpack.c.b16 %v2728, %v2727
        %v2740 = vpack.c.b16 %v2730, %v2729
        %v2741 = vpack.c.b16 %v2732, %v2731
        %v2742 = vpack.c.b16 %v2734, %v2733
        %2751 = vmatprep.subr.bf16.mxu0 0
        %2752 = vmatpush1.bf16.msra.mxu0 %v2735
        %2753 = vmatprep.subr.bf16.mxu0 0
        %2754 = vmatpush1.bf16.msra.mxu0 %v2736
        %2755 = vmatprep.subr.bf16.mxu0 0
        %2756 = vmatpush1.bf16.msra.mxu0 %v2737
        %2757 = vmatprep.subr.bf16.mxu0 0
        %2758 = vmatpush1.bf16.msra.mxu0 %v2738
        %2759 = vmatprep.subr.bf16.mxu0 0
        %2760 = vmatpush1.bf16.msra.mxu0 %v2739
        %2761 = vmatprep.subr.bf16.mxu0 0
        %2762 = vmatpush1.bf16.msra.mxu0 %v2740
        %2763 = vmatprep.subr.bf16.mxu0 0
        %2764 = vmatpush1.bf16.msra.mxu0 %v2741
        %2765 = vmatprep.subr.bf16.mxu0 0
        %2766 = vmatpush1.bf16.msra.mxu0 %v2742
        %2767 = vmatprep.subr.bf16.mxu0 0
        %2768 = vmatpush1.bf16.msra.mxu0 0
        %2769 = vmatprep.subr.bf16.mxu0 0
        %2770 = vmatpush1.bf16.msra.mxu0 0
        %2771 = vmatprep.subr.bf16.mxu0 0
        %2772 = vmatpush1.bf16.msra.mxu0 0
        %2773 = vmatprep.subr.bf16.mxu0 0
        %2774 = vmatpush1.bf16.msra.mxu0 0
        %2775 = vmatprep.subr.bf16.mxu0 0
        %2776 = vmatpush1.bf16.msra.mxu0 0
        %2777 = vmatprep.subr.bf16.mxu0 0
        %2778 = vmatpush1.bf16.msra.mxu0 0
        %2779 = vmatprep.subr.bf16.mxu0 0
        %2780 = vmatpush1.bf16.msra.mxu0 0
        %2781 = vmatprep.subr.bf16.mxu0 0
        %2782 = vmatpush1.bf16.msra.mxu0 0
        %2783 = vmatprep.mubr.bf16.mxu0 0
        %2784 = vmatmul.mubr.bf16.gmra.mrb[0].mxu0 %v2676
        %v2785 = vpop.f32.mrb[0].mxu0
        %v2786 = vadd.f32 %v2701, %v2785
        %v2787 = vpop.f32.mrb[0].mxu0
        %v2788 = vpop.f32.mrb[0].mxu0
        %v2789 = vadd.f32 %v2701, %v2788
        %v2790 = vpop.f32.mrb[0].mxu0
        %2791 = vmatprep.mubr.bf16.mxu0 0
        %2792 = vmatmul.mubr.bf16.gmra.mrb[0].mxu0 %v2677
        %v2793 = vpop.f32.mrb[0].mxu0
        %v2794 = vadd.f32 %v2701, %v2793
        %v2795 = vpop.f32.mrb[0].mxu0
        %v2796 = vpop.f32.mrb[0].mxu0
        %v2797 = vadd.f32 %v2701, %v2796
        %v2798 = vpop.f32.mrb[0].mxu0
        %2799 = vmatprep.mubr.bf16.mxu0 0
        %2800 = vmatmul.mubr.bf16.gmra.mrb[0].mxu0 %v2678
        %v2801 = vpop.f32.mrb[0].mxu0
        %v2802 = vadd.f32 %v2701, %v2801
        %v2803 = vpop.f32.mrb[0].mxu0
        %v2804 = vpop.f32.mrb[0].mxu0
        %v2805 = vadd.f32 %v2701, %v2804
        %v2806 = vpop.f32.mrb[0].mxu0
        %2807 = vmatprep.mubr.bf16.mxu0 0
        %2808 = vmatmul.mubr.bf16.gmra.mrb[0].mxu0 %v2679
        %v2809 = vpop.f32.mrb[0].mxu0
        %v2810 = vadd.f32 %v2701, %v2809
        %v2811 = vpop.f32.mrb[0].mxu0
        %v2812 = vpop.f32.mrb[0].mxu0
        %v2813 = vadd.f32 %v2701, %v2812
        %v2814 = vpop.f32.mrb[0].mxu0
        %2815 = vdwg.mxu0
        %v2816 = vld [vmem:[%s678] sm:$0xf]
        %v2817 = vld [vmem:[%s678 + $0x4] sm:$0xf]
        %v2818 = vld [vmem:[%s678 + $0x8] sm:$0xf]
        %v2819 = vld [vmem:[%s678 + $0xc] sm:$0xf]
        %v2820 = vld [vmem:[%s678 + $0x10] sm:$0xf]
        %v2821 = vld [vmem:[%s678 + $0x14] sm:$0xf]
        %v2822 = vld [vmem:[%s678 + $0x18] sm:$0xf]
        %v2823 = vld [vmem:[%s678 + $0x1c] sm:$0xf]
        %v2824 = vld [vmem:[%s7] sm:$0xf]
        %v2825 = vld [vmem:[%s7 + $0x4] sm:$0xf]
        %v2826 = vld [vmem:[%s8] sm:$0x1]
        %v2828 = vlaneseq
        %v2829 = vshrl.u32 %v2828, 7
        %v2830 = vsub.s32 0, %v2829
        %v2831 = vrot.slane %v2826, %v2830
        %v2841 = vunpack.c.l.b16 %v2816
        %v2842 = vunpack.c.l.b16 %v2817
        %v2843 = vunpack.c.l.b16 %v2818
        %v2844 = vunpack.c.l.b16 %v2819
        %v2845 = vunpack.c.l.b16 %v2820
        %v2846 = vunpack.c.l.b16 %v2821
        %v2847 = vunpack.c.l.b16 %v2822
        %v2848 = vunpack.c.l.b16 %v2823
        %v2849 = vpack.c.b16 %v2842, %v2841
        %v2850 = vpack.c.b16 %v2844, %v2843
        %v2851 = vpack.c.b16 %v2846, %v2845
        %v2852 = vpack.c.b16 %v2848, %v2847
        %v2855 = vunpack.c.l.b16 %v2824
        %v2856 = vunpack.c.l.b16 %v2825
        %v2857 = vpack.c.b16 %v2856, %v2855
        %vm2859 = vcmask 130048
        %v2861 = vsel %vm2859, %v2849, 0
        %v2864 = vsel %vm2859, %v2850, 0
        %v2867 = vsel %vm2859, %v2851, 0
        %v2870 = vsel %vm2859, %v2852, 0
        %2872 = vmatprep.subr.bf16.mxu0 0
        %2873 = vmatpush1.bf16.msra.mxu0 %v2857
        %2874 = vmatprep.subr.bf16.mxu0 0
        %2875 = vmatpush1.bf16.msra.mxu0 0
        %2876 = vmatprep.subr.bf16.mxu0 0
        %2877 = vmatpush1.bf16.msra.mxu0 0
        %2878 = vmatprep.subr.bf16.mxu0 0
        %2879 = vmatpush1.bf16.msra.mxu0 0
        %2880 = vmatprep.subr.bf16.mxu0 0
        %2881 = vmatpush1.bf16.msra.mxu0 0
        %2882 = vmatprep.subr.bf16.mxu0 0
        %2883 = vmatpush1.bf16.msra.mxu0 0
        %2884 = vmatprep.subr.bf16.mxu0 0
        %2885 = vmatpush1.bf16.msra.mxu0 0
        %2886 = vmatprep.subr.bf16.mxu0 0
        %2887 = vmatpush1.bf16.msra.mxu0 0
        %2888 = vmatprep.subr.bf16.mxu0 0
        %2889 = vmatpush1.bf16.msra.mxu0 0
        %2890 = vmatprep.subr.bf16.mxu0 0
        %2891 = vmatpush1.bf16.msra.mxu0 0
        %2892 = vmatprep.subr.bf16.mxu0 0
        %2893 = vmatpush1.bf16.msra.mxu0 0
        %2894 = vmatprep.subr.bf16.mxu0 0
        %2895 = vmatpush1.bf16.msra.mxu0 0
        %2896 = vmatprep.subr.bf16.mxu0 0
        %2897 = vmatpush1.bf16.msra.mxu0 0
        %2898 = vmatprep.subr.bf16.mxu0 0
        %2899 = vmatpush1.bf16.msra.mxu0 0
        %2900 = vmatprep.subr.bf16.mxu0 0
        %2901 = vmatpush1.bf16.msra.mxu0 0
        %2902 = vmatprep.subr.bf16.mxu0 0
        %2903 = vmatpush1.bf16.msra.mxu0 0
        %2904 = vmatprep.mubr.bf16.mxu0 0
        %2905 = vmatmul.mubr.bf16.gmra.mrb[0].mxu0 %v2861
        %v2906 = vpop.f32.mrb[0].mxu0
        %v2907 = vadd.f32 %v2831, %v2906
        %v2908 = vpop.f32.mrb[0].mxu0
        %v2909 = vpop.f32.mrb[0].mxu0
        %v2910 = vadd.f32 %v2831, %v2909
        %v2911 = vpop.f32.mrb[0].mxu0
        %2912 = vmatprep.mubr.bf16.mxu0 0
        %2913 = vmatmul.mubr.bf16.gmra.mrb[0].mxu0 %v2864
        %v2914 = vpop.f32.mrb[0].mxu0
        %v2915 = vadd.f32 %v2831, %v2914
        %v2916 = vpop.f32.mrb[0].mxu0
        %v2917 = vpop.f32.mrb[0].mxu0
        %v2918 = vadd.f32 %v2831, %v2917
        %v2919 = vpop.f32.mrb[0].mxu0
        %2920 = vmatprep.mubr.bf16.mxu0 0
        %2921 = vmatmul.mubr.bf16.gmra.mrb[0].mxu0 %v2867
        %v2922 = vpop.f32.mrb[0].mxu0
        %v2923 = vadd.f32 %v2831, %v2922
        %v2924 = vpop.f32.mrb[0].mxu0
        %v2925 = vpop.f32.mrb[0].mxu0
        %v2926 = vadd.f32 %v2831, %v2925
        %v2927 = vpop.f32.mrb[0].mxu0
        %2928 = vmatprep.mubr.bf16.mxu0 0
        %2929 = vmatmul.mubr.bf16.gmra.mrb[0].mxu0 %v2870
        %v2930 = vpop.f32.mrb[0].mxu0
        %v2931 = vadd.f32 %v2831, %v2930
        %v2932 = vpop.f32.mrb[0].mxu0
        %v2933 = vpop.f32.mrb[0].mxu0
        %v2934 = vadd.f32 %v2831, %v2933
        %v2935 = vpop.f32.mrb[0].mxu0
        %2936 = vdwg.mxu0
        %v2937 = vadd.f32 %v2786, %v2907
        %v2938 = vadd.f32 %v2789, %v2910
        %v2939 = vadd.f32 %v2794, %v2915
        %v2940 = vadd.f32 %v2797, %v2918
        %v2941 = vadd.f32 %v2802, %v2923
        %v2942 = vadd.f32 %v2805, %v2926
        %v2943 = vadd.f32 %v2810, %v2931
        %v2944 = vadd.f32 %v2813, %v2934
        %v2945 = vmax.f32 %v2937, 0.0
        %v2946 = vmax.f32 %v2938, 0.0
        %v2947 = vmax.f32 %v2939, 0.0
        %v2948 = vmax.f32 %v2940, 0.0
        %v2949 = vmax.f32 %v2941, 0.0
        %v2950 = vmax.f32 %v2942, 0.0
        %v2951 = vmax.f32 %v2943, 0.0
        %v2952 = vmax.f32 %v2944, 0.0
        %2953 = vst [vmem:[%s672] sm:$0xff] %v2945
        %2954 = vst [vmem:[%s672 + $0x8] sm:$0xff] %v2946
        %2955 = vst [vmem:[%s672 + $0x10] sm:$0xff] %v2947
        %2956 = vst [vmem:[%s672 + $0x18] sm:$0xff] %v2948
        %2957 = vst [vmem:[%s672 + $0x20] sm:$0xff] %v2949
        %2958 = vst [vmem:[%s672 + $0x28] sm:$0xff] %v2950
        %2959 = vst [vmem:[%s672 + $0x30] sm:$0xff] %v2951
        %2960 = vst [vmem:[%s672 + $0x38] sm:$0xff] %v2952
        %s2961 = sand.u32 %s230, 1
        %s2962 = scalar_lea.sflag [#allocation4], %s2961
        %s2963 = sand.u32 %s230, 1
        %s2964 = smul.addr %s2963, 64
        %s2965 = scalar_lea.vmem [#allocation3], %s2964
        // Predicated region
        $region98: #{tpu_custom_call.1} parent=92 // pred_check
          %p2966 = pneg %p240
        $region99: #{tpu_custom_call.1} parent=92 // pred_check_branch
          %2968 = sbr.rel (%p2966) target = $region101
        $region100: #{tpu_custom_call.1} parent=92 // pred_region
          %s2969 = smul.u32 8, %s23
          %s2971 = ssub.s32 1024, 1024
          %2972 = vsyncadd %s2962, %s2971
          %s2973 = smul.addr %s2969, 128
          %s2974 = scalar_lea.hbm %s9, %s2973
          %s2975 = sshll.u32 %s2965, 4
          %s2976 = int_to_ptr.vmem [resolvable:$true] %s2975
          %2981 = dma.vmem_to_hbm [thread:$0]  %s2976, 1024, %s2974, %s2962, 128, 128, 8
        $region101: #{tpu_custom_call.1} parent=92 // pred_fallthru
          _
      $region93: #{tpu_custom_call.1} parent=5 // pred_fallthru
        _
      %p2982 = scmp.le.s32.totalorder 2, %s18
      // Predicated region
      $region102: #{tpu_custom_call.1} parent=5 // pred_check
        %p2983 = pneg %p2982
      $region103: #{tpu_custom_call.1} parent=5 // pred_check_branch
        %2985 = sbr.rel (%p2983) target = $region105
      $region104: #{tpu_custom_call.1} parent=5 // pred_region
        %s2986 = ssub.s32 %s18, 2
        // Predicated region
        $region106: #{tpu_custom_call.1} parent=104 // pred_check
          %p2987 = pneg %p246
        $region107: #{tpu_custom_call.1} parent=104 // pred_check_branch
          %2989 = sbr.rel (%p2987) target = $region109
        $region108: #{tpu_custom_call.1} parent=104 // pred_region
          %s2990 = sand.u32 %s231, 1
          %s2991 = scalar_lea.sflag [#allocation4], %s2990
          %s2992 = sand.u32 %s231, 1
          %s2993 = smul.addr %s2992, 64
          %s2994 = scalar_lea.vmem [#allocation3], %s2993
          %2995 = dma.done %s2991, 1024
        $region109: #{tpu_custom_call.1} parent=104 // pred_fallthru
          _
      $region105: #{tpu_custom_call.1} parent=5 // pred_fallthru
        _
    $region6: #{tpu_custom_call.1} parent=1 // loop_footer
      %s22 = sadd.s32 1, %s18
    $region7: #{tpu_custom_call.1} parent=1 // loop_footer_branch
      %17 = sbr.rel target = $region3
    $region8: #{tpu_custom_call.1} parent=1 // loop_exit
      _
    %2996 = vsyncpa [#allocation4], 1
    %s2997 = scalar_lea.sflag [#allocation4], 1
    %2998 = vsyncpa %s2997, 1

</llo_original>
